<compile_context>
chip_gen: v7x
topology: tpu7x:2x2x1
jax: 0.10.0
libtpu: 0.0.40
codegen_flags: <defaults>
</compile_context>

<pallas_src>
import functools

import jax
import jax.numpy as jnp
from jax.experimental import pallas as pl
from jax.experimental.pallas import tpu as pltpu


def _pick_tile(n, prefer):
    """Largest preferred tile that divides n (falls back to n itself -> one full block)."""
    for c in prefer:
        if c <= n and n % c == 0:
            return c
    return n


# ----------------------------- kernel 1: spectral projection -----------------------------

def _spectral_kernel(evm_ref, x_ref, coefs_ref, out_ref):
    # out = coefs * (evecs_m^T @ x); lumped mass already folded into evecs_m on the host.
    # Output block index is constant over the grid -> VMEM resident; accumulate into it directly.
    @pl.when(pl.program_id(0) == 0)
    def _():
        out_ref[...] = jnp.zeros_like(out_ref)

    out_ref[...] += jnp.dot(evm_ref[...], x_ref[...],
                            preferred_element_type=jnp.float32)

    @pl.when(pl.program_id(0) == pl.num_programs(0) - 1)
    def _():
        out_ref[...] = coefs_ref[...] * out_ref[...]


def pallas_spectral_project(evecs_mT, x, coefs):
    K, V = evecs_mT.shape
    C = x.shape[1]
    tv = _pick_tile(V, (1024, 512, 256, 128, 64, 32, 16, 8))
    return pl.pallas_call(
        _spectral_kernel,
        out_shape=jax.ShapeDtypeStruct((K, C), jnp.float32),
        grid=(V // tv,),
        in_specs=[pl.BlockSpec((K, tv), lambda v: (0, v)),
                  pl.BlockSpec((tv, C), lambda v: (v, 0)),
                  pl.BlockSpec((K, C), lambda v: (0, 0))],
        out_specs=pl.BlockSpec((K, C), lambda v: (0, 0)),
        compiler_params=pltpu.CompilerParams(dimension_semantics=("arbitrary",)),
    )(evecs_mT, x, coefs)


# ----------------- kernel 2: fused diffuse-expand + gradient features + MLP + residual -----------------

def _block_kernel(*refs, n_layers):
    (x_in_ref, evk_ref, evi_ref, spec_ref, gx_ref, gy_ref,
     wmix_ref, w0_ref, b0_ref) = refs[:9]
    n_rest = n_layers - 1
    rest = refs[9:9 + 2 * n_rest]
    out_ref = refs[9 + 2 * n_rest]
    acc_x, acc_y, gxy_sc, feat_sc = refs[10 + 2 * n_rest:14 + 2 * n_rest]

    C = out_ref.shape[1]
    k = pl.program_id(1)

    @pl.when(k == 0)
    def _():
        acc_x[...] = jnp.zeros_like(acc_x)
        acc_y[...] = jnp.zeros_like(acc_y)

    # x_diffuse rows of this contraction tile, recomputed from the small (tk, K) evecs tile
    # so x_diffuse never round-trips through HBM.
    xd_k = jnp.dot(evk_ref[...], spec_ref[...],
                   preferred_element_type=jnp.float32).astype(jnp.bfloat16)
    acc_x[...] += jnp.dot(gx_ref[...], xd_k, preferred_element_type=jnp.float32)
    acc_y[...] += jnp.dot(gy_ref[...], xd_k, preferred_element_type=jnp.float32)

    @pl.when(k == pl.num_programs(1) - 1)
    def _():
        # x_diffuse rows of this output row tile (f32, feeds the MLP feature concat).
        xd_i = jnp.dot(evi_ref[...], spec_ref[...],
                       preferred_element_type=jnp.float32)

        # SpatialGradientFeatures: single fused (2C x 2C) mix matmul.
        # [breal | bimag] = [gx | gy] @ Wmix ; out = tanh(gx*breal + gy*bimag)
        gxy_sc[:, :C] = acc_x[...]
        gxy_sc[:, C:] = acc_y[...]
        gxy = gxy_sc[...]
        bmix = jnp.dot(gxy, wmix_ref[...], preferred_element_type=jnp.float32)
        prod = gxy * bmix
        x_grad = jnp.tanh(prod[:, :C] + prod[:, C:])

        # MiniMLP (BN folded, eval-mode dropout = identity) + residual.
        # Materialize the (tm, 3C) concat in VMEM and do one K=3C first-layer matmul.
        x_in = x_in_ref[...]
        feat_sc[:, :C] = x_in
        feat_sc[:, C:2 * C] = xd_i
        feat_sc[:, 2 * C:] = x_grad
        h = jnp.dot(feat_sc[...], w0_ref[...],
                    preferred_element_type=jnp.float32) + b0_ref[...]
        for li in range(n_layers - 1):
            h = jnp.maximum(h, 0.0)                 # ReLU on non-final layers only
            w_ref = rest[2 * li]
            b_ref = rest[2 * li + 1]
            h = jnp.dot(h, w_ref[...], preferred_element_type=jnp.float32) + b_ref[...]
        out_ref[...] = h + x_in                     # residual


def pallas_diffusion_block(x_in, evecs, spec, gradX_bf, gradY_bf, blk):
    V, C = x_in.shape
    K = evecs.shape[1]
    n_layers = 1 + len(blk["rest"])
    tm = _pick_tile(V, (128, 256, 64, 512, 32, 16, 8))          # parallel row tile
    tk = _pick_tile(V, (1024, 512, 256, 128, 64, 32, 16, 8))    # grad contraction tile

    inputs = [x_in, evecs, evecs, spec, gradX_bf, gradY_bf,
              blk["wmix"], blk["w0t"], blk["b0"]]
    in_specs = [
        pl.BlockSpec((tm, C), lambda i, k: (i, 0)),       # x_in (row tile)
        pl.BlockSpec((tk, K), lambda i, k: (k, 0)),       # evecs (contraction tile)
        pl.BlockSpec((tm, K), lambda i, k: (i, 0)),       # evecs (row tile)
        pl.BlockSpec((K, C), lambda i, k: (0, 0)),        # diffused spectral coefficients
        pl.BlockSpec((tm, tk), lambda i, k: (i, k)),      # gradX tile (bf16)
        pl.BlockSpec((tm, tk), lambda i, k: (i, k)),      # gradY tile (bf16)
        pl.BlockSpec(blk["wmix"].shape, lambda i, k: (0, 0)),
        pl.BlockSpec(blk["w0t"].shape, lambda i, k: (0, 0)),
        pl.BlockSpec(blk["b0"].shape, lambda i, k: (0, 0)),
    ]
    for (wt, bt) in blk["rest"]:
        inputs += [wt, bt]
        in_specs += [pl.BlockSpec(wt.shape, lambda i, k: (0, 0)),
                     pl.BlockSpec(bt.shape, lambda i, k: (0, 0))]

    return pl.pallas_call(
        functools.partial(_block_kernel, n_layers=n_layers),
        out_shape=jax.ShapeDtypeStruct((V, C), jnp.float32),
        grid=(V // tm, V // tk),
        in_specs=in_specs,
        out_specs=pl.BlockSpec((tm, C), lambda i, k: (i, 0)),
        scratch_shapes=[pltpu.VMEM((tm, C), jnp.float32),       # acc for gradX @ xd
                        pltpu.VMEM((tm, C), jnp.float32),       # acc for gradY @ xd
                        pltpu.VMEM((tm, 2 * C), jnp.float32),   # [gx | gy] slab for mix matmul
                        pltpu.VMEM((tm, 3 * C), jnp.float32)],  # MLP feature concat slab
        compiler_params=pltpu.CompilerParams(
            dimension_semantics=("parallel", "arbitrary")),
    )(*inputs)


# ----------------------------- parameters -----------------------------

def init_params(key, C_in, C_out, C_width, N_block, mlp_hidden_dims,
                init_time=2.0, init_std=2.0):
    keys = list(jax.random.split(key, 128))
    kit = iter(keys)

    def lin(cin, cout):
        scale = 1.0 / jnp.sqrt(jnp.float32(cin))
        w = jax.random.uniform(next(kit), (cout, cin), jnp.float32, -scale, scale)
        b = jax.random.uniform(next(kit), (cout,), jnp.float32, -scale, scale)
        return w, b

    params = {}
    params["first_w"], params["first_b"] = lin(C_in, C_width)
    params["last_w"], params["last_b"] = lin(C_width, C_out)

    blocks = []
    mlp_sizes = [3 * C_width] + list(mlp_hidden_dims) + [C_width]
    for _ in range(N_block):
        blk = {}
        blk["diffusion_time"] = (init_time + init_std *
                                 jax.random.normal(next(kit), (C_width,), jnp.float32))
        blk["A_re"], _ = lin(C_width, C_width)      # nn.Linear(..., bias=False)
        blk["A_im"], _ = lin(C_width, C_width)
        mlp = []
        for i in range(len(mlp_sizes) - 1):
            w, b = lin(mlp_sizes[i], mlp_sizes[i + 1])
            mlp.append({
                "w": w, "b": b,
                # fresh BatchNorm1d running stats
                "gamma": jnp.ones((mlp_sizes[i + 1],), jnp.float32),
                "beta": jnp.zeros((mlp_sizes[i + 1],), jnp.float32),
                "mean": jnp.zeros((mlp_sizes[i + 1],), jnp.float32),
                "var": jnp.ones((mlp_sizes[i + 1],), jnp.float32),
            })
        blk["mlp"] = mlp
        blocks.append(blk)
    params["blocks"] = blocks
    return params


def _fold_bn(w, b, gamma, beta, mean, var, eps=1e-5):
    # BatchNorm1d (inference) folded into the preceding Linear.
    s = gamma / jnp.sqrt(var + eps)
    return w * s[:, None], (b - mean) * s + beta


def prepare_params(params, eps=1e-5):
    """Host-side, once: fold BN into Linears, pre-transpose every weight (store W^T),
    build the fused A-mix weight, clamp tau."""
    prep = {
        "first_wT": params["first_w"].T, "first_b": params["first_b"],
        "last_wT": params["last_w"].T, "last_b": params["last_b"],
        "blocks": [],
    }
    for blk in params["blocks"]:
        A_re, A_im = blk["A_re"], blk["A_im"]
        # [breal | bimag] = [gx | gy] @ Wmix  with  Wmix = [[A_re^T, A_im^T], [-A_im^T, A_re^T]]
        # (matches with_gradient_rotations=True: breal = A_re(gx) - A_im(gy), bimag = A_re(gy) + A_im(gx))
        wmix = jnp.concatenate(
            [jnp.concatenate([A_re.T, A_im.T], axis=1),
             jnp.concatenate([-A_im.T, A_re.T], axis=1)], axis=0)

        folded = [_fold_bn(l["w"], l["b"], l["gamma"], l["beta"], l["mean"], l["var"], eps)
                  for l in blk["mlp"]]
        w0, b0 = folded[0]
        pb = {
            "tau": jnp.maximum(blk["diffusion_time"], 1e-8),   # clamp as in reference
            "wmix": wmix,
            "w0t": w0.T,                                       # (3C, H0) pre-transposed
            "b0": b0.reshape(1, -1),
            "rest": [(w.T, b.reshape(1, -1)) for (w, b) in folded[1:]],
        }
        prep["blocks"].append(pb)
    return prep


# ----------------------------- forward -----------------------------

def diffusion_net_forward(prep, x, mass_diag, evecs, evals, gradX, gradY):
    # first_lin / last_lin in plain XLA: K=C_in and C_out are tiny (8) -> a dedicated
    # pallas_call would be pure launch overhead with <10% MXU/lane utilization.
    x = jnp.dot(x, prep["first_wT"]) + prep["first_b"]

    # One-time prep (hoisted by jit, outside the block loop):
    evecs_mT = (evecs * mass_diag).T                  # lumped mass folded into evecs, (K, V)
    gradX_bf = gradX.astype(jnp.bfloat16)             # dominant V^2 HBM bytes / MXU work -> bf16
    gradY_bf = gradY.astype(jnp.bfloat16)

    for blk in prep["blocks"]:
        # diffusion coefficients hoisted out of the kernels (tiny K x C)
        coefs = jnp.exp(-evals[:, None] * blk["tau"][None, :])
        spec = pallas_spectral_project(evecs_mT, x, coefs)                  # (K, C)
        x = pallas_diffusion_block(x, evecs, spec, gradX_bf, gradY_bf, blk)  # (V, C)
    x = jnp.dot(x, prep["last_wT"]) + prep["last_b"]   # last_activation is None
    return x


# ----------------------------- main -----------------------------

if __name__ == "__main__":
    V, K = 512, 64
    C_in, C_width, C_out = 8, 128, 8
    N_block = 2
    mlp_hidden_dims = [C_width, C_width]

    key = jax.random.PRNGKey(0)
    k_par, kx, km, kev, kel, kgx, kgy = jax.random.split(key, 7)

    params = init_params(k_par, C_in, C_out, C_width, N_block, mlp_hidden_dims)
    prep = prepare_params(params)

    x = jax.random.normal(kx, (V, C_in), jnp.float32)
    # lumped (diagonal) mass matrix, stored as its diagonal vector
    mass_diag = jax.random.uniform(km, (V, 1), jnp.float32, 0.5, 1.5)
    evecs = jax.random.normal(kev, (V, K), jnp.float32) * 0.2
    evals = jnp.sort(jax.random.uniform(kel, (K,), jnp.float32, 0.0, 5.0))
    gradX = jax.random.normal(kgx, (V, V), jnp.float32) * 0.05
    gradY = jax.random.normal(kgy, (V, V), jnp.float32) * 0.05
    # batch vector is all zeros (single surface) -> handled implicitly.

    fwd = jax.jit(diffusion_net_forward)
    out = fwd(prep, x, mass_diag, evecs, evals, gradX, gradY)
    jax.block_until_ready(out)
    assert out.shape == (V, C_out)
    print("KERNEL_OK")
</pallas_src>

<mosaic_0001>
module attributes {stable_mosaic.version = 11 : i64} {
  func.func @_spectral_kernel(%arg0: i32, %arg1: memref<64x512xf32, #tpu.memory_space<vmem>>, %arg2: memref<512x128xf32, #tpu.memory_space<vmem>>, %arg3: memref<64x128xf32, #tpu.memory_space<vmem>>, %arg4: memref<64x128xf32, #tpu.memory_space<vmem>>) attributes {dimension_semantics = [#tpu.dimension_semantics<arbitrary>], iteration_bounds = array<i64: 1>, scalar_prefetch = 0 : i64, scratch_operands = 0 : i64, tpu.core_type = #tpu.core_type<tc>, window_params = [{transform_indices = @transform_0, window_bounds = array<i64: 64, 512>}, {transform_indices = @transform_1, window_bounds = array<i64: 512, 128>}, {pipeline_mode = #tpu.pipeline_mode<synchronous>, transform_indices = @transform_2, window_bounds = array<i64: 64, 128>}, {pipeline_mode = #tpu.pipeline_mode<synchronous>, transform_indices = @transform_3, window_bounds = array<i64: 64, 128>}]} {
    %c0_i32 = arith.constant 0 : i32
    %0 = arith.cmpi eq, %arg0, %c0_i32 : i32
    %1 = arith.extui %0 : i1 to i32
    %c0_i32_0 = arith.constant 0 : i32
    %2 = arith.cmpi ne, %1, %c0_i32_0 : i32
    scf.if %2 {
      %cst_10 = arith.constant 0.000000e+00 : f32
      %12 = vector.broadcast %cst_10 : f32 to vector<64x128xf32>
      %c0_11 = arith.constant 0 : index
      %c0_12 = arith.constant 0 : index
      %13 = vector.load %arg4[%c0_11, %c0_12] : memref<64x128xf32, #tpu.memory_space<vmem>>, vector<64x128xf32>
      tpu.vector_store %arg4[%c0_11, %c0_12], %12 {strides = array<i32>} : memref<64x128xf32, #tpu.memory_space<vmem>>, vector<64x128xf32>,
    } else {
    }
    %c0 = arith.constant 0 : index
    %c0_1 = arith.constant 0 : index
    %3 = vector.load %arg4[%c0, %c0_1] : memref<64x128xf32, #tpu.memory_space<vmem>>, vector<64x128xf32>
    %c0_2 = arith.constant 0 : index
    %c0_3 = arith.constant 0 : index
    %4 = vector.load %arg1[%c0_2, %c0_3] : memref<64x512xf32, #tpu.memory_space<vmem>>, vector<64x512xf32>
    %c0_4 = arith.constant 0 : index
    %c0_5 = arith.constant 0 : index
    %5 = vector.load %arg2[%c0_4, %c0_5] : memref<512x128xf32, #tpu.memory_space<vmem>>, vector<512x128xf32>
    %cst = arith.constant dense<0.000000e+00> : vector<64x128xf32>
    %6 = tpu.matmul %4, %5, %cst {dimension_numbers = #tpu.dot_dimension_numbers<[1], [0], [0], [1], [0, 0, 1, 1], [], []>} : vector<64x512xf32>, vector<512x128xf32>, vector<64x128xf32> -> vector<64x128xf32>
    %7 = arith.addf %3, %6 : vector<64x128xf32>
    %c0_6 = arith.constant 0 : index
    %c0_7 = arith.constant 0 : index
    %8 = vector.load %arg4[%c0_6, %c0_7] : memref<64x128xf32, #tpu.memory_space<vmem>>, vector<64x128xf32>
    tpu.vector_store %arg4[%c0_6, %c0_7], %7 {strides = array<i32>} : memref<64x128xf32, #tpu.memory_space<vmem>>, vector<64x128xf32>,
    %c0_i32_8 = arith.constant 0 : i32
    %9 = arith.cmpi eq, %arg0, %c0_i32_8 : i32
    %10 = arith.extui %9 : i1 to i32
    %c0_i32_9 = arith.constant 0 : i32
    %11 = arith.cmpi ne, %10, %c0_i32_9 : i32
    scf.if %11 {
      %c0_10 = arith.constant 0 : index
      %c0_11 = arith.constant 0 : index
      %12 = vector.load %arg3[%c0_10, %c0_11] : memref<64x128xf32, #tpu.memory_space<vmem>>, vector<64x128xf32>
      %c0_12 = arith.constant 0 : index
      %c0_13 = arith.constant 0 : index
      %13 = vector.load %arg4[%c0_12, %c0_13] : memref<64x128xf32, #tpu.memory_space<vmem>>, vector<64x128xf32>
      %14 = arith.mulf %12, %13 : vector<64x128xf32>
      %c0_14 = arith.constant 0 : index
      %c0_15 = arith.constant 0 : index
      %15 = vector.load %arg4[%c0_14, %c0_15] : memref<64x128xf32, #tpu.memory_space<vmem>>, vector<64x128xf32>
      tpu.vector_store %arg4[%c0_14, %c0_15], %14 {strides = array<i32>} : memref<64x128xf32, #tpu.memory_space<vmem>>, vector<64x128xf32>,
    } else {
    }
    return
  }
  func.func @transform_0(%arg0: i32) -> (i32, i32) {
    %c0_i32 = arith.constant 0 : i32
    %c0_i32_0 = arith.constant 0 : i32
    return %c0_i32, %arg0 : i32, i32
  }
  func.func @transform_1(%arg0: i32) -> (i32, i32) {
    %c0_i32 = arith.constant 0 : i32
    %c0_i32_0 = arith.constant 0 : i32
    return %arg0, %c0_i32 : i32, i32
  }
  func.func @transform_2(%arg0: i32) -> (i32, i32) {
    %c0_i32 = arith.constant 0 : i32
    %c0_i32_0 = arith.constant 0 : i32
    %c0_i32_1 = arith.constant 0 : i32
    return %c0_i32, %c0_i32_0 : i32, i32
  }
  func.func @transform_3(%arg0: i32) -> (i32, i32) {
    %c0_i32 = arith.constant 0 : i32
    %c0_i32_0 = arith.constant 0 : i32
    %c0_i32_1 = arith.constant 0 : i32
    return %c0_i32, %c0_i32_0 : i32, i32
  }
}

module attributes {stable_mosaic.version = 11 : i64} {
  func.func @_block_kernel(%arg0: i32, %arg1: i32, %arg2: memref<128x128xf32, #tpu.memory_space<vmem>>, %arg3: memref<512x64xf32, #tpu.memory_space<vmem>>, %arg4: memref<128x64xf32, #tpu.memory_space<vmem>>, %arg5: memref<64x128xf32, #tpu.memory_space<vmem>>, %arg6: memref<128x512xbf16, #tpu.memory_space<vmem>>, %arg7: memref<128x512xbf16, #tpu.memory_space<vmem>>, %arg8: memref<256x256xf32, #tpu.memory_space<vmem>>, %arg9: memref<384x128xf32, #tpu.memory_space<vmem>>, %arg10: memref<1x128xf32, #tpu.memory_space<vmem>>, %arg11: memref<128x128xf32, #tpu.memory_space<vmem>>, %arg12: memref<1x128xf32, #tpu.memory_space<vmem>>, %arg13: memref<128x128xf32, #tpu.memory_space<vmem>>, %arg14: memref<1x128xf32, #tpu.memory_space<vmem>>, %arg15: memref<128x128xf32, #tpu.memory_space<vmem>>, %arg16: memref<128x128xf32, #tpu.memory_space<vmem>>, %arg17: memref<128x128xf32, #tpu.memory_space<vmem>>, %arg18: memref<128x256xf32, #tpu.memory_space<vmem>>, %arg19: memref<128x384xf32, #tpu.memory_space<vmem>>) attributes {dimension_semantics = [#tpu.dimension_semantics<parallel>, #tpu.dimension_semantics<arbitrary>], iteration_bounds = array<i64: 4, 1>, scalar_prefetch = 0 : i64, scratch_operands = 4 : i64, tpu.core_type = #tpu.core_type<tc>, window_params = [{transform_indices = @transform_0, window_bounds = array<i64: 128, 128>}, {transform_indices = @transform_1, window_bounds = array<i64: 512, 64>}, {transform_indices = @transform_2, window_bounds = array<i64: 128, 64>}, {pipeline_mode = #tpu.pipeline_mode<synchronous>, transform_indices = @transform_3, window_bounds = array<i64: 64, 128>}, {transform_indices = @transform_4, window_bounds = array<i64: 128, 512>}, {transform_indices = @transform_5, window_bounds = array<i64: 128, 512>}, {pipeline_mode = #tpu.pipeline_mode<synchronous>, transform_indices = @transform_6, window_bounds = array<i64: 256, 256>}, {pipeline_mode = #tpu.pipeline_mode<synchronous>, transform_indices = @transform_7, window_bounds = array<i64: 384, 128>}, {pipeline_mode = #tpu.pipeline_mode<synchronous>, transform_indices = @transform_8, window_bounds = array<i64: 1, 128>}, {pipeline_mode = #tpu.pipeline_mode<synchronous>, transform_indices = @transform_9, window_bounds = array<i64: 128, 128>}, {pipeline_mode = #tpu.pipeline_mode<synchronous>, transform_indices = @transform_10, window_bounds = array<i64: 1, 128>}, {pipeline_mode = #tpu.pipeline_mode<synchronous>, transform_indices = @transform_11, window_bounds = array<i64: 128, 128>}, {pipeline_mode = #tpu.pipeline_mode<synchronous>, transform_indices = @transform_12, window_bounds = array<i64: 1, 128>}, {transform_indices = @transform_13, window_bounds = array<i64: 128, 128>}]} {
    %c0_i32 = arith.constant 0 : i32
    %0 = arith.cmpi eq, %arg1, %c0_i32 : i32
    %1 = arith.extui %0 : i1 to i32
    %c0_i32_0 = arith.constant 0 : i32
    %2 = arith.cmpi ne, %1, %c0_i32_0 : i32
    scf.if %2 {
      %cst_20 = arith.constant 0.000000e+00 : f32
      %20 = vector.broadcast %cst_20 : f32 to vector<128x128xf32>
      %c0_21 = arith.constant 0 : index
      %c0_22 = arith.constant 0 : index
      %21 = vector.load %arg16[%c0_21, %c0_22] : memref<128x128xf32, #tpu.memory_space<vmem>>, vector<128x128xf32>
      tpu.vector_store %arg16[%c0_21, %c0_22], %20 {strides = array<i32>} : memref<128x128xf32, #tpu.memory_space<vmem>>, vector<128x128xf32>,
      %cst_23 = arith.constant 0.000000e+00 : f32
      %22 = vector.broadcast %cst_23 : f32 to vector<128x128xf32>
      %c0_24 = arith.constant 0 : index
      %c0_25 = arith.constant 0 : index
      %23 = vector.load %arg17[%c0_24, %c0_25] : memref<128x128xf32, #tpu.memory_space<vmem>>, vector<128x128xf32>
      tpu.vector_store %arg17[%c0_24, %c0_25], %22 {strides = array<i32>} : memref<128x128xf32, #tpu.memory_space<vmem>>, vector<128x128xf32>,
    } else {
    }
    %c0 = arith.constant 0 : index
    %c0_1 = arith.constant 0 : index
    %3 = vector.load %arg3[%c0, %c0_1] : memref<512x64xf32, #tpu.memory_space<vmem>>, vector<512x64xf32>
    %c0_2 = arith.constant 0 : index
    %c0_3 = arith.constant 0 : index
    %4 = vector.load %arg5[%c0_2, %c0_3] : memref<64x128xf32, #tpu.memory_space<vmem>>, vector<64x128xf32>
    %cst = arith.constant dense<0.000000e+00> : vector<512x128xf32>
    %5 = tpu.matmul %3, %4, %cst {dimension_numbers = #tpu.dot_dimension_numbers<[1], [0], [0], [1], [0, 0, 1, 1], [], []>} : vector<512x64xf32>, vector<64x128xf32>, vector<512x128xf32> -> vector<512x128xf32>
    %6 = arith.truncf %5 : vector<512x128xf32> to vector<512x128xbf16>
    %c0_4 = arith.constant 0 : index
    %c0_5 = arith.constant 0 : index
    %7 = vector.load %arg16[%c0_4, %c0_5] : memref<128x128xf32, #tpu.memory_space<vmem>>, vector<128x128xf32>
    %c0_6 = arith.constant 0 : index
    %c0_7 = arith.constant 0 : index
    %8 = vector.load %arg6[%c0_6, %c0_7] : memref<128x512xbf16, #tpu.memory_space<vmem>>, vector<128x512xbf16>
    %cst_8 = arith.constant dense<0.000000e+00> : vector<128x128xf32>
    %9 = tpu.matmul %8, %6, %cst_8 {dimension_numbers = #tpu.dot_dimension_numbers<[1], [0], [0], [1], [0, 0, 1, 1], [], []>} : vector<128x512xbf16>, vector<512x128xbf16>, vector<128x128xf32> -> vector<128x128xf32>
    %10 = arith.addf %7, %9 : vector<128x128xf32>
    %c0_9 = arith.constant 0 : index
    %c0_10 = arith.constant 0 : index
    %11 = vector.load %arg16[%c0_9, %c0_10] : memref<128x128xf32, #tpu.memory_space<vmem>>, vector<128x128xf32>
    tpu.vector_store %arg16[%c0_9, %c0_10], %10 {strides = array<i32>} : memref<128x128xf32, #tpu.memory_space<vmem>>, vector<128x128xf32>,
    %c0_11 = arith.constant 0 : index
    %c0_12 = arith.constant 0 : index
    %12 = vector.load %arg17[%c0_11, %c0_12] : memref<128x128xf32, #tpu.memory_space<vmem>>, vector<128x128xf32>
    %c0_13 = arith.constant 0 : index
    %c0_14 = arith.constant 0 : index
    %13 = vector.load %arg7[%c0_13, %c0_14] : memref<128x512xbf16, #tpu.memory_space<vmem>>, vector<128x512xbf16>
    %cst_15 = arith.constant dense<0.000000e+00> : vector<128x128xf32>
    %14 = tpu.matmul %13, %6, %cst_15 {dimension_numbers = #tpu.dot_dimension_numbers<[1], [0], [0], [1], [0, 0, 1, 1], [], []>} : vector<128x512xbf16>, vector<512x128xbf16>, vector<128x128xf32> -> vector<128x128xf32>
    %15 = arith.addf %12, %14 : vector<128x128xf32>
    %c0_16 = arith.constant 0 : index
    %c0_17 = arith.constant 0 : index
    %16 = vector.load %arg17[%c0_16, %c0_17] : memref<128x128xf32, #tpu.memory_space<vmem>>, vector<128x128xf32>
    tpu.vector_store %arg17[%c0_16, %c0_17], %15 {strides = array<i32>} : memref<128x128xf32, #tpu.memory_space<vmem>>, vector<128x128xf32>,
    %c0_i32_18 = arith.constant 0 : i32
    %17 = arith.cmpi eq, %arg1, %c0_i32_18 : i32
    %18 = arith.extui %17 : i1 to i32
    %c0_i32_19 = arith.constant 0 : i32
    %19 = arith.cmpi ne, %18, %c0_i32_19 : i32
    scf.if %19 {
      %c0_20 = arith.constant 0 : index
      %c0_21 = arith.constant 0 : index
      %20 = vector.load %arg4[%c0_20, %c0_21] : memref<128x64xf32, #tpu.memory_space<vmem>>, vector<128x64xf32>
      %c0_22 = arith.constant 0 : index
      %c0_23 = arith.constant 0 : index
      %21 = vector.load %arg5[%c0_22, %c0_23] : memref<64x128xf32, #tpu.memory_space<vmem>>, vector<64x128xf32>
      %cst_24 = arith.constant dense<0.000000e+00> : vector<128x128xf32>
      %22 = tpu.matmul %20, %21, %cst_24 {dimension_numbers = #tpu.dot_dimension_numbers<[1], [0], [0], [1], [0, 0, 1, 1], [], []>} : vector<128x64xf32>, vector<64x128xf32>, vector<128x128xf32> -> vector<128x128xf32>
      %c0_25 = arith.constant 0 : index
      %c0_26 = arith.constant 0 : index
      %23 = vector.load %arg16[%c0_25, %c0_26] : memref<128x128xf32, #tpu.memory_space<vmem>>, vector<128x128xf32>
      %c0_27 = arith.constant 0 : index
      %c0_28 = arith.constant 0 : index
      %24 = vector.load %arg18[%c0_27, %c0_28] : memref<128x256xf32, #tpu.memory_space<vmem>>, vector<128x128xf32>
      tpu.vector_store %arg18[%c0_27, %c0_28], %23 {strides = array<i32>} : memref<128x256xf32, #tpu.memory_space<vmem>>, vector<128x128xf32>,
      %c0_29 = arith.constant 0 : index
      %c0_30 = arith.constant 0 : index
      %25 = vector.load %arg17[%c0_29, %c0_30] : memref<128x128xf32, #tpu.memory_space<vmem>>, vector<128x128xf32>
      %c0_31 = arith.constant 0 : index
      %c128 = arith.constant 128 : index
      %26 = vector.load %arg18[%c0_31, %c128] : memref<128x256xf32, #tpu.memory_space<vmem>>, vector<128x128xf32>
      tpu.vector_store %arg18[%c0_31, %c128], %25 {strides = array<i32>} : memref<128x256xf32, #tpu.memory_space<vmem>>, vector<128x128xf32>,
      %c0_32 = arith.constant 0 : index
      %c0_33 = arith.constant 0 : index
      %27 = vector.load %arg18[%c0_32, %c0_33] : memref<128x256xf32, #tpu.memory_space<vmem>>, vector<128x256xf32>
      %c0_34 = arith.constant 0 : index
      %c0_35 = arith.constant 0 : index
      %28 = vector.load %arg8[%c0_34, %c0_35] : memref<256x256xf32, #tpu.memory_space<vmem>>, vector<256x256xf32>
      %cst_36 = arith.constant dense<0.000000e+00> : vector<128x256xf32>
      %29 = tpu.matmul %27, %28, %cst_36 {dimension_numbers = #tpu.dot_dimension_numbers<[1], [0], [0], [1], [0, 0, 1, 1], [], []>} : vector<128x256xf32>, vector<256x256xf32>, vector<128x256xf32> -> vector<128x256xf32>
      %30 = arith.mulf %27, %29 : vector<128x256xf32>
      %31 = vector.extract_strided_slice %30 {offsets = [0, 0], sizes = [128, 128], strides = [1, 1]} : vector<128x256xf32> to vector<128x128xf32>
      %32 = vector.extract_strided_slice %30 {offsets = [0, 128], sizes = [128, 128], strides = [1, 1]} : vector<128x256xf32> to vector<128x128xf32>
      %33 = arith.addf %31, %32 : vector<128x128xf32>
      %34 = math.tanh %33 : vector<128x128xf32>
      %c0_37 = arith.constant 0 : index
      %c0_38 = arith.constant 0 : index
      %35 = vector.load %arg2[%c0_37, %c0_38] : memref<128x128xf32, #tpu.memory_space<vmem>>, vector<128x128xf32>
      %c0_39 = arith.constant 0 : index
      %c0_40 = arith.constant 0 : index
      %36 = vector.load %arg19[%c0_39, %c0_40] : memref<128x384xf32, #tpu.memory_space<vmem>>, vector<128x128xf32>
      tpu.vector_store %arg19[%c0_39, %c0_40], %35 {strides = array<i32>} : memref<128x384xf32, #tpu.memory_space<vmem>>, vector<128x128xf32>,
      %c0_41 = arith.constant 0 : index
      %c128_42 = arith.constant 128 : index
      %37 = vector.load %arg19[%c0_41, %c128_42] : memref<128x384xf32, #tpu.memory_space<vmem>>, vector<128x128xf32>
      tpu.vector_store %arg19[%c0_41, %c128_42], %22 {strides = array<i32>} : memref<128x384xf32, #tpu.memory_space<vmem>>, vector<128x128xf32>,
      %c0_43 = arith.constant 0 : index
      %c256 = arith.constant 256 : index
      %38 = vector.load %arg19[%c0_43, %c256] : memref<128x384xf32, #tpu.memory_space<vmem>>, vector<128x128xf32>
      tpu.vector_store %arg19[%c0_43, %c256], %34 {strides = array<i32>} : memref<128x384xf32, #tpu.memory_space<vmem>>, vector<128x128xf32>,
      %c0_44 = arith.constant 0 : index
      %c0_45 = arith.constant 0 : index
      %39 = vector.load %arg19[%c0_44, %c0_45] : memref<128x384xf32, #tpu.memory_space<vmem>>, vector<128x384xf32>
      %c0_46 = arith.constant 0 : index
      %c0_47 = arith.constant 0 : index
      %40 = vector.load %arg9[%c0_46, %c0_47] : memref<384x128xf32, #tpu.memory_space<vmem>>, vector<384x128xf32>
      %cst_48 = arith.constant dense<0.000000e+00> : vector<128x128xf32>
      %41 = tpu.matmul %39, %40, %cst_48 {dimension_numbers = #tpu.dot_dimension_numbers<[1], [0], [0], [1], [0, 0, 1, 1], [], []>} : vector<128x384xf32>, vector<384x128xf32>, vector<128x128xf32> -> vector<128x128xf32>
      %c0_49 = arith.constant 0 : index
      %c0_50 = arith.constant 0 : index
      %42 = vector.load %arg10[%c0_49, %c0_50] : memref<1x128xf32, #tpu.memory_space<vmem>>, vector<1x128xf32>
      %43 = vector.broadcast %42 : vector<1x128xf32> to vector<128x128xf32>
      %44 = arith.addf %41, %43 : vector<128x128xf32>
      %cst_51 = arith.constant 0.000000e+00 : f32
      %45 = vector.broadcast %cst_51 : f32 to vector<128x128xf32>
      %46 = arith.maximumf %44, %45 : vector<128x128xf32>
      %c0_52 = arith.constant 0 : index
      %c0_53 = arith.constant 0 : index
      %47 = vector.load %arg11[%c0_52, %c0_53] : memref<128x128xf32, #tpu.memory_space<vmem>>, vector<128x128xf32>
      %cst_54 = arith.constant dense<0.000000e+00> : vector<128x128xf32>
      %48 = tpu.matmul %46, %47, %cst_54 {dimension_numbers = #tpu.dot_dimension_numbers<[1], [0], [0], [1], [0, 0, 1, 1], [], []>} : vector<128x128xf32>, vector<128x128xf32>, vector<128x128xf32> -> vector<128x128xf32>
      %c0_55 = arith.constant 0 : index
      %c0_56 = arith.constant 0 : index
      %49 = vector.load %arg12[%c0_55, %c0_56] : memref<1x128xf32, #tpu.memory_space<vmem>>, vector<1x128xf32>
      %50 = vector.broadcast %49 : vector<1x128xf32> to vector<128x128xf32>
      %51 = arith.addf %48, %50 : vector<128x128xf32>
      %cst_57 = arith.constant 0.000000e+00 : f32
      %52 = vector.broadcast %cst_57 : f32 to vector<128x128xf32>
      %53 = arith.maximumf %51, %52 : vector<128x128xf32>
      %c0_58 = arith.constant 0 : index
      %c0_59 = arith.constant 0 : index
      %54 = vector.load %arg13[%c0_58, %c0_59] : memref<128x128xf32, #tpu.memory_space<vmem>>, vector<128x128xf32>
      %cst_60 = arith.constant dense<0.000000e+00> : vector<128x128xf32>
      %55 = tpu.matmul %53, %54, %cst_60 {dimension_numbers = #tpu.dot_dimension_numbers<[1], [0], [0], [1], [0, 0, 1, 1], [], []>} : vector<128x128xf32>, vector<128x128xf32>, vector<128x128xf32> -> vector<128x128xf32>
      %c0_61 = arith.constant 0 : index
      %c0_62 = arith.constant 0 : index
      %56 = vector.load %arg14[%c0_61, %c0_62] : memref<1x128xf32, #tpu.memory_space<vmem>>, vector<1x128xf32>
      %57 = vector.broadcast %56 : vector<1x128xf32> to vector<128x128xf32>
      %58 = arith.addf %55, %57 : vector<128x128xf32>
      %59 = arith.addf %58, %35 : vector<128x128xf32>
      %c0_63 = arith.constant 0 : index
      %c0_64 = arith.constant 0 : index
      %60 = vector.load %arg15[%c0_63, %c0_64] : memref<128x128xf32, #tpu.memory_space<vmem>>, vector<128x128xf32>
      tpu.vector_store %arg15[%c0_63, %c0_64], %59 {strides = array<i32>} : memref<128x128xf32, #tpu.memory_space<vmem>>, vector<128x128xf32>,
    } else {
    }
    return
  }
  func.func @transform_0(%arg0: i32, %arg1: i32) -> (i32, i32) {
    %c0_i32 = arith.constant 0 : i32
    %c0_i32_0 = arith.constant 0 : i32
    return %arg0, %c0_i32 : i32, i32
  }
  func.func @transform_1(%arg0: i32, %arg1: i32) -> (i32, i32) {
    %c0_i32 = arith.constant 0 : i32
    %c0_i32_0 = arith.constant 0 : i32
    return %arg1, %c0_i32 : i32, i32
  }
  func.func @transform_2(%arg0: i32, %arg1: i32) -> (i32, i32) {
    %c0_i32 = arith.constant 0 : i32
    %c0_i32_0 = arith.constant 0 : i32
    return %arg0, %c0_i32 : i32, i32
  }
  func.func @transform_3(%arg0: i32, %arg1: i32) -> (i32, i32) {
    %c0_i32 = arith.constant 0 : i32
    %c0_i32_0 = arith.constant 0 : i32
    %c0_i32_1 = arith.constant 0 : i32
    return %c0_i32, %c0_i32_0 : i32, i32
  }
  func.func @transform_4(%arg0: i32, %arg1: i32) -> (i32, i32) {
    %c0_i32 = arith.constant 0 : i32
    return %arg0, %arg1 : i32, i32
  }
  func.func @transform_5(%arg0: i32, %arg1: i32) -> (i32, i32) {
    %c0_i32 = arith.constant 0 : i32
    return %arg0, %arg1 : i32, i32
  }
  func.func @transform_6(%arg0: i32, %arg1: i32) -> (i32, i32) {
    %c0_i32 = arith.constant 0 : i32
    %c0_i32_0 = arith.constant 0 : i32
    %c0_i32_1 = arith.constant 0 : i32
    return %c0_i32, %c0_i32_0 : i32, i32
  }
  func.func @transform_7(%arg0: i32, %arg1: i32) -> (i32, i32) {
    %c0_i32 = arith.constant 0 : i32
    %c0_i32_0 = arith.constant 0 : i32
    %c0_i32_1 = arith.constant 0 : i32
    return %c0_i32, %c0_i32_0 : i32, i32
  }
  func.func @transform_8(%arg0: i32, %arg1: i32) -> (i32, i32) {
    %c0_i32 = arith.constant 0 : i32
    %c0_i32_0 = arith.constant 0 : i32
    %c0_i32_1 = arith.constant 0 : i32
    return %c0_i32, %c0_i32_0 : i32, i32
  }
  func.func @transform_9(%arg0: i32, %arg1: i32) -> (i32, i32) {
    %c0_i32 = arith.constant 0 : i32
    %c0_i32_0 = arith.constant 0 : i32
    %c0_i32_1 = arith.constant 0 : i32
    return %c0_i32, %c0_i32_0 : i32, i32
  }
  func.func @transform_10(%arg0: i32, %arg1: i32) -> (i32, i32) {
    %c0_i32 = arith.constant 0 : i32
    %c0_i32_0 = arith.constant 0 : i32
    %c0_i32_1 = arith.constant 0 : i32
    return %c0_i32, %c0_i32_0 : i32, i32
  }
  func.func @transform_11(%arg0: i32, %arg1: i32) -> (i32, i32) {
    %c0_i32 = arith.constant 0 : i32
    %c0_i32_0 = arith.constant 0 : i32
    %c0_i32_1 = arith.constant 0 : i32
    return %c0_i32, %c0_i32_0 : i32, i32
  }
  func.func @transform_12(%arg0: i32, %arg1: i32) -> (i32, i32) {
    %c0_i32 = arith.constant 0 : i32
    %c0_i32_0 = arith.constant 0 : i32
    %c0_i32_1 = arith.constant 0 : i32
    return %c0_i32, %c0_i32_0 : i32, i32
  }
  func.func @transform_13(%arg0: i32, %arg1: i32) -> (i32, i32) {
    %c0_i32 = arith.constant 0 : i32
    %c0_i32_0 = arith.constant 0 : i32
    return %arg0, %c0_i32 : i32, i32
  }
}

</mosaic_0001>

<llo_original>
// kernel: neg.0
$region0: #{neg.0}
  #allocation2 [shape = 's32[1]{0}', space=sflag, size = 0x4, scoped, tag = 'scoped memory for neg.0']
  %s0 = inlined_call_operand.hbm [shape: f32[64], index: 0, kind: input, shape index: {}]
  %s1 = inlined_call_operand.vmem [shape: f32[64], index: 1, kind: output, shape index: {}]
  $region1: #{neg.0} parent=0
    #allocation0 [shape = 'u8[512]{0}', space=vmem, size = 0x400, scoped, tag = 'operand span for operand 0']
    #allocation1 [shape = 's32[1]{0}', space=sflag, size = 0x4, scoped, tag = 'scoped memory for neg.0']
    %2 = vsyncpa [#allocation1], 0
    %s4 = ssub.s32 16, 16
    %5 = vsyncadd [#allocation1], %s4
    %s7 = sshll.u32 [#allocation0], 4
    %s8 = int_to_ptr.vmem [resolvable:$true] %s7
    %10 = dma.hbm_to_vmem [thread:$0]  %s0, 16, %s8, [#allocation1]
    %11 = dma.done [#allocation1], 16
    %v12 = vld [vmem:[#allocation0] sm:$0x1]
    %13 = xla_tuple %v12
    %14 = xla_tuple %13
    %v15 = vxor.u32 %v12, 2147483648
    %16 = xla_tuple %v15
    %17 = vst [vmem:[%s1] sm:$0x1] %v15
    %18 = vsyncpa [#allocation1], 1

// kernel: diffusion_net_forward.4
$region0: #{diffusion_net_forward.4}
  #allocation0 [shape = 'u32[]', space=smem, size = 0x4, offset = 0x4, fixed_abs, tag = 'smem constant byte address 0x4 - core index']
  #allocation1 [shape = 'u32[144,128]{1,0:T(1,128)}', space=vmem, size = 0x12000, scoped, tag = 'internal scratch']
  %s0 = inlined_call_operand.vmem [shape: f32[64,512], index: 0, kind: input, shape index: {}]
  %s1 = inlined_call_operand.vmem [shape: f32[512,128], index: 1, kind: input, shape index: {}]
  %s2 = inlined_call_operand.vmem [shape: f32[64,128], index: 2, kind: input, shape index: {}]
  %s3 = inlined_call_operand.vmem [shape: f32[64,128], index: 3, kind: output, shape index: {}]
  %s4 = sld [smem:[#allocation0]]
  $region30: #{diffusion_net_forward.4} parent=0
    _
  %s6 = ssub.s32 1, %s4
  %s7 = scalar_select 0, %s6, %s4
  // Predicated region
  $region2: #{diffusion_net_forward.4} parent=0 // pred_check
    _
  $region3: #{diffusion_net_forward.4} parent=0 // pred_check_branch
    %9 = sbr.rel (0) target = $region5
  $region4: #{diffusion_net_forward.4} parent=0 // pred_region
    _
  $region5: #{diffusion_net_forward.4} parent=0 // pred_fallthru
    _
  // Predicated region
  $region6: #{diffusion_net_forward.4} parent=0 // pred_check
    _
  $region7: #{diffusion_net_forward.4} parent=0 // pred_check_branch
    %11 = sbr.rel (0) target = $region9
  $region8: #{diffusion_net_forward.4} parent=0 // pred_region
    _
  $region9: #{diffusion_net_forward.4} parent=0 // pred_fallthru
    _
  // Predicated region
  $region10: #{diffusion_net_forward.4} parent=0 // pred_check
    _
  $region11: #{diffusion_net_forward.4} parent=0 // pred_check_branch
    %13 = sbr.rel (0) target = $region13
  $region12: #{diffusion_net_forward.4} parent=0 // pred_region
    _
  $region13: #{diffusion_net_forward.4} parent=0 // pred_fallthru
    _
  %p14 = scmp.eq.s32.totalorder 0, 0
  // Predicated region
  $region14: #{diffusion_net_forward.4} parent=0 // pred_check
    %p15 = pneg %p14
  $region15: #{diffusion_net_forward.4} parent=0 // pred_check_branch
    %17 = sbr.rel (%p15) target = $region17
  $region16: #{diffusion_net_forward.4} parent=0 // pred_region
    %18 = vst [vmem:[%s3] sm:$0xff] 0.0
    %19 = vst [vmem:[%s3 + $0x8] sm:$0xff] 0.0
    %20 = vst [vmem:[%s3 + $0x10] sm:$0xff] 0.0
    %21 = vst [vmem:[%s3 + $0x18] sm:$0xff] 0.0
    %22 = vst [vmem:[%s3 + $0x20] sm:$0xff] 0.0
    %23 = vst [vmem:[%s3 + $0x28] sm:$0xff] 0.0
    %24 = vst [vmem:[%s3 + $0x30] sm:$0xff] 0.0
    %25 = vst [vmem:[%s3 + $0x38] sm:$0xff] 0.0
  $region17: #{diffusion_net_forward.4} parent=0 // pred_fallthru
    _
  %v26 = vld [vmem:[%s3] sm:$0xff]
  %v27 = vld [vmem:[%s3 + $0x8] sm:$0xff]
  %v28 = vld [vmem:[%s3 + $0x10] sm:$0xff]
  %v29 = vld [vmem:[%s3 + $0x18] sm:$0xff]
  %v30 = vld [vmem:[%s3 + $0x20] sm:$0xff]
  %v31 = vld [vmem:[%s3 + $0x28] sm:$0xff]
  %v32 = vld [vmem:[%s3 + $0x30] sm:$0xff]
  %v33 = vld [vmem:[%s3 + $0x38] sm:$0xff]
  %v34 = vld [vmem:[%s0] sm:$0xff]
  %v35 = vld [vmem:[%s0 + $0x8] sm:$0xff]
  %v36 = vld [vmem:[%s0 + $0x10] sm:$0xff]
  %v37 = vld [vmem:[%s0 + $0x18] sm:$0xff]
  %v38 = vld [vmem:[%s0 + $0x20] sm:$0xff]
  %v39 = vld [vmem:[%s0 + $0x28] sm:$0xff]
  %v40 = vld [vmem:[%s0 + $0x30] sm:$0xff]
  %v41 = vld [vmem:[%s0 + $0x38] sm:$0xff]
  %v42 = vld [vmem:[%s0 + $0x40] sm:$0xff]
  %v43 = vld [vmem:[%s0 + $0x48] sm:$0xff]
  %v44 = vld [vmem:[%s0 + $0x50] sm:$0xff]
  %v45 = vld [vmem:[%s0 + $0x58] sm:$0xff]
  %v46 = vld [vmem:[%s0 + $0x60] sm:$0xff]
  %v47 = vld [vmem:[%s0 + $0x68] sm:$0xff]
  %v48 = vld [vmem:[%s0 + $0x70] sm:$0xff]
  %v49 = vld [vmem:[%s0 + $0x78] sm:$0xff]
  %v50 = vld [vmem:[%s0 + $0x80] sm:$0xff]
  %v51 = vld [vmem:[%s0 + $0x88] sm:$0xff]
  %v52 = vld [vmem:[%s0 + $0x90] sm:$0xff]
  %v53 = vld [vmem:[%s0 + $0x98] sm:$0xff]
  %v54 = vld [vmem:[%s0 + $0xa0] sm:$0xff]
  %v55 = vld [vmem:[%s0 + $0xa8] sm:$0xff]
  %v56 = vld [vmem:[%s0 + $0xb0] sm:$0xff]
  %v57 = vld [vmem:[%s0 + $0xb8] sm:$0xff]
  %v58 = vld [vmem:[%s0 + $0xc0] sm:$0xff]
  %v59 = vld [vmem:[%s0 + $0xc8] sm:$0xff]
  %v60 = vld [vmem:[%s0 + $0xd0] sm:$0xff]
  %v61 = vld [vmem:[%s0 + $0xd8] sm:$0xff]
  %v62 = vld [vmem:[%s0 + $0xe0] sm:$0xff]
  %v63 = vld [vmem:[%s0 + $0xe8] sm:$0xff]
  %v64 = vld [vmem:[%s0 + $0xf0] sm:$0xff]
  %v65 = vld [vmem:[%s0 + $0xf8] sm:$0xff]
  %v66 = vld [vmem:[%s1] sm:$0xff]
  %v67 = vld [vmem:[%s1 + $0x8] sm:$0xff]
  %v68 = vld [vmem:[%s1 + $0x10] sm:$0xff]
  %v69 = vld [vmem:[%s1 + $0x18] sm:$0xff]
  %v70 = vld [vmem:[%s1 + $0x20] sm:$0xff]
  %v71 = vld [vmem:[%s1 + $0x28] sm:$0xff]
  %v72 = vld [vmem:[%s1 + $0x30] sm:$0xff]
  %v73 = vld [vmem:[%s1 + $0x38] sm:$0xff]
  %v74 = vld [vmem:[%s1 + $0x40] sm:$0xff]
  %v75 = vld [vmem:[%s1 + $0x48] sm:$0xff]
  %v76 = vld [vmem:[%s1 + $0x50] sm:$0xff]
  %v77 = vld [vmem:[%s1 + $0x58] sm:$0xff]
  %v78 = vld [vmem:[%s1 + $0x60] sm:$0xff]
  %v79 = vld [vmem:[%s1 + $0x68] sm:$0xff]
  %v80 = vld [vmem:[%s1 + $0x70] sm:$0xff]
  %v81 = vld [vmem:[%s1 + $0x78] sm:$0xff]
  %v82 = vld [vmem:[%s1 + $0x80] sm:$0xff]
  %v83 = vld [vmem:[%s1 + $0x88] sm:$0xff]
  %v84 = vld [vmem:[%s1 + $0x90] sm:$0xff]
  %v85 = vld [vmem:[%s1 + $0x98] sm:$0xff]
  %v86 = vld [vmem:[%s1 + $0xa0] sm:$0xff]
  %v87 = vld [vmem:[%s1 + $0xa8] sm:$0xff]
  %v88 = vld [vmem:[%s1 + $0xb0] sm:$0xff]
  %v89 = vld [vmem:[%s1 + $0xb8] sm:$0xff]
  %v90 = vld [vmem:[%s1 + $0xc0] sm:$0xff]
  %v91 = vld [vmem:[%s1 + $0xc8] sm:$0xff]
  %v92 = vld [vmem:[%s1 + $0xd0] sm:$0xff]
  %v93 = vld [vmem:[%s1 + $0xd8] sm:$0xff]
  %v94 = vld [vmem:[%s1 + $0xe0] sm:$0xff]
  %v95 = vld [vmem:[%s1 + $0xe8] sm:$0xff]
  %v96 = vld [vmem:[%s1 + $0xf0] sm:$0xff]
  %v97 = vld [vmem:[%s1 + $0xf8] sm:$0xff]
  %v98 = vld [vmem:[%s1 + $0x100] sm:$0xff]
  %v99 = vld [vmem:[%s1 + $0x108] sm:$0xff]
  %v100 = vld [vmem:[%s1 + $0x110] sm:$0xff]
  %v101 = vld [vmem:[%s1 + $0x118] sm:$0xff]
  %v102 = vld [vmem:[%s1 + $0x120] sm:$0xff]
  %v103 = vld [vmem:[%s1 + $0x128] sm:$0xff]
  %v104 = vld [vmem:[%s1 + $0x130] sm:$0xff]
  %v105 = vld [vmem:[%s1 + $0x138] sm:$0xff]
  %v106 = vld [vmem:[%s1 + $0x140] sm:$0xff]
  %v107 = vld [vmem:[%s1 + $0x148] sm:$0xff]
  %v108 = vld [vmem:[%s1 + $0x150] sm:$0xff]
  %v109 = vld [vmem:[%s1 + $0x158] sm:$0xff]
  %v110 = vld [vmem:[%s1 + $0x160] sm:$0xff]
  %v111 = vld [vmem:[%s1 + $0x168] sm:$0xff]
  %v112 = vld [vmem:[%s1 + $0x170] sm:$0xff]
  %v113 = vld [vmem:[%s1 + $0x178] sm:$0xff]
  %v114 = vld [vmem:[%s1 + $0x180] sm:$0xff]
  %v115 = vld [vmem:[%s1 + $0x188] sm:$0xff]
  %v116 = vld [vmem:[%s1 + $0x190] sm:$0xff]
  %v117 = vld [vmem:[%s1 + $0x198] sm:$0xff]
  %v118 = vld [vmem:[%s1 + $0x1a0] sm:$0xff]
  %v119 = vld [vmem:[%s1 + $0x1a8] sm:$0xff]
  %v120 = vld [vmem:[%s1 + $0x1b0] sm:$0xff]
  %v121 = vld [vmem:[%s1 + $0x1b8] sm:$0xff]
  %v122 = vld [vmem:[%s1 + $0x1c0] sm:$0xff]
  %v123 = vld [vmem:[%s1 + $0x1c8] sm:$0xff]
  %v124 = vld [vmem:[%s1 + $0x1d0] sm:$0xff]
  %v125 = vld [vmem:[%s1 + $0x1d8] sm:$0xff]
  %v126 = vld [vmem:[%s1 + $0x1e0] sm:$0xff]
  %v127 = vld [vmem:[%s1 + $0x1e8] sm:$0xff]
  %v128 = vld [vmem:[%s1 + $0x1f0] sm:$0xff]
  %v129 = vld [vmem:[%s1 + $0x1f8] sm:$0xff]
  %130 = vmatprep.subr.mxu0 0.0
  %131 = vmatpush1.msra.mxu0 %v66
  %132 = vmatprep.subr.mxu0 0.0
  %133 = vmatpush1.msra.mxu0 %v67
  %134 = vmatprep.subr.mxu0 0.0
  %135 = vmatpush1.msra.mxu0 %v68
  %136 = vmatprep.subr.mxu0 0.0
  %137 = vmatpush1.msra.mxu0 %v69
  %138 = vmatprep.subr.mxu0 0.0
  %139 = vmatpush1.msra.mxu0 %v70
  %140 = vmatprep.subr.mxu0 0.0
  %141 = vmatpush1.msra.mxu0 %v71
  %142 = vmatprep.subr.mxu0 0.0
  %143 = vmatpush1.msra.mxu0 %v72
  %144 = vmatprep.subr.mxu0 0.0
  %145 = vmatpush1.msra.mxu0 %v73
  %146 = vmatprep.subr.mxu0 0.0
  %147 = vmatpush1.msra.mxu0 %v74
  %148 = vmatprep.subr.mxu0 0.0
  %149 = vmatpush1.msra.mxu0 %v75
  %150 = vmatprep.subr.mxu0 0.0
  %151 = vmatpush1.msra.mxu0 %v76
  %152 = vmatprep.subr.mxu0 0.0
  %153 = vmatpush1.msra.mxu0 %v77
  %154 = vmatprep.subr.mxu0 0.0
  %155 = vmatpush1.msra.mxu0 %v78
  %156 = vmatprep.subr.mxu0 0.0
  %157 = vmatpush1.msra.mxu0 %v79
  %158 = vmatprep.subr.mxu0 0.0
  %159 = vmatpush1.msra.mxu0 %v80
  %160 = vmatprep.subr.mxu0 0.0
  %161 = vmatpush1.msra.mxu0 %v81
  %162 = vmatprep.subr.mxu0 0.0
  %163 = vmatpush1.msra.mxu0 %v82
  %164 = vmatprep.subr.mxu0 0.0
  %165 = vmatpush1.msra.mxu0 %v83
  %166 = vmatprep.subr.mxu0 0.0
  %167 = vmatpush1.msra.mxu0 %v84
  %168 = vmatprep.subr.mxu0 0.0
  %169 = vmatpush1.msra.mxu0 %v85
  %170 = vmatprep.subr.mxu0 0.0
  %171 = vmatpush1.msra.mxu0 %v86
  %172 = vmatprep.subr.mxu0 0.0
  %173 = vmatpush1.msra.mxu0 %v87
  %174 = vmatprep.subr.mxu0 0.0
  %175 = vmatpush1.msra.mxu0 %v88
  %176 = vmatprep.subr.mxu0 0.0
  %177 = vmatpush1.msra.mxu0 %v89
  %178 = vmatprep.subr.mxu0 0.0
  %179 = vmatpush1.msra.mxu0 %v90
  %180 = vmatprep.subr.mxu0 0.0
  %181 = vmatpush1.msra.mxu0 %v91
  %182 = vmatprep.subr.mxu0 0.0
  %183 = vmatpush1.msra.mxu0 %v92
  %184 = vmatprep.subr.mxu0 0.0
  %185 = vmatpush1.msra.mxu0 %v93
  %186 = vmatprep.subr.mxu0 0.0
  %187 = vmatpush1.msra.mxu0 %v94
  %188 = vmatprep.subr.mxu0 0.0
  %189 = vmatpush1.msra.mxu0 %v95
  %190 = vmatprep.subr.mxu0 0.0
  %191 = vmatpush1.msra.mxu0 %v96
  %192 = vmatprep.subr.mxu0 0.0
  %193 = vmatpush1.msra.mxu0 %v97
  %194 = vmatprep.mubr.f32.mxu0 %v35
  %195 = vmatmul.mubr.f32.gmra.mrb[0].mxu0 %v34
  %v196 = vpop.f32.mrb[0].mxu0
  %v197 = vadd.f32 0.0, %v196
  %v198 = vpop.f32.mrb[0].mxu0
  %199 = vmatprep.mubr.f32.mxu0 %v39
  %200 = vmatmul.mubr.f32.gmra.mrb[0].mxu0 %v38
  %v201 = vpop.f32.mrb[0].mxu0
  %v202 = vadd.f32 0.0, %v201
  %v203 = vpop.f32.mrb[0].mxu0
  %204 = vmatprep.mubr.f32.mxu0 %v43
  %205 = vmatmul.mubr.f32.gmra.mrb[0].mxu0 %v42
  %v206 = vpop.f32.mrb[0].mxu0
  %v207 = vadd.f32 0.0, %v206
  %v208 = vpop.f32.mrb[0].mxu0
  %209 = vmatprep.mubr.f32.mxu0 %v47
  %210 = vmatmul.mubr.f32.gmra.mrb[0].mxu0 %v46
  %v211 = vpop.f32.mrb[0].mxu0
  %v212 = vadd.f32 0.0, %v211
  %v213 = vpop.f32.mrb[0].mxu0
  %214 = vmatprep.mubr.f32.mxu0 %v51
  %215 = vmatmul.mubr.f32.gmra.mrb[0].mxu0 %v50
  %v216 = vpop.f32.mrb[0].mxu0
  %v217 = vadd.f32 0.0, %v216
  %v218 = vpop.f32.mrb[0].mxu0
  %219 = vmatprep.mubr.f32.mxu0 %v55
  %220 = vmatmul.mubr.f32.gmra.mrb[0].mxu0 %v54
  %v221 = vpop.f32.mrb[0].mxu0
  %v222 = vadd.f32 0.0, %v221
  %v223 = vpop.f32.mrb[0].mxu0
  %224 = vmatprep.mubr.f32.mxu0 %v59
  %225 = vmatmul.mubr.f32.gmra.mrb[0].mxu0 %v58
  %v226 = vpop.f32.mrb[0].mxu0
  %v227 = vadd.f32 0.0, %v226
  %v228 = vpop.f32.mrb[0].mxu0
  %229 = vmatprep.mubr.f32.mxu0 %v63
  %230 = vmatmul.mubr.f32.gmra.mrb[0].mxu0 %v62
  %v231 = vpop.f32.mrb[0].mxu0
  %v232 = vadd.f32 0.0, %v231
  %v233 = vpop.f32.mrb[0].mxu0
  %234 = vdwg.mxu0
  %235 = vmatprep.subr.mxu0 0.0
  %236 = vmatpush1.msra.mxu0 %v98
  %237 = vmatprep.subr.mxu0 0.0
  %238 = vmatpush1.msra.mxu0 %v99
  %239 = vmatprep.subr.mxu0 0.0
  %240 = vmatpush1.msra.mxu0 %v100
  %241 = vmatprep.subr.mxu0 0.0
  %242 = vmatpush1.msra.mxu0 %v101
  %243 = vmatprep.subr.mxu0 0.0
  %244 = vmatpush1.msra.mxu0 %v102
  %245 = vmatprep.subr.mxu0 0.0
  %246 = vmatpush1.msra.mxu0 %v103
  %247 = vmatprep.subr.mxu0 0.0
  %248 = vmatpush1.msra.mxu0 %v104
  %249 = vmatprep.subr.mxu0 0.0
  %250 = vmatpush1.msra.mxu0 %v105
  %251 = vmatprep.subr.mxu0 0.0
  %252 = vmatpush1.msra.mxu0 %v106
  %253 = vmatprep.subr.mxu0 0.0
  %254 = vmatpush1.msra.mxu0 %v107
  %255 = vmatprep.subr.mxu0 0.0
  %256 = vmatpush1.msra.mxu0 %v108
  %257 = vmatprep.subr.mxu0 0.0
  %258 = vmatpush1.msra.mxu0 %v109
  %259 = vmatprep.subr.mxu0 0.0
  %260 = vmatpush1.msra.mxu0 %v110
  %261 = vmatprep.subr.mxu0 0.0
  %262 = vmatpush1.msra.mxu0 %v111
  %263 = vmatprep.subr.mxu0 0.0
  %264 = vmatpush1.msra.mxu0 %v112
  %265 = vmatprep.subr.mxu0 0.0
  %266 = vmatpush1.msra.mxu0 %v113
  %267 = vmatprep.subr.mxu0 0.0
  %268 = vmatpush1.msra.mxu0 %v114
  %269 = vmatprep.subr.mxu0 0.0
  %270 = vmatpush1.msra.mxu0 %v115
  %271 = vmatprep.subr.mxu0 0.0
  %272 = vmatpush1.msra.mxu0 %v116
  %273 = vmatprep.subr.mxu0 0.0
  %274 = vmatpush1.msra.mxu0 %v117
  %275 = vmatprep.subr.mxu0 0.0
  %276 = vmatpush1.msra.mxu0 %v118
  %277 = vmatprep.subr.mxu0 0.0
  %278 = vmatpush1.msra.mxu0 %v119
  %279 = vmatprep.subr.mxu0 0.0
  %280 = vmatpush1.msra.mxu0 %v120
  %281 = vmatprep.subr.mxu0 0.0
  %282 = vmatpush1.msra.mxu0 %v121
  %283 = vmatprep.subr.mxu0 0.0
  %284 = vmatpush1.msra.mxu0 %v122
  %285 = vmatprep.subr.mxu0 0.0
  %286 = vmatpush1.msra.mxu0 %v123
  %287 = vmatprep.subr.mxu0 0.0
  %288 = vmatpush1.msra.mxu0 %v124
  %289 = vmatprep.subr.mxu0 0.0
  %290 = vmatpush1.msra.mxu0 %v125
  %291 = vmatprep.subr.mxu0 0.0
  %292 = vmatpush1.msra.mxu0 %v126
  %293 = vmatprep.subr.mxu0 0.0
  %294 = vmatpush1.msra.mxu0 %v127
  %295 = vmatprep.subr.mxu0 0.0
  %296 = vmatpush1.msra.mxu0 %v128
  %297 = vmatprep.subr.mxu0 0.0
  %298 = vmatpush1.msra.mxu0 %v129
  %299 = vmatprep.mubr.f32.mxu0 %v37
  %300 = vmatmul.mubr.f32.gmra.mrb[0].mxu0 %v36
  %v301 = vpop.f32.mrb[0].mxu0
  %v302 = vadd.f32 %v197, %v301
  %v303 = vpop.f32.mrb[0].mxu0
  %304 = vmatprep.mubr.f32.mxu0 %v41
  %305 = vmatmul.mubr.f32.gmra.mrb[0].mxu0 %v40
  %v306 = vpop.f32.mrb[0].mxu0
  %v307 = vadd.f32 %v202, %v306
  %v308 = vpop.f32.mrb[0].mxu0
  %309 = vmatprep.mubr.f32.mxu0 %v45
  %310 = vmatmul.mubr.f32.gmra.mrb[0].mxu0 %v44
  %v311 = vpop.f32.mrb[0].mxu0
  %v312 = vadd.f32 %v207, %v311
  %v313 = vpop.f32.mrb[0].mxu0
  %314 = vmatprep.mubr.f32.mxu0 %v49
  %315 = vmatmul.mubr.f32.gmra.mrb[0].mxu0 %v48
  %v316 = vpop.f32.mrb[0].mxu0
  %v317 = vadd.f32 %v212, %v316
  %v318 = vpop.f32.mrb[0].mxu0
  %319 = vmatprep.mubr.f32.mxu0 %v53
  %320 = vmatmul.mubr.f32.gmra.mrb[0].mxu0 %v52
  %v321 = vpop.f32.mrb[0].mxu0
  %v322 = vadd.f32 %v217, %v321
  %v323 = vpop.f32.mrb[0].mxu0
  %324 = vmatprep.mubr.f32.mxu0 %v57
  %325 = vmatmul.mubr.f32.gmra.mrb[0].mxu0 %v56
  %v326 = vpop.f32.mrb[0].mxu0
  %v327 = vadd.f32 %v222, %v326
  %v328 = vpop.f32.mrb[0].mxu0
  %329 = vmatprep.mubr.f32.mxu0 %v61
  %330 = vmatmul.mubr.f32.gmra.mrb[0].mxu0 %v60
  %v331 = vpop.f32.mrb[0].mxu0
  %v332 = vadd.f32 %v227, %v331
  %v333 = vpop.f32.mrb[0].mxu0
  %334 = vmatprep.mubr.f32.mxu0 %v65
  %335 = vmatmul.mubr.f32.gmra.mrb[0].mxu0 %v64
  %v336 = vpop.f32.mrb[0].mxu0
  %v337 = vadd.f32 %v232, %v336
  %v338 = vpop.f32.mrb[0].mxu0
  %339 = vdwg.mxu0
  %v340 = vadd.f32 %v26, %v302
  %v341 = vadd.f32 %v27, %v307
  %v342 = vadd.f32 %v28, %v312
  %v343 = vadd.f32 %v29, %v317
  %v344 = vadd.f32 %v30, %v322
  %v345 = vadd.f32 %v31, %v327
  %v346 = vadd.f32 %v32, %v332
  %v347 = vadd.f32 %v33, %v337
  %348 = vst [vmem:[%s3] sm:$0xff] %v340
  %349 = vst [vmem:[%s3 + $0x8] sm:$0xff] %v341
  %350 = vst [vmem:[%s3 + $0x10] sm:$0xff] %v342
  %351 = vst [vmem:[%s3 + $0x18] sm:$0xff] %v343
  %352 = vst [vmem:[%s3 + $0x20] sm:$0xff] %v344
  %353 = vst [vmem:[%s3 + $0x28] sm:$0xff] %v345
  %354 = vst [vmem:[%s3 + $0x30] sm:$0xff] %v346
  %355 = vst [vmem:[%s3 + $0x38] sm:$0xff] %v347
  // Predicated region
  $region18: #{diffusion_net_forward.4} parent=0 // pred_check
    %p356 = pneg %p14
  $region19: #{diffusion_net_forward.4} parent=0 // pred_check_branch
    %358 = sbr.rel (%p356) target = $region21
  $region20: #{diffusion_net_forward.4} parent=0 // pred_region
    %v359 = vld [vmem:[%s2] sm:$0xff]
    %v360 = vld [vmem:[%s2 + $0x8] sm:$0xff]
    %v361 = vld [vmem:[%s2 + $0x10] sm:$0xff]
    %v362 = vld [vmem:[%s2 + $0x18] sm:$0xff]
    %v363 = vld [vmem:[%s2 + $0x20] sm:$0xff]
    %v364 = vld [vmem:[%s2 + $0x28] sm:$0xff]
    %v365 = vld [vmem:[%s2 + $0x30] sm:$0xff]
    %v366 = vld [vmem:[%s2 + $0x38] sm:$0xff]
    %v367 = vld [vmem:[%s3] sm:$0xff]
    %v368 = vld [vmem:[%s3 + $0x8] sm:$0xff]
    %v369 = vld [vmem:[%s3 + $0x10] sm:$0xff]
    %v370 = vld [vmem:[%s3 + $0x18] sm:$0xff]
    %v371 = vld [vmem:[%s3 + $0x20] sm:$0xff]
    %v372 = vld [vmem:[%s3 + $0x28] sm:$0xff]
    %v373 = vld [vmem:[%s3 + $0x30] sm:$0xff]
    %v374 = vld [vmem:[%s3 + $0x38] sm:$0xff]
    %v375 = vmul.f32 %v359, %v367
    %v376 = vmul.f32 %v360, %v368
    %v377 = vmul.f32 %v361, %v369
    %v378 = vmul.f32 %v362, %v370
    %v379 = vmul.f32 %v363, %v371
    %v380 = vmul.f32 %v364, %v372
    %v381 = vmul.f32 %v365, %v373
    %v382 = vmul.f32 %v366, %v374
    %383 = vst [vmem:[%s3] sm:$0xff] %v375
    %384 = vst [vmem:[%s3 + $0x8] sm:$0xff] %v376
    %385 = vst [vmem:[%s3 + $0x10] sm:$0xff] %v377
    %386 = vst [vmem:[%s3 + $0x18] sm:$0xff] %v378
    %387 = vst [vmem:[%s3 + $0x20] sm:$0xff] %v379
    %388 = vst [vmem:[%s3 + $0x28] sm:$0xff] %v380
    %389 = vst [vmem:[%s3 + $0x30] sm:$0xff] %v381
    %390 = vst [vmem:[%s3 + $0x38] sm:$0xff] %v382
  $region21: #{diffusion_net_forward.4} parent=0 // pred_fallthru
    _
  // Predicated region
  $region22: #{diffusion_net_forward.4} parent=0 // pred_check
    _
  $region23: #{diffusion_net_forward.4} parent=0 // pred_check_branch
    %392 = sbr.rel (0) target = $region25
  $region24: #{diffusion_net_forward.4} parent=0 // pred_region
    _
  $region25: #{diffusion_net_forward.4} parent=0 // pred_fallthru
    _
  // Predicated region
  $region26: #{diffusion_net_forward.4} parent=0 // pred_check
    _
  $region27: #{diffusion_net_forward.4} parent=0 // pred_check_branch
    %394 = sbr.rel (0) target = $region29
  $region28: #{diffusion_net_forward.4} parent=0 // pred_region
    _
  $region29: #{diffusion_net_forward.4} parent=0 // pred_fallthru
    _

// kernel: diffusion_net_forward.5
$region0: #{diffusion_net_forward.5}
  #allocation0 [shape = 'u32[]', space=smem, size = 0x4, offset = 0x4, fixed_abs, tag = 'smem constant byte address 0x4 - core index']
  #allocation1 [shape = 'u32[144,128]{1,0:T(1,128)}', space=vmem, size = 0x12000, scoped, tag = 'internal scratch']
  #allocation2 [shape = 'f32[128,128]{1,0:T(8,128)}', space=vmem, size = 0x10000, scoped, tag = 'scratch operand']
  #allocation3 [shape = 'f32[128,128]{1,0:T(8,128)}', space=vmem, size = 0x10000, scoped, tag = 'scratch operand']
  #allocation4 [shape = 'f32[128,256]{1,0:T(8,128)}', space=vmem, size = 0x20000, scoped, tag = 'scratch operand']
  #allocation5 [shape = 'f32[128,384]{1,0:T(8,128)}', space=vmem, size = 0x30000, scoped, tag = 'scratch operand']
  %s0 = inlined_call_operand.vmem [shape: f32[512,128], index: 0, kind: input, shape index: {}]
  %s1 = inlined_call_operand.vmem [shape: f32[512,64], index: 1, kind: input, shape index: {}, may-alias: {1,2}]
  %s2 = inlined_call_operand.vmem [shape: f32[512,64], index: 2, kind: input, shape index: {}, may-alias: {1,2}]
  %s3 = inlined_call_operand.vmem [shape: f32[64,128], index: 3, kind: input, shape index: {}]
  %s4 = inlined_call_operand.vmem [shape: bf16[512,512], index: 4, kind: input, shape index: {}]
  %s5 = inlined_call_operand.vmem [shape: bf16[512,512], index: 5, kind: input, shape index: {}]
  %s6 = inlined_call_operand.vmem [shape: f32[256,256], index: 6, kind: input, shape index: {}]
  %s7 = inlined_call_operand.vmem [shape: f32[384,128], index: 7, kind: input, shape index: {}]
  %s8 = inlined_call_operand.vmem [shape: f32[1,128], index: 8, kind: input, shape index: {}]
  %s9 = inlined_call_operand.vmem [shape: f32[128,128], index: 9, kind: input, shape index: {}]
  %s10 = inlined_call_operand.vmem [shape: f32[1,128], index: 10, kind: input, shape index: {}]
  %s11 = inlined_call_operand.vmem [shape: f32[128,128], index: 11, kind: input, shape index: {}]
  %s12 = inlined_call_operand.vmem [shape: f32[1,128], index: 12, kind: input, shape index: {}]
  %s13 = inlined_call_operand.vmem [shape: f32[512,128], index: 13, kind: output, shape index: {}]
  %s14 = sld [smem:[#allocation0]]
  $region93: #{diffusion_net_forward.5} parent=0
    _
  %s16 = ssub.s32 1, %s14
  %s17 = scalar_select 0, %s16, %s14
  loop: start=0, step=1, limit=6
  $region2: #{diffusion_net_forward.5} parent=0 // loop_pre_header
    _
  $region3: #{diffusion_net_forward.5} parent=0 // loop_header
    %s19 = sphi 0, %s23
    %p20 = scmp.ge.s32.totalorder %s19, 6
    %s26 = sphi 0, %s38
    %s27 = sphi 0, %s34
    %s28 = sphi 0, %s26
    %s29 = sphi 0, %s27
    %s30 = sphi 0, %s28
    %s31 = sphi 0, %s29
    %s41 = sphi 0, %s43
    %s44 = sphi 0, %s41
    %s45 = sphi 0, %s44
    %s61 = sphi 0, %s45
    %s67 = sphi 0, %s69
    %s70 = sphi 0, %s67
    %s71 = sphi 0, %s70
    %s87 = sphi 0, %s71
    %s93 = sphi 0, %s95
    %s96 = sphi 0, %s93
    %s97 = sphi 0, %s96
    %s113 = sphi 0, %s97
    %s117 = sphi 0, %s117
    %s119 = sphi 0, %s117
    %s120 = sphi 0, %s119
    %s134 = sphi 0, %s120
    %s142 = sphi 0, %s144
    %s145 = sphi 0, %s142
    %s146 = sphi 0, %s145
    %s162 = sphi 0, %s146
    %s170 = sphi 0, %s172
    %s173 = sphi 0, %s170
    %s174 = sphi 0, %s173
    %s190 = sphi 0, %s174
    %s194 = sphi 0, %s194
    %s196 = sphi 0, %s194
    %s197 = sphi 0, %s196
    %s211 = sphi 0, %s197
    %s215 = sphi 0, %s215
    %s217 = sphi 0, %s215
    %s218 = sphi 0, %s217
    %s232 = sphi 0, %s218
    %s236 = sphi 0, %s236
    %s238 = sphi 0, %s236
    %s239 = sphi 0, %s238
    %s253 = sphi 0, %s239
    %s257 = sphi 0, %s257
    %s259 = sphi 0, %s257
    %s260 = sphi 0, %s259
    %s274 = sphi 0, %s260
    %s278 = sphi 0, %s278
    %s280 = sphi 0, %s278
    %s281 = sphi 0, %s280
    %s295 = sphi 0, %s281
    %s299 = sphi 0, %s299
    %s301 = sphi 0, %s299
    %s302 = sphi 0, %s301
    %s316 = sphi 0, %s302
    %s320 = sphi 0, %s320
    %s322 = sphi 0, %s320
    %s323 = sphi 0, %s322
    %s337 = sphi 0, %s323
    %s343 = sphi 0, %s345
    %s346 = sphi 0, %s343
    %s347 = sphi 0, %s346
    %s363 = sphi 0, %s347
  $region4: #{diffusion_net_forward.5} parent=0 // loop_header_branch
    %22 = sbr.rel (%p20) target = $region8
  $region5: #{diffusion_net_forward.5} parent=0 // loop_body
    %s24 = ssub.s32 %s19, 1
    %s25 = ssub.s32 %s19, 2
    %s32 = sadd.s32 1, %s27
    %p33 = scmp.ge.s32.totalorder %s32, 1
    %s34 = scalar_select %p33, 0, %s32
    %s35 = sadd.s32 1, %s26
    %s36 = scalar_select %p33, %s35, %s26
    %p37 = scmp.ge.s32.totalorder %s36, 4
    %s38 = scalar_select %p37, 0, %s36
    %s39 = ssub.s32 %s26, %s38
    %p40 = scmp.eq.s32.totalorder %s39, 0
    %s42 = sadd.s32 %s41, 1
    %s43 = scalar_select %p40, %s41, %s42
    %p46 = pneg %p40
    %p47 = scmp.eq.s32.totalorder %s19, 3
    %p48 = por %p46, %p47
    %p49 = scmp.ne.s32.totalorder %s41, %s44
    %p50 = scmp.eq.s32.totalorder %s19, 0
    %p51 = por %p49, %p50
    %p52 = scmp.ne.s32.totalorder %s41, %s44
    %p53 = scmp.eq.s32.totalorder %s24, 3
    %p54 = por %p52, %p53
    %p55 = scmp.ne.s32.totalorder %s44, %s45
    %p56 = scmp.eq.s32.totalorder %s24, 0
    %p57 = por %p55, %p56
    %p58 = scmp.ne.s32.totalorder %s44, %s45
    %p59 = scmp.eq.s32.totalorder %s25, 3
    %p60 = por %p58, %p59
    %p62 = scmp.ne.s32.totalorder %s45, %s61
    %p63 = scmp.eq.s32.totalorder %s25, 0
    %p64 = por %p62, %p63
    %s65 = ssub.s32 %s27, %s34
    %p66 = scmp.eq.s32.totalorder %s65, 0
    %s68 = sadd.s32 %s67, 1
    %s69 = scalar_select %p66, %s67, %s68
    %p72 = pneg %p66
    %p73 = scmp.eq.s32.totalorder %s19, 3
    %p74 = por %p72, %p73
    %p75 = scmp.ne.s32.totalorder %s67, %s70
    %p76 = scmp.eq.s32.totalorder %s19, 0
    %p77 = por %p75, %p76
    %p78 = scmp.ne.s32.totalorder %s67, %s70
    %p79 = scmp.eq.s32.totalorder %s24, 3
    %p80 = por %p78, %p79
    %p81 = scmp.ne.s32.totalorder %s70, %s71
    %p82 = scmp.eq.s32.totalorder %s24, 0
    %p83 = por %p81, %p82
    %p84 = scmp.ne.s32.totalorder %s70, %s71
    %p85 = scmp.eq.s32.totalorder %s25, 3
    %p86 = por %p84, %p85
    %p88 = scmp.ne.s32.totalorder %s71, %s87
    %p89 = scmp.eq.s32.totalorder %s25, 0
    %p90 = por %p88, %p89
    %s91 = ssub.s32 %s26, %s38
    %p92 = scmp.eq.s32.totalorder %s91, 0
    %s94 = sadd.s32 %s93, 1
    %s95 = scalar_select %p92, %s93, %s94
    %p98 = pneg %p92
    %p99 = scmp.eq.s32.totalorder %s19, 3
    %p100 = por %p98, %p99
    %p101 = scmp.ne.s32.totalorder %s93, %s96
    %p102 = scmp.eq.s32.totalorder %s19, 0
    %p103 = por %p101, %p102
    %p104 = scmp.ne.s32.totalorder %s93, %s96
    %p105 = scmp.eq.s32.totalorder %s24, 3
    %p106 = por %p104, %p105
    %p107 = scmp.ne.s32.totalorder %s96, %s97
    %p108 = scmp.eq.s32.totalorder %s24, 0
    %p109 = por %p107, %p108
    %p110 = scmp.ne.s32.totalorder %s96, %s97
    %p111 = scmp.eq.s32.totalorder %s25, 3
    %p112 = por %p110, %p111
    %p114 = scmp.ne.s32.totalorder %s97, %s113
    %p115 = scmp.eq.s32.totalorder %s25, 0
    %p116 = por %p114, %p115
    %s118 = sadd.s32 %s117, 1
    %p121 = scmp.eq.s32.totalorder %s19, 3
    %p122 = scmp.ne.s32.totalorder %s117, %s119
    %p123 = scmp.eq.s32.totalorder %s19, 0
    %p124 = por %p122, %p123
    %p125 = scmp.ne.s32.totalorder %s117, %s119
    %p126 = scmp.eq.s32.totalorder %s24, 3
    %p127 = por %p125, %p126
    %p128 = scmp.ne.s32.totalorder %s119, %s120
    %p129 = scmp.eq.s32.totalorder %s24, 0
    %p130 = por %p128, %p129
    %p131 = scmp.ne.s32.totalorder %s119, %s120
    %p132 = scmp.eq.s32.totalorder %s25, 3
    %p133 = por %p131, %p132
    %p135 = scmp.ne.s32.totalorder %s120, %s134
    %p136 = scmp.eq.s32.totalorder %s25, 0
    %p137 = por %p135, %p136
    %s138 = ssub.s32 %s26, %s38
    %s139 = ssub.s32 %s27, %s34
    %s140 = sor.u32 %s138, %s139
    %p141 = scmp.eq.s32.totalorder %s140, 0
    %s143 = sadd.s32 %s142, 1
    %s144 = scalar_select %p141, %s142, %s143
    %p147 = pneg %p141
    %p148 = scmp.eq.s32.totalorder %s19, 3
    %p149 = por %p147, %p148
    %p150 = scmp.ne.s32.totalorder %s142, %s145
    %p151 = scmp.eq.s32.totalorder %s19, 0
    %p152 = por %p150, %p151
    %p153 = scmp.ne.s32.totalorder %s142, %s145
    %p154 = scmp.eq.s32.totalorder %s24, 3
    %p155 = por %p153, %p154
    %p156 = scmp.ne.s32.totalorder %s145, %s146
    %p157 = scmp.eq.s32.totalorder %s24, 0
    %p158 = por %p156, %p157
    %p159 = scmp.ne.s32.totalorder %s145, %s146
    %p160 = scmp.eq.s32.totalorder %s25, 3
    %p161 = por %p159, %p160
    %p163 = scmp.ne.s32.totalorder %s146, %s162
    %p164 = scmp.eq.s32.totalorder %s25, 0
    %p165 = por %p163, %p164
    %s166 = ssub.s32 %s26, %s38
    %s167 = ssub.s32 %s27, %s34
    %s168 = sor.u32 %s166, %s167
    %p169 = scmp.eq.s32.totalorder %s168, 0
    %s171 = sadd.s32 %s170, 1
    %s172 = scalar_select %p169, %s170, %s171
    %p175 = pneg %p169
    %p176 = scmp.eq.s32.totalorder %s19, 3
    %p177 = por %p175, %p176
    %p178 = scmp.ne.s32.totalorder %s170, %s173
    %p179 = scmp.eq.s32.totalorder %s19, 0
    %p180 = por %p178, %p179
    %p181 = scmp.ne.s32.totalorder %s170, %s173
    %p182 = scmp.eq.s32.totalorder %s24, 3
    %p183 = por %p181, %p182
    %p184 = scmp.ne.s32.totalorder %s173, %s174
    %p185 = scmp.eq.s32.totalorder %s24, 0
    %p186 = por %p184, %p185
    %p187 = scmp.ne.s32.totalorder %s173, %s174
    %p188 = scmp.eq.s32.totalorder %s25, 3
    %p189 = por %p187, %p188
    %p191 = scmp.ne.s32.totalorder %s174, %s190
    %p192 = scmp.eq.s32.totalorder %s25, 0
    %p193 = por %p191, %p192
    %s195 = sadd.s32 %s194, 1
    %p198 = scmp.eq.s32.totalorder %s19, 3
    %p199 = scmp.ne.s32.totalorder %s194, %s196
    %p200 = scmp.eq.s32.totalorder %s19, 0
    %p201 = por %p199, %p200
    %p202 = scmp.ne.s32.totalorder %s194, %s196
    %p203 = scmp.eq.s32.totalorder %s24, 3
    %p204 = por %p202, %p203
    %p205 = scmp.ne.s32.totalorder %s196, %s197
    %p206 = scmp.eq.s32.totalorder %s24, 0
    %p207 = por %p205, %p206
    %p208 = scmp.ne.s32.totalorder %s196, %s197
    %p209 = scmp.eq.s32.totalorder %s25, 3
    %p210 = por %p208, %p209
    %p212 = scmp.ne.s32.totalorder %s197, %s211
    %p213 = scmp.eq.s32.totalorder %s25, 0
    %p214 = por %p212, %p213
    %s216 = sadd.s32 %s215, 1
    %p219 = scmp.eq.s32.totalorder %s19, 3
    %p220 = scmp.ne.s32.totalorder %s215, %s217
    %p221 = scmp.eq.s32.totalorder %s19, 0
    %p222 = por %p220, %p221
    %p223 = scmp.ne.s32.totalorder %s215, %s217
    %p224 = scmp.eq.s32.totalorder %s24, 3
    %p225 = por %p223, %p224
    %p226 = scmp.ne.s32.totalorder %s217, %s218
    %p227 = scmp.eq.s32.totalorder %s24, 0
    %p228 = por %p226, %p227
    %p229 = scmp.ne.s32.totalorder %s217, %s218
    %p230 = scmp.eq.s32.totalorder %s25, 3
    %p231 = por %p229, %p230
    %p233 = scmp.ne.s32.totalorder %s218, %s232
    %p234 = scmp.eq.s32.totalorder %s25, 0
    %p235 = por %p233, %p234
    %s237 = sadd.s32 %s236, 1
    %p240 = scmp.eq.s32.totalorder %s19, 3
    %p241 = scmp.ne.s32.totalorder %s236, %s238
    %p242 = scmp.eq.s32.totalorder %s19, 0
    %p243 = por %p241, %p242
    %p244 = scmp.ne.s32.totalorder %s236, %s238
    %p245 = scmp.eq.s32.totalorder %s24, 3
    %p246 = por %p244, %p245
    %p247 = scmp.ne.s32.totalorder %s238, %s239
    %p248 = scmp.eq.s32.totalorder %s24, 0
    %p249 = por %p247, %p248
    %p250 = scmp.ne.s32.totalorder %s238, %s239
    %p251 = scmp.eq.s32.totalorder %s25, 3
    %p252 = por %p250, %p251
    %p254 = scmp.ne.s32.totalorder %s239, %s253
    %p255 = scmp.eq.s32.totalorder %s25, 0
    %p256 = por %p254, %p255
    %s258 = sadd.s32 %s257, 1
    %p261 = scmp.eq.s32.totalorder %s19, 3
    %p262 = scmp.ne.s32.totalorder %s257, %s259
    %p263 = scmp.eq.s32.totalorder %s19, 0
    %p264 = por %p262, %p263
    %p265 = scmp.ne.s32.totalorder %s257, %s259
    %p266 = scmp.eq.s32.totalorder %s24, 3
    %p267 = por %p265, %p266
    %p268 = scmp.ne.s32.totalorder %s259, %s260
    %p269 = scmp.eq.s32.totalorder %s24, 0
    %p270 = por %p268, %p269
    %p271 = scmp.ne.s32.totalorder %s259, %s260
    %p272 = scmp.eq.s32.totalorder %s25, 3
    %p273 = por %p271, %p272
    %p275 = scmp.ne.s32.totalorder %s260, %s274
    %p276 = scmp.eq.s32.totalorder %s25, 0
    %p277 = por %p275, %p276
    %s279 = sadd.s32 %s278, 1
    %p282 = scmp.eq.s32.totalorder %s19, 3
    %p283 = scmp.ne.s32.totalorder %s278, %s280
    %p284 = scmp.eq.s32.totalorder %s19, 0
    %p285 = por %p283, %p284
    %p286 = scmp.ne.s32.totalorder %s278, %s280
    %p287 = scmp.eq.s32.totalorder %s24, 3
    %p288 = por %p286, %p287
    %p289 = scmp.ne.s32.totalorder %s280, %s281
    %p290 = scmp.eq.s32.totalorder %s24, 0
    %p291 = por %p289, %p290
    %p292 = scmp.ne.s32.totalorder %s280, %s281
    %p293 = scmp.eq.s32.totalorder %s25, 3
    %p294 = por %p292, %p293
    %p296 = scmp.ne.s32.totalorder %s281, %s295
    %p297 = scmp.eq.s32.totalorder %s25, 0
    %p298 = por %p296, %p297
    %s300 = sadd.s32 %s299, 1
    %p303 = scmp.eq.s32.totalorder %s19, 3
    %p304 = scmp.ne.s32.totalorder %s299, %s301
    %p305 = scmp.eq.s32.totalorder %s19, 0
    %p306 = por %p304, %p305
    %p307 = scmp.ne.s32.totalorder %s299, %s301
    %p308 = scmp.eq.s32.totalorder %s24, 3
    %p309 = por %p307, %p308
    %p310 = scmp.ne.s32.totalorder %s301, %s302
    %p311 = scmp.eq.s32.totalorder %s24, 0
    %p312 = por %p310, %p311
    %p313 = scmp.ne.s32.totalorder %s301, %s302
    %p314 = scmp.eq.s32.totalorder %s25, 3
    %p315 = por %p313, %p314
    %p317 = scmp.ne.s32.totalorder %s302, %s316
    %p318 = scmp.eq.s32.totalorder %s25, 0
    %p319 = por %p317, %p318
    %s321 = sadd.s32 %s320, 1
    %p324 = scmp.eq.s32.totalorder %s19, 3
    %p325 = scmp.ne.s32.totalorder %s320, %s322
    %p326 = scmp.eq.s32.totalorder %s19, 0
    %p327 = por %p325, %p326
    %p328 = scmp.ne.s32.totalorder %s320, %s322
    %p329 = scmp.eq.s32.totalorder %s24, 3
    %p330 = por %p328, %p329
    %p331 = scmp.ne.s32.totalorder %s322, %s323
    %p332 = scmp.eq.s32.totalorder %s24, 0
    %p333 = por %p331, %p332
    %p334 = scmp.ne.s32.totalorder %s322, %s323
    %p335 = scmp.eq.s32.totalorder %s25, 3
    %p336 = por %p334, %p335
    %p338 = scmp.ne.s32.totalorder %s323, %s337
    %p339 = scmp.eq.s32.totalorder %s25, 0
    %p340 = por %p338, %p339
    %s341 = ssub.s32 %s26, %s38
    %p342 = scmp.eq.s32.totalorder %s341, 0
    %s344 = sadd.s32 %s343, 1
    %s345 = scalar_select %p342, %s343, %s344
    %p348 = pneg %p342
    %p349 = scmp.eq.s32.totalorder %s19, 3
    %p350 = por %p348, %p349
    %p351 = scmp.ne.s32.totalorder %s343, %s346
    %p352 = scmp.eq.s32.totalorder %s19, 0
    %p353 = por %p351, %p352
    %p354 = scmp.ne.s32.totalorder %s343, %s346
    %p355 = scmp.eq.s32.totalorder %s24, 3
    %p356 = por %p354, %p355
    %p357 = scmp.ne.s32.totalorder %s346, %s347
    %p358 = scmp.eq.s32.totalorder %s24, 0
    %p359 = por %p357, %p358
    %p360 = scmp.ne.s32.totalorder %s346, %s347
    %p361 = scmp.eq.s32.totalorder %s25, 3
    %p362 = por %p360, %p361
    %p364 = scmp.ne.s32.totalorder %s347, %s363
    %p365 = scmp.eq.s32.totalorder %s25, 0
    %p366 = por %p364, %p365
    %p367 = scmp.le.s32.totalorder 1, %s19
    %p368 = scmp.lt.s32.totalorder %s19, 5
    %p369 = pnand %p367, %p368
    %p370 = pneg %p369
    // Predicated region
    $region9: #{diffusion_net_forward.5} parent=5 // pred_check
      _
    $region10: #{diffusion_net_forward.5} parent=5 // pred_check_branch
      %372 = sbr.rel (%p369) target = $region12
    $region11: #{diffusion_net_forward.5} parent=5 // pred_region
      %s373 = ssub.s32 %s19, 1
      // Predicated region
      $region13: #{diffusion_net_forward.5} parent=11 // pred_check
        %p374 = pneg %p83
      $region14: #{diffusion_net_forward.5} parent=11 // pred_check_branch
        %376 = sbr.rel (%p374) target = $region16
      $region15: #{diffusion_net_forward.5} parent=11 // pred_region
        %s377 = smul.u32 64, %s29
        %p378 = scmp.lt.s32.totalorder %s377, 63
        %s379 = scalar_select %p378, %s377, 63
        %s380 = smul.addr %s379, 8
        %s381 = scalar_lea.vmem %s1, %s380
        %s382 = smul.u32 64, %s29
      $region16: #{diffusion_net_forward.5} parent=11 // pred_fallthru
        _
      // Predicated region
      $region17: #{diffusion_net_forward.5} parent=11 // pred_check
        %p383 = pneg %p130
      $region18: #{diffusion_net_forward.5} parent=11 // pred_check_branch
        %385 = sbr.rel (%p383) target = $region20
      $region19: #{diffusion_net_forward.5} parent=11 // pred_region
        _
      $region20: #{diffusion_net_forward.5} parent=11 // pred_fallthru
        _
      // Predicated region
      $region21: #{diffusion_net_forward.5} parent=11 // pred_check
        %p386 = pneg %p207
      $region22: #{diffusion_net_forward.5} parent=11 // pred_check_branch
        %388 = sbr.rel (%p386) target = $region24
      $region23: #{diffusion_net_forward.5} parent=11 // pred_region
        _
      $region24: #{diffusion_net_forward.5} parent=11 // pred_fallthru
        _
      // Predicated region
      $region25: #{diffusion_net_forward.5} parent=11 // pred_check
        %p389 = pneg %p228
      $region26: #{diffusion_net_forward.5} parent=11 // pred_check_branch
        %391 = sbr.rel (%p389) target = $region28
      $region27: #{diffusion_net_forward.5} parent=11 // pred_region
        _
      $region28: #{diffusion_net_forward.5} parent=11 // pred_fallthru
        _
      // Predicated region
      $region29: #{diffusion_net_forward.5} parent=11 // pred_check
        %p392 = pneg %p249
      $region30: #{diffusion_net_forward.5} parent=11 // pred_check_branch
        %394 = sbr.rel (%p392) target = $region32
      $region31: #{diffusion_net_forward.5} parent=11 // pred_region
        _
      $region32: #{diffusion_net_forward.5} parent=11 // pred_fallthru
        _
      // Predicated region
      $region33: #{diffusion_net_forward.5} parent=11 // pred_check
        %p395 = pneg %p270
      $region34: #{diffusion_net_forward.5} parent=11 // pred_check_branch
        %397 = sbr.rel (%p395) target = $region36
      $region35: #{diffusion_net_forward.5} parent=11 // pred_region
        _
      $region36: #{diffusion_net_forward.5} parent=11 // pred_fallthru
        _
      // Predicated region
      $region37: #{diffusion_net_forward.5} parent=11 // pred_check
        %p398 = pneg %p291
      $region38: #{diffusion_net_forward.5} parent=11 // pred_check_branch
        %400 = sbr.rel (%p398) target = $region40
      $region39: #{diffusion_net_forward.5} parent=11 // pred_region
        _
      $region40: #{diffusion_net_forward.5} parent=11 // pred_fallthru
        _
      // Predicated region
      $region41: #{diffusion_net_forward.5} parent=11 // pred_check
        %p401 = pneg %p312
      $region42: #{diffusion_net_forward.5} parent=11 // pred_check_branch
        %403 = sbr.rel (%p401) target = $region44
      $region43: #{diffusion_net_forward.5} parent=11 // pred_region
        _
      $region44: #{diffusion_net_forward.5} parent=11 // pred_fallthru
        _
      // Predicated region
      $region45: #{diffusion_net_forward.5} parent=11 // pred_check
        %p404 = pneg %p333
      $region46: #{diffusion_net_forward.5} parent=11 // pred_check_branch
        %406 = sbr.rel (%p404) target = $region48
      $region47: #{diffusion_net_forward.5} parent=11 // pred_region
        _
      $region48: #{diffusion_net_forward.5} parent=11 // pred_fallthru
        _
    $region12: #{diffusion_net_forward.5} parent=5 // pred_fallthru
      _
    %p407 = scmp.lt.s32.totalorder %s19, 4
    // Predicated region
    $region49: #{diffusion_net_forward.5} parent=5 // pred_check
      %p408 = pneg %p407
    $region50: #{diffusion_net_forward.5} parent=5 // pred_check_branch
      %410 = sbr.rel (%p408) target = $region52
    $region51: #{diffusion_net_forward.5} parent=5 // pred_region
      // Predicated region
      $region53: #{diffusion_net_forward.5} parent=51 // pred_check
        %p411 = pneg %p51
      $region54: #{diffusion_net_forward.5} parent=51 // pred_check_branch
        %413 = sbr.rel (%p411) target = $region56
      $region55: #{diffusion_net_forward.5} parent=51 // pred_region
        %s414 = smul.u32 16, %s26
        %p415 = scmp.lt.s32.totalorder %s414, 63
        %s416 = scalar_select %p415, %s414, 63
        %s417 = smul.addr %s416, 8
        %s418 = scalar_lea.vmem %s0, %s417
        %s419 = smul.u32 16, %s26
      $region56: #{diffusion_net_forward.5} parent=51 // pred_fallthru
        _
      // Predicated region
      $region57: #{diffusion_net_forward.5} parent=51 // pred_check
        %p420 = pneg %p103
      $region58: #{diffusion_net_forward.5} parent=51 // pred_check_branch
        %422 = sbr.rel (%p420) target = $region60
      $region59: #{diffusion_net_forward.5} parent=51 // pred_region
        %s423 = smul.u32 16, %s26
        %p424 = scmp.lt.s32.totalorder %s423, 63
        %s425 = scalar_select %p424, %s423, 63
        %s426 = smul.addr %s425, 8
        %s427 = scalar_lea.vmem %s2, %s426
        %s428 = smul.u32 16, %s26
      $region60: #{diffusion_net_forward.5} parent=51 // pred_fallthru
        _
      // Predicated region
      $region61: #{diffusion_net_forward.5} parent=51 // pred_check
        %p429 = pneg %p152
      $region62: #{diffusion_net_forward.5} parent=51 // pred_check_branch
        %431 = sbr.rel (%p429) target = $region64
      $region63: #{diffusion_net_forward.5} parent=51 // pred_region
        %s432 = smul.u32 16, %s26
        %s433 = smul.u32 4, %s27
        %p434 = scmp.lt.s32.totalorder %s432, 63
        %s435 = scalar_select %p434, %s432, 63
        %p436 = scmp.lt.s32.totalorder %s433, 3
        %s437 = scalar_select %p436, %s433, 3
        %s438 = smul.addr %s435, 4
        %s439 = sadd.s32 %s437, %s438
        %s440 = smul.addr %s439, 4
        %s441 = scalar_lea.vmem %s4, %s440
        %s442 = smul.u32 16, %s26
        %s443 = smul.u32 4, %s27
      $region64: #{diffusion_net_forward.5} parent=51 // pred_fallthru
        _
      // Predicated region
      $region65: #{diffusion_net_forward.5} parent=51 // pred_check
        %p444 = pneg %p180
      $region66: #{diffusion_net_forward.5} parent=51 // pred_check_branch
        %446 = sbr.rel (%p444) target = $region68
      $region67: #{diffusion_net_forward.5} parent=51 // pred_region
        %s447 = smul.u32 16, %s26
        %s448 = smul.u32 4, %s27
        %p449 = scmp.lt.s32.totalorder %s447, 63
        %s450 = scalar_select %p449, %s447, 63
        %p451 = scmp.lt.s32.totalorder %s448, 3
        %s452 = scalar_select %p451, %s448, 3
        %s453 = smul.addr %s450, 4
        %s454 = sadd.s32 %s452, %s453
        %s455 = smul.addr %s454, 4
        %s456 = scalar_lea.vmem %s5, %s455
        %s457 = smul.u32 16, %s26
        %s458 = smul.u32 4, %s27
      $region68: #{diffusion_net_forward.5} parent=51 // pred_fallthru
        _
    $region52: #{diffusion_net_forward.5} parent=5 // pred_fallthru
      _
    %p459 = scmp.le.s32.totalorder 1, %s19
    %p460 = scmp.lt.s32.totalorder %s19, 5
    %p461 = pnand %p459, %p460
    %p462 = pneg %p461
    // Predicated region
    $region69: #{diffusion_net_forward.5} parent=5 // pred_check
      _
    $region70: #{diffusion_net_forward.5} parent=5 // pred_check_branch
      %464 = sbr.rel (%p461) target = $region72
    $region71: #{diffusion_net_forward.5} parent=5 // pred_region
      %s465 = ssub.s32 %s19, 1
      %s466 = smul.u32 16, %s28
      %p467 = scmp.lt.s32.totalorder %s466, 63
      %s468 = scalar_select %p467, %s466, 63
      %s469 = smul.addr %s468, 8
      %s470 = scalar_lea.vmem %s0, %s469
      %p471 = pneg %p57
      %p472 = pneg %p54
      %s473 = smul.u32 64, %s29
      %p474 = scmp.lt.s32.totalorder %s473, 63
      %s475 = scalar_select %p474, %s473, 63
      %s476 = smul.addr %s475, 8
      %s477 = scalar_lea.vmem %s1, %s476
      %p478 = pneg %p83
      %p479 = pneg %p80
      %s480 = smul.u32 16, %s28
      %p481 = scmp.lt.s32.totalorder %s480, 63
      %s482 = scalar_select %p481, %s480, 63
      %s483 = smul.addr %s482, 8
      %s484 = scalar_lea.vmem %s2, %s483
      %p485 = pneg %p109
      %p486 = pneg %p106
      %p487 = pneg %p130
      %p488 = pneg %p127
      %s489 = smul.u32 16, %s28
      %s490 = smul.u32 4, %s29
      %p491 = scmp.lt.s32.totalorder %s489, 63
      %s492 = scalar_select %p491, %s489, 63
      %p493 = scmp.lt.s32.totalorder %s490, 3
      %s494 = scalar_select %p493, %s490, 3
      %s495 = smul.addr %s492, 4
      %s496 = sadd.s32 %s494, %s495
      %s497 = smul.addr %s496, 4
      %s498 = scalar_lea.vmem %s4, %s497
      %p499 = pneg %p158
      %p500 = pneg %p155
      %s501 = smul.u32 16, %s28
      %s502 = smul.u32 4, %s29
      %p503 = scmp.lt.s32.totalorder %s501, 63
      %s504 = scalar_select %p503, %s501, 63
      %p505 = scmp.lt.s32.totalorder %s502, 3
      %s506 = scalar_select %p505, %s502, 3
      %s507 = smul.addr %s504, 4
      %s508 = sadd.s32 %s506, %s507
      %s509 = smul.addr %s508, 4
      %s510 = scalar_lea.vmem %s5, %s509
      %p511 = pneg %p186
      %p512 = pneg %p183
      %p513 = pneg %p207
      %p514 = pneg %p204
      %p515 = pneg %p228
      %p516 = pneg %p225
      %p517 = pneg %p249
      %p518 = pneg %p246
      %p519 = pneg %p270
      %p520 = pneg %p267
      %p521 = pneg %p291
      %p522 = pneg %p288
      %p523 = pneg %p312
      %p524 = pneg %p309
      %p525 = pneg %p333
      %p526 = pneg %p330
      %p527 = pneg %p359
      %p528 = pneg %p356
      %s529 = smul.u32 16, %s28
      %p530 = scmp.lt.s32.totalorder %s529, 63
      %s531 = scalar_select %p530, %s529, 63
      %s532 = smul.addr %s531, 8
      %s533 = scalar_lea.vmem %s13, %s532
      %s534 = smul.u32 16, %s28
      %p535 = scmp.lt.s32.totalorder %s534, 63
      %s536 = scalar_select %p535, %s534, 63
      %s537 = smul.addr %s536, 8
      %s538 = scalar_lea.vmem %s0, %s537
      %s539 = smul.u32 16, %s28
      %s540 = smul.u32 64, %s29
      %p541 = scmp.lt.s32.totalorder %s540, 63
      %s542 = scalar_select %p541, %s540, 63
      %s543 = smul.addr %s542, 8
      %s544 = scalar_lea.vmem %s1, %s543
      %s545 = smul.u32 64, %s29
      %s546 = smul.u32 16, %s28
      %p547 = scmp.lt.s32.totalorder %s546, 63
      %s548 = scalar_select %p547, %s546, 63
      %s549 = smul.addr %s548, 8
      %s550 = scalar_lea.vmem %s2, %s549
      %s551 = smul.u32 16, %s28
      %s552 = smul.u32 16, %s28
      %s553 = smul.u32 4, %s29
      %p554 = scmp.lt.s32.totalorder %s552, 63
      %s555 = scalar_select %p554, %s552, 63
      %p556 = scmp.lt.s32.totalorder %s553, 3
      %s557 = scalar_select %p556, %s553, 3
      %s558 = smul.addr %s555, 4
      %s559 = sadd.s32 %s557, %s558
      %s560 = smul.addr %s559, 4
      %s561 = scalar_lea.vmem %s4, %s560
      %s562 = smul.u32 16, %s28
      %s563 = smul.u32 4, %s29
      %s564 = smul.u32 16, %s28
      %s565 = smul.u32 4, %s29
      %p566 = scmp.lt.s32.totalorder %s564, 63
      %s567 = scalar_select %p566, %s564, 63
      %p568 = scmp.lt.s32.totalorder %s565, 3
      %s569 = scalar_select %p568, %s565, 3
      %s570 = smul.addr %s567, 4
      %s571 = sadd.s32 %s569, %s570
      %s572 = smul.addr %s571, 4
      %s573 = scalar_lea.vmem %s5, %s572
      %s574 = smul.u32 16, %s28
      %s575 = smul.u32 4, %s29
      %s576 = smul.u32 16, %s28
      %p577 = scmp.lt.s32.totalorder %s576, 63
      %s578 = scalar_select %p577, %s576, 63
      %s579 = smul.addr %s578, 8
      %s580 = scalar_lea.vmem %s13, %s579
      %s581 = smul.u32 16, %s28
      %p583 = scmp.eq.s32.totalorder %s29, 0
      // Predicated region
      $region73: #{diffusion_net_forward.5} parent=71 // pred_check
        %p584 = pneg %p583
      $region74: #{diffusion_net_forward.5} parent=71 // pred_check_branch
        %586 = sbr.rel (%p584) target = $region76
      $region75: #{diffusion_net_forward.5} parent=71 // pred_region
        %587 = vst [vmem:[#allocation2] sm:$0xff] 0.0
        %588 = vst [vmem:[#allocation2 + $0x8] sm:$0xff] 0.0
        %589 = vst [vmem:[#allocation2 + $0x10] sm:$0xff] 0.0
        %590 = vst [vmem:[#allocation2 + $0x18] sm:$0xff] 0.0
        %591 = vst [vmem:[#allocation2 + $0x20] sm:$0xff] 0.0
        %592 = vst [vmem:[#allocation2 + $0x28] sm:$0xff] 0.0
        %593 = vst [vmem:[#allocation2 + $0x30] sm:$0xff] 0.0
        %594 = vst [vmem:[#allocation2 + $0x38] sm:$0xff] 0.0
        %595 = vst [vmem:[#allocation2 + $0x40] sm:$0xff] 0.0
        %596 = vst [vmem:[#allocation2 + $0x48] sm:$0xff] 0.0
        %597 = vst [vmem:[#allocation2 + $0x50] sm:$0xff] 0.0
        %598 = vst [vmem:[#allocation2 + $0x58] sm:$0xff] 0.0
        %599 = vst [vmem:[#allocation2 + $0x60] sm:$0xff] 0.0
        %600 = vst [vmem:[#allocation2 + $0x68] sm:$0xff] 0.0
        %601 = vst [vmem:[#allocation2 + $0x70] sm:$0xff] 0.0
        %602 = vst [vmem:[#allocation2 + $0x78] sm:$0xff] 0.0
        %603 = vst [vmem:[#allocation3] sm:$0xff] 0.0
        %604 = vst [vmem:[#allocation3 + $0x8] sm:$0xff] 0.0
        %605 = vst [vmem:[#allocation3 + $0x10] sm:$0xff] 0.0
        %606 = vst [vmem:[#allocation3 + $0x18] sm:$0xff] 0.0
        %607 = vst [vmem:[#allocation3 + $0x20] sm:$0xff] 0.0
        %608 = vst [vmem:[#allocation3 + $0x28] sm:$0xff] 0.0
        %609 = vst [vmem:[#allocation3 + $0x30] sm:$0xff] 0.0
        %610 = vst [vmem:[#allocation3 + $0x38] sm:$0xff] 0.0
        %611 = vst [vmem:[#allocation3 + $0x40] sm:$0xff] 0.0
        %612 = vst [vmem:[#allocation3 + $0x48] sm:$0xff] 0.0
        %613 = vst [vmem:[#allocation3 + $0x50] sm:$0xff] 0.0
        %614 = vst [vmem:[#allocation3 + $0x58] sm:$0xff] 0.0
        %615 = vst [vmem:[#allocation3 + $0x60] sm:$0xff] 0.0
        %616 = vst [vmem:[#allocation3 + $0x68] sm:$0xff] 0.0
        %617 = vst [vmem:[#allocation3 + $0x70] sm:$0xff] 0.0
        %618 = vst [vmem:[#allocation3 + $0x78] sm:$0xff] 0.0
      $region76: #{diffusion_net_forward.5} parent=71 // pred_fallthru
        _
      %v619 = vld [vmem:[%s544] sm:$0xff]
      %v620 = vld [vmem:[%s544 + $0x8] sm:$0xff]
      %v621 = vld [vmem:[%s544 + $0x10] sm:$0xff]
      %v622 = vld [vmem:[%s544 + $0x18] sm:$0xff]
      %v623 = vld [vmem:[%s544 + $0x20] sm:$0xff]
      %v624 = vld [vmem:[%s544 + $0x28] sm:$0xff]
      %v625 = vld [vmem:[%s544 + $0x30] sm:$0xff]
      %v626 = vld [vmem:[%s544 + $0x38] sm:$0xff]
      %v627 = vld [vmem:[%s544 + $0x40] sm:$0xff]
      %v628 = vld [vmem:[%s544 + $0x48] sm:$0xff]
      %v629 = vld [vmem:[%s544 + $0x50] sm:$0xff]
      %v630 = vld [vmem:[%s544 + $0x58] sm:$0xff]
      %v631 = vld [vmem:[%s544 + $0x60] sm:$0xff]
      %v632 = vld [vmem:[%s544 + $0x68] sm:$0xff]
      %v633 = vld [vmem:[%s544 + $0x70] sm:$0xff]
      %v634 = vld [vmem:[%s544 + $0x78] sm:$0xff]
      %v635 = vld [vmem:[%s544 + $0x80] sm:$0xff]
      %v636 = vld [vmem:[%s544 + $0x88] sm:$0xff]
      %v637 = vld [vmem:[%s544 + $0x90] sm:$0xff]
      %v638 = vld [vmem:[%s544 + $0x98] sm:$0xff]
      %v639 = vld [vmem:[%s544 + $0xa0] sm:$0xff]
      %v640 = vld [vmem:[%s544 + $0xa8] sm:$0xff]
      %v641 = vld [vmem:[%s544 + $0xb0] sm:$0xff]
      %v642 = vld [vmem:[%s544 + $0xb8] sm:$0xff]
      %v643 = vld [vmem:[%s544 + $0xc0] sm:$0xff]
      %v644 = vld [vmem:[%s544 + $0xc8] sm:$0xff]
      %v645 = vld [vmem:[%s544 + $0xd0] sm:$0xff]
      %v646 = vld [vmem:[%s544 + $0xd8] sm:$0xff]
      %v647 = vld [vmem:[%s544 + $0xe0] sm:$0xff]
      %v648 = vld [vmem:[%s544 + $0xe8] sm:$0xff]
      %v649 = vld [vmem:[%s544 + $0xf0] sm:$0xff]
      %v650 = vld [vmem:[%s544 + $0xf8] sm:$0xff]
      %v651 = vld [vmem:[%s544 + $0x100] sm:$0xff]
      %v652 = vld [vmem:[%s544 + $0x108] sm:$0xff]
      %v653 = vld [vmem:[%s544 + $0x110] sm:$0xff]
      %v654 = vld [vmem:[%s544 + $0x118] sm:$0xff]
      %v655 = vld [vmem:[%s544 + $0x120] sm:$0xff]
      %v656 = vld [vmem:[%s544 + $0x128] sm:$0xff]
      %v657 = vld [vmem:[%s544 + $0x130] sm:$0xff]
      %v658 = vld [vmem:[%s544 + $0x138] sm:$0xff]
      %v659 = vld [vmem:[%s544 + $0x140] sm:$0xff]
      %v660 = vld [vmem:[%s544 + $0x148] sm:$0xff]
      %v661 = vld [vmem:[%s544 + $0x150] sm:$0xff]
      %v662 = vld [vmem:[%s544 + $0x158] sm:$0xff]
      %v663 = vld [vmem:[%s544 + $0x160] sm:$0xff]
      %v664 = vld [vmem:[%s544 + $0x168] sm:$0xff]
      %v665 = vld [vmem:[%s544 + $0x170] sm:$0xff]
      %v666 = vld [vmem:[%s544 + $0x178] sm:$0xff]
      %v667 = vld [vmem:[%s544 + $0x180] sm:$0xff]
      %v668 = vld [vmem:[%s544 + $0x188] sm:$0xff]
      %v669 = vld [vmem:[%s544 + $0x190] sm:$0xff]
      %v670 = vld [vmem:[%s544 + $0x198] sm:$0xff]
      %v671 = vld [vmem:[%s544 + $0x1a0] sm:$0xff]
      %v672 = vld [vmem:[%s544 + $0x1a8] sm:$0xff]
      %v673 = vld [vmem:[%s544 + $0x1b0] sm:$0xff]
      %v674 = vld [vmem:[%s544 + $0x1b8] sm:$0xff]
      %v675 = vld [vmem:[%s544 + $0x1c0] sm:$0xff]
      %v676 = vld [vmem:[%s544 + $0x1c8] sm:$0xff]
      %v677 = vld [vmem:[%s544 + $0x1d0] sm:$0xff]
      %v678 = vld [vmem:[%s544 + $0x1d8] sm:$0xff]
      %v679 = vld [vmem:[%s544 + $0x1e0] sm:$0xff]
      %v680 = vld [vmem:[%s544 + $0x1e8] sm:$0xff]
      %v681 = vld [vmem:[%s544 + $0x1f0] sm:$0xff]
      %v682 = vld [vmem:[%s544 + $0x1f8] sm:$0xff]
      %v683 = vld [vmem:[%s3] sm:$0xff]
      %v684 = vld [vmem:[%s3 + $0x8] sm:$0xff]
      %v685 = vld [vmem:[%s3 + $0x10] sm:$0xff]
      %v686 = vld [vmem:[%s3 + $0x18] sm:$0xff]
      %v687 = vld [vmem:[%s3 + $0x20] sm:$0xff]
      %v688 = vld [vmem:[%s3 + $0x28] sm:$0xff]
      %v689 = vld [vmem:[%s3 + $0x30] sm:$0xff]
      %v690 = vld [vmem:[%s3 + $0x38] sm:$0xff]
      %vm691 = vcmask 523264
      %v693 = vsel %vm691, %v619, 0
      %v696 = vsel %vm691, %v620, 0
      %v699 = vsel %vm691, %v621, 0
      %v702 = vsel %vm691, %v622, 0
      %v705 = vsel %vm691, %v623, 0
      %v708 = vsel %vm691, %v624, 0
      %v711 = vsel %vm691, %v625, 0
      %v714 = vsel %vm691, %v626, 0
      %v717 = vsel %vm691, %v627, 0
      %v720 = vsel %vm691, %v628, 0
      %v723 = vsel %vm691, %v629, 0
      %v726 = vsel %vm691, %v630, 0
      %v729 = vsel %vm691, %v631, 0
      %v732 = vsel %vm691, %v632, 0
      %v735 = vsel %vm691, %v633, 0
      %v738 = vsel %vm691, %v634, 0
      %v741 = vsel %vm691, %v635, 0
      %v744 = vsel %vm691, %v636, 0
      %v747 = vsel %vm691, %v637, 0
      %v750 = vsel %vm691, %v638, 0
      %v753 = vsel %vm691, %v639, 0
      %v756 = vsel %vm691, %v640, 0
      %v759 = vsel %vm691, %v641, 0
      %v762 = vsel %vm691, %v642, 0
      %v765 = vsel %vm691, %v643, 0
      %v768 = vsel %vm691, %v644, 0
      %v771 = vsel %vm691, %v645, 0
      %v774 = vsel %vm691, %v646, 0
      %v777 = vsel %vm691, %v647, 0
      %v780 = vsel %vm691, %v648, 0
      %v783 = vsel %vm691, %v649, 0
      %v786 = vsel %vm691, %v650, 0
      %v789 = vsel %vm691, %v651, 0
      %v792 = vsel %vm691, %v652, 0
      %v795 = vsel %vm691, %v653, 0
      %v798 = vsel %vm691, %v654, 0
      %v801 = vsel %vm691, %v655, 0
      %v804 = vsel %vm691, %v656, 0
      %v807 = vsel %vm691, %v657, 0
      %v810 = vsel %vm691, %v658, 0
      %v813 = vsel %vm691, %v659, 0
      %v816 = vsel %vm691, %v660, 0
      %v819 = vsel %vm691, %v661, 0
      %v822 = vsel %vm691, %v662, 0
      %v825 = vsel %vm691, %v663, 0
      %v828 = vsel %vm691, %v664, 0
      %v831 = vsel %vm691, %v665, 0
      %v834 = vsel %vm691, %v666, 0
      %v837 = vsel %vm691, %v667, 0
      %v840 = vsel %vm691, %v668, 0
      %v843 = vsel %vm691, %v669, 0
      %v846 = vsel %vm691, %v670, 0
      %v849 = vsel %vm691, %v671, 0
      %v852 = vsel %vm691, %v672, 0
      %v855 = vsel %vm691, %v673, 0
      %v858 = vsel %vm691, %v674, 0
      %v861 = vsel %vm691, %v675, 0
      %v864 = vsel %vm691, %v676, 0
      %v867 = vsel %vm691, %v677, 0
      %v870 = vsel %vm691, %v678, 0
      %v873 = vsel %vm691, %v679, 0
      %v876 = vsel %vm691, %v680, 0
      %v879 = vsel %vm691, %v681, 0
      %v882 = vsel %vm691, %v682, 0
      %884 = vmatprep.subr.mxu0 0.0
      %885 = vmatpush1.msra.mxu0 %v683
      %886 = vmatprep.subr.mxu0 0.0
      %887 = vmatpush1.msra.mxu0 %v684
      %888 = vmatprep.subr.mxu0 0.0
      %889 = vmatpush1.msra.mxu0 %v685
      %890 = vmatprep.subr.mxu0 0.0
      %891 = vmatpush1.msra.mxu0 %v686
      %892 = vmatprep.subr.mxu0 0.0
      %893 = vmatpush1.msra.mxu0 %v687
      %894 = vmatprep.subr.mxu0 0.0
      %895 = vmatpush1.msra.mxu0 %v688
      %896 = vmatprep.subr.mxu0 0.0
      %897 = vmatpush1.msra.mxu0 %v689
      %898 = vmatprep.subr.mxu0 0.0
      %899 = vmatpush1.msra.mxu0 %v690
      %900 = vmatprep.subr.mxu0 0.0
      %901 = vmatpush1.msra.mxu0 0.0
      %902 = vmatprep.subr.mxu0 0.0
      %903 = vmatpush1.msra.mxu0 0.0
      %904 = vmatprep.subr.mxu0 0.0
      %905 = vmatpush1.msra.mxu0 0.0
      %906 = vmatprep.subr.mxu0 0.0
      %907 = vmatpush1.msra.mxu0 0.0
      %908 = vmatprep.subr.mxu0 0.0
      %909 = vmatpush1.msra.mxu0 0.0
      %910 = vmatprep.subr.mxu0 0.0
      %911 = vmatpush1.msra.mxu0 0.0
      %912 = vmatprep.subr.mxu0 0.0
      %913 = vmatpush1.msra.mxu0 0.0
      %914 = vmatprep.subr.mxu0 0.0
      %915 = vmatpush1.msra.mxu0 0.0
      %916 = vmatprep.subr.mxu0 0.0
      %917 = vmatpush1.msra.mxu0 0.0
      %918 = vmatprep.subr.mxu0 0.0
      %919 = vmatpush1.msra.mxu0 0.0
      %920 = vmatprep.subr.mxu0 0.0
      %921 = vmatpush1.msra.mxu0 0.0
      %922 = vmatprep.subr.mxu0 0.0
      %923 = vmatpush1.msra.mxu0 0.0
      %924 = vmatprep.subr.mxu0 0.0
      %925 = vmatpush1.msra.mxu0 0.0
      %926 = vmatprep.subr.mxu0 0.0
      %927 = vmatpush1.msra.mxu0 0.0
      %928 = vmatprep.subr.mxu0 0.0
      %929 = vmatpush1.msra.mxu0 0.0
      %930 = vmatprep.subr.mxu0 0.0
      %931 = vmatpush1.msra.mxu0 0.0
      %932 = vmatprep.subr.mxu0 0.0
      %933 = vmatpush1.msra.mxu0 0.0
      %934 = vmatprep.subr.mxu0 0.0
      %935 = vmatpush1.msra.mxu0 0.0
      %936 = vmatprep.subr.mxu0 0.0
      %937 = vmatpush1.msra.mxu0 0.0
      %938 = vmatprep.subr.mxu0 0.0
      %939 = vmatpush1.msra.mxu0 0.0
      %940 = vmatprep.subr.mxu0 0.0
      %941 = vmatpush1.msra.mxu0 0.0
      %942 = vmatprep.subr.mxu0 0.0
      %943 = vmatpush1.msra.mxu0 0.0
      %944 = vmatprep.subr.mxu0 0.0
      %945 = vmatpush1.msra.mxu0 0.0
      %946 = vmatprep.subr.mxu0 0.0
      %947 = vmatpush1.msra.mxu0 0.0
      %948 = vmatprep.mubr.f32.mxu0 0.0
      %949 = vmatmul.mubr.f32.gmra.mrb[0].mxu0 %v693
      %v950 = vpop.f32.mrb[0].mxu0
      %v951 = vadd.f32 0.0, %v950
      %v952 = vpop.f32.mrb[0].mxu0
      %953 = vmatprep.mubr.f32.mxu0 0.0
      %954 = vmatmul.mubr.f32.gmra.mrb[0].mxu0 %v696
      %v955 = vpop.f32.mrb[0].mxu0
      %v956 = vadd.f32 0.0, %v955
      %v957 = vpop.f32.mrb[0].mxu0
      %958 = vmatprep.mubr.f32.mxu0 0.0
      %959 = vmatmul.mubr.f32.gmra.mrb[0].mxu0 %v699
      %v960 = vpop.f32.mrb[0].mxu0
      %v961 = vadd.f32 0.0, %v960
      %v962 = vpop.f32.mrb[0].mxu0
      %963 = vmatprep.mubr.f32.mxu0 0.0
      %964 = vmatmul.mubr.f32.gmra.mrb[0].mxu0 %v702
      %v965 = vpop.f32.mrb[0].mxu0
      %v966 = vadd.f32 0.0, %v965
      %v967 = vpop.f32.mrb[0].mxu0
      %968 = vmatprep.mubr.f32.mxu0 0.0
      %969 = vmatmul.mubr.f32.gmra.mrb[0].mxu0 %v705
      %v970 = vpop.f32.mrb[0].mxu0
      %v971 = vadd.f32 0.0, %v970
      %v972 = vpop.f32.mrb[0].mxu0
      %973 = vmatprep.mubr.f32.mxu0 0.0
      %974 = vmatmul.mubr.f32.gmra.mrb[0].mxu0 %v708
      %v975 = vpop.f32.mrb[0].mxu0
      %v976 = vadd.f32 0.0, %v975
      %v977 = vpop.f32.mrb[0].mxu0
      %978 = vmatprep.mubr.f32.mxu0 0.0
      %979 = vmatmul.mubr.f32.gmra.mrb[0].mxu0 %v711
      %v980 = vpop.f32.mrb[0].mxu0
      %v981 = vadd.f32 0.0, %v980
      %v982 = vpop.f32.mrb[0].mxu0
      %983 = vmatprep.mubr.f32.mxu0 0.0
      %984 = vmatmul.mubr.f32.gmra.mrb[0].mxu0 %v714
      %v985 = vpop.f32.mrb[0].mxu0
      %v986 = vadd.f32 0.0, %v985
      %v987 = vpop.f32.mrb[0].mxu0
      %988 = vmatprep.mubr.f32.mxu0 0.0
      %989 = vmatmul.mubr.f32.gmra.mrb[0].mxu0 %v717
      %v990 = vpop.f32.mrb[0].mxu0
      %v991 = vadd.f32 0.0, %v990
      %v992 = vpop.f32.mrb[0].mxu0
      %993 = vmatprep.mubr.f32.mxu0 0.0
      %994 = vmatmul.mubr.f32.gmra.mrb[0].mxu0 %v720
      %v995 = vpop.f32.mrb[0].mxu0
      %v996 = vadd.f32 0.0, %v995
      %v997 = vpop.f32.mrb[0].mxu0
      %998 = vmatprep.mubr.f32.mxu0 0.0
      %999 = vmatmul.mubr.f32.gmra.mrb[0].mxu0 %v723
      %v1000 = vpop.f32.mrb[0].mxu0
      %v1001 = vadd.f32 0.0, %v1000
      %v1002 = vpop.f32.mrb[0].mxu0
      %1003 = vmatprep.mubr.f32.mxu0 0.0
      %1004 = vmatmul.mubr.f32.gmra.mrb[0].mxu0 %v726
      %v1005 = vpop.f32.mrb[0].mxu0
      %v1006 = vadd.f32 0.0, %v1005
      %v1007 = vpop.f32.mrb[0].mxu0
      %1008 = vmatprep.mubr.f32.mxu0 0.0
      %1009 = vmatmul.mubr.f32.gmra.mrb[0].mxu0 %v729
      %v1010 = vpop.f32.mrb[0].mxu0
      %v1011 = vadd.f32 0.0, %v1010
      %v1012 = vpop.f32.mrb[0].mxu0
      %1013 = vmatprep.mubr.f32.mxu0 0.0
      %1014 = vmatmul.mubr.f32.gmra.mrb[0].mxu0 %v732
      %v1015 = vpop.f32.mrb[0].mxu0
      %v1016 = vadd.f32 0.0, %v1015
      %v1017 = vpop.f32.mrb[0].mxu0
      %1018 = vmatprep.mubr.f32.mxu0 0.0
      %1019 = vmatmul.mubr.f32.gmra.mrb[0].mxu0 %v735
      %v1020 = vpop.f32.mrb[0].mxu0
      %v1021 = vadd.f32 0.0, %v1020
      %v1022 = vpop.f32.mrb[0].mxu0
      %1023 = vmatprep.mubr.f32.mxu0 0.0
      %1024 = vmatmul.mubr.f32.gmra.mrb[0].mxu0 %v738
      %v1025 = vpop.f32.mrb[0].mxu0
      %v1026 = vadd.f32 0.0, %v1025
      %v1027 = vpop.f32.mrb[0].mxu0
      %1028 = vmatprep.mubr.f32.mxu0 0.0
      %1029 = vmatmul.mubr.f32.gmra.mrb[0].mxu0 %v741
      %v1030 = vpop.f32.mrb[0].mxu0
      %v1031 = vadd.f32 0.0, %v1030
      %v1032 = vpop.f32.mrb[0].mxu0
      %1033 = vmatprep.mubr.f32.mxu0 0.0
      %1034 = vmatmul.mubr.f32.gmra.mrb[0].mxu0 %v744
      %v1035 = vpop.f32.mrb[0].mxu0
      %v1036 = vadd.f32 0.0, %v1035
      %v1037 = vpop.f32.mrb[0].mxu0
      %1038 = vmatprep.mubr.f32.mxu0 0.0
      %1039 = vmatmul.mubr.f32.gmra.mrb[0].mxu0 %v747
      %v1040 = vpop.f32.mrb[0].mxu0
      %v1041 = vadd.f32 0.0, %v1040
      %v1042 = vpop.f32.mrb[0].mxu0
      %1043 = vmatprep.mubr.f32.mxu0 0.0
      %1044 = vmatmul.mubr.f32.gmra.mrb[0].mxu0 %v750
      %v1045 = vpop.f32.mrb[0].mxu0
      %v1046 = vadd.f32 0.0, %v1045
      %v1047 = vpop.f32.mrb[0].mxu0
      %1048 = vmatprep.mubr.f32.mxu0 0.0
      %1049 = vmatmul.mubr.f32.gmra.mrb[0].mxu0 %v753
      %v1050 = vpop.f32.mrb[0].mxu0
      %v1051 = vadd.f32 0.0, %v1050
      %v1052 = vpop.f32.mrb[0].mxu0
      %1053 = vmatprep.mubr.f32.mxu0 0.0
      %1054 = vmatmul.mubr.f32.gmra.mrb[0].mxu0 %v756
      %v1055 = vpop.f32.mrb[0].mxu0
      %v1056 = vadd.f32 0.0, %v1055
      %v1057 = vpop.f32.mrb[0].mxu0
      %1058 = vmatprep.mubr.f32.mxu0 0.0
      %1059 = vmatmul.mubr.f32.gmra.mrb[0].mxu0 %v759
      %v1060 = vpop.f32.mrb[0].mxu0
      %v1061 = vadd.f32 0.0, %v1060
      %v1062 = vpop.f32.mrb[0].mxu0
      %1063 = vmatprep.mubr.f32.mxu0 0.0
      %1064 = vmatmul.mubr.f32.gmra.mrb[0].mxu0 %v762
      %v1065 = vpop.f32.mrb[0].mxu0
      %v1066 = vadd.f32 0.0, %v1065
      %v1067 = vpop.f32.mrb[0].mxu0
      %1068 = vmatprep.mubr.f32.mxu0 0.0
      %1069 = vmatmul.mubr.f32.gmra.mrb[0].mxu0 %v765
      %v1070 = vpop.f32.mrb[0].mxu0
      %v1071 = vadd.f32 0.0, %v1070
      %v1072 = vpop.f32.mrb[0].mxu0
      %1073 = vmatprep.mubr.f32.mxu0 0.0
      %1074 = vmatmul.mubr.f32.gmra.mrb[0].mxu0 %v768
      %v1075 = vpop.f32.mrb[0].mxu0
      %v1076 = vadd.f32 0.0, %v1075
      %v1077 = vpop.f32.mrb[0].mxu0
      %1078 = vmatprep.mubr.f32.mxu0 0.0
      %1079 = vmatmul.mubr.f32.gmra.mrb[0].mxu0 %v771
      %v1080 = vpop.f32.mrb[0].mxu0
      %v1081 = vadd.f32 0.0, %v1080
      %v1082 = vpop.f32.mrb[0].mxu0
      %1083 = vmatprep.mubr.f32.mxu0 0.0
      %1084 = vmatmul.mubr.f32.gmra.mrb[0].mxu0 %v774
      %v1085 = vpop.f32.mrb[0].mxu0
      %v1086 = vadd.f32 0.0, %v1085
      %v1087 = vpop.f32.mrb[0].mxu0
      %1088 = vmatprep.mubr.f32.mxu0 0.0
      %1089 = vmatmul.mubr.f32.gmra.mrb[0].mxu0 %v777
      %v1090 = vpop.f32.mrb[0].mxu0
      %v1091 = vadd.f32 0.0, %v1090
      %v1092 = vpop.f32.mrb[0].mxu0
      %1093 = vmatprep.mubr.f32.mxu0 0.0
      %1094 = vmatmul.mubr.f32.gmra.mrb[0].mxu0 %v780
      %v1095 = vpop.f32.mrb[0].mxu0
      %v1096 = vadd.f32 0.0, %v1095
      %v1097 = vpop.f32.mrb[0].mxu0
      %1098 = vmatprep.mubr.f32.mxu0 0.0
      %1099 = vmatmul.mubr.f32.gmra.mrb[0].mxu0 %v783
      %v1100 = vpop.f32.mrb[0].mxu0
      %v1101 = vadd.f32 0.0, %v1100
      %v1102 = vpop.f32.mrb[0].mxu0
      %1103 = vmatprep.mubr.f32.mxu0 0.0
      %1104 = vmatmul.mubr.f32.gmra.mrb[0].mxu0 %v786
      %v1105 = vpop.f32.mrb[0].mxu0
      %v1106 = vadd.f32 0.0, %v1105
      %v1107 = vpop.f32.mrb[0].mxu0
      %1108 = vmatprep.mubr.f32.mxu0 0.0
      %1109 = vmatmul.mubr.f32.gmra.mrb[0].mxu0 %v789
      %v1110 = vpop.f32.mrb[0].mxu0
      %v1111 = vadd.f32 0.0, %v1110
      %v1112 = vpop.f32.mrb[0].mxu0
      %1113 = vmatprep.mubr.f32.mxu0 0.0
      %1114 = vmatmul.mubr.f32.gmra.mrb[0].mxu0 %v792
      %v1115 = vpop.f32.mrb[0].mxu0
      %v1116 = vadd.f32 0.0, %v1115
      %v1117 = vpop.f32.mrb[0].mxu0
      %1118 = vmatprep.mubr.f32.mxu0 0.0
      %1119 = vmatmul.mubr.f32.gmra.mrb[0].mxu0 %v795
      %v1120 = vpop.f32.mrb[0].mxu0
      %v1121 = vadd.f32 0.0, %v1120
      %v1122 = vpop.f32.mrb[0].mxu0
      %1123 = vmatprep.mubr.f32.mxu0 0.0
      %1124 = vmatmul.mubr.f32.gmra.mrb[0].mxu0 %v798
      %v1125 = vpop.f32.mrb[0].mxu0
      %v1126 = vadd.f32 0.0, %v1125
      %v1127 = vpop.f32.mrb[0].mxu0
      %1128 = vmatprep.mubr.f32.mxu0 0.0
      %1129 = vmatmul.mubr.f32.gmra.mrb[0].mxu0 %v801
      %v1130 = vpop.f32.mrb[0].mxu0
      %v1131 = vadd.f32 0.0, %v1130
      %v1132 = vpop.f32.mrb[0].mxu0
      %1133 = vmatprep.mubr.f32.mxu0 0.0
      %1134 = vmatmul.mubr.f32.gmra.mrb[0].mxu0 %v804
      %v1135 = vpop.f32.mrb[0].mxu0
      %v1136 = vadd.f32 0.0, %v1135
      %v1137 = vpop.f32.mrb[0].mxu0
      %1138 = vmatprep.mubr.f32.mxu0 0.0
      %1139 = vmatmul.mubr.f32.gmra.mrb[0].mxu0 %v807
      %v1140 = vpop.f32.mrb[0].mxu0
      %v1141 = vadd.f32 0.0, %v1140
      %v1142 = vpop.f32.mrb[0].mxu0
      %1143 = vmatprep.mubr.f32.mxu0 0.0
      %1144 = vmatmul.mubr.f32.gmra.mrb[0].mxu0 %v810
      %v1145 = vpop.f32.mrb[0].mxu0
      %v1146 = vadd.f32 0.0, %v1145
      %v1147 = vpop.f32.mrb[0].mxu0
      %1148 = vmatprep.mubr.f32.mxu0 0.0
      %1149 = vmatmul.mubr.f32.gmra.mrb[0].mxu0 %v813
      %v1150 = vpop.f32.mrb[0].mxu0
      %v1151 = vadd.f32 0.0, %v1150
      %v1152 = vpop.f32.mrb[0].mxu0
      %1153 = vmatprep.mubr.f32.mxu0 0.0
      %1154 = vmatmul.mubr.f32.gmra.mrb[0].mxu0 %v816
      %v1155 = vpop.f32.mrb[0].mxu0
      %v1156 = vadd.f32 0.0, %v1155
      %v1157 = vpop.f32.mrb[0].mxu0
      %1158 = vmatprep.mubr.f32.mxu0 0.0
      %1159 = vmatmul.mubr.f32.gmra.mrb[0].mxu0 %v819
      %v1160 = vpop.f32.mrb[0].mxu0
      %v1161 = vadd.f32 0.0, %v1160
      %v1162 = vpop.f32.mrb[0].mxu0
      %1163 = vmatprep.mubr.f32.mxu0 0.0
      %1164 = vmatmul.mubr.f32.gmra.mrb[0].mxu0 %v822
      %v1165 = vpop.f32.mrb[0].mxu0
      %v1166 = vadd.f32 0.0, %v1165
      %v1167 = vpop.f32.mrb[0].mxu0
      %1168 = vmatprep.mubr.f32.mxu0 0.0
      %1169 = vmatmul.mubr.f32.gmra.mrb[0].mxu0 %v825
      %v1170 = vpop.f32.mrb[0].mxu0
      %v1171 = vadd.f32 0.0, %v1170
      %v1172 = vpop.f32.mrb[0].mxu0
      %1173 = vmatprep.mubr.f32.mxu0 0.0
      %1174 = vmatmul.mubr.f32.gmra.mrb[0].mxu0 %v828
      %v1175 = vpop.f32.mrb[0].mxu0
      %v1176 = vadd.f32 0.0, %v1175
      %v1177 = vpop.f32.mrb[0].mxu0
      %1178 = vmatprep.mubr.f32.mxu0 0.0
      %1179 = vmatmul.mubr.f32.gmra.mrb[0].mxu0 %v831
      %v1180 = vpop.f32.mrb[0].mxu0
      %v1181 = vadd.f32 0.0, %v1180
      %v1182 = vpop.f32.mrb[0].mxu0
      %1183 = vmatprep.mubr.f32.mxu0 0.0
      %1184 = vmatmul.mubr.f32.gmra.mrb[0].mxu0 %v834
      %v1185 = vpop.f32.mrb[0].mxu0
      %v1186 = vadd.f32 0.0, %v1185
      %v1187 = vpop.f32.mrb[0].mxu0
      %1188 = vmatprep.mubr.f32.mxu0 0.0
      %1189 = vmatmul.mubr.f32.gmra.mrb[0].mxu0 %v837
      %v1190 = vpop.f32.mrb[0].mxu0
      %v1191 = vadd.f32 0.0, %v1190
      %v1192 = vpop.f32.mrb[0].mxu0
      %1193 = vmatprep.mubr.f32.mxu0 0.0
      %1194 = vmatmul.mubr.f32.gmra.mrb[0].mxu0 %v840
      %v1195 = vpop.f32.mrb[0].mxu0
      %v1196 = vadd.f32 0.0, %v1195
      %v1197 = vpop.f32.mrb[0].mxu0
      %1198 = vmatprep.mubr.f32.mxu0 0.0
      %1199 = vmatmul.mubr.f32.gmra.mrb[0].mxu0 %v843
      %v1200 = vpop.f32.mrb[0].mxu0
      %v1201 = vadd.f32 0.0, %v1200
      %v1202 = vpop.f32.mrb[0].mxu0
      %1203 = vmatprep.mubr.f32.mxu0 0.0
      %1204 = vmatmul.mubr.f32.gmra.mrb[0].mxu0 %v846
      %v1205 = vpop.f32.mrb[0].mxu0
      %v1206 = vadd.f32 0.0, %v1205
      %v1207 = vpop.f32.mrb[0].mxu0
      %1208 = vmatprep.mubr.f32.mxu0 0.0
      %1209 = vmatmul.mubr.f32.gmra.mrb[0].mxu0 %v849
      %v1210 = vpop.f32.mrb[0].mxu0
      %v1211 = vadd.f32 0.0, %v1210
      %v1212 = vpop.f32.mrb[0].mxu0
      %1213 = vmatprep.mubr.f32.mxu0 0.0
      %1214 = vmatmul.mubr.f32.gmra.mrb[0].mxu0 %v852
      %v1215 = vpop.f32.mrb[0].mxu0
      %v1216 = vadd.f32 0.0, %v1215
      %v1217 = vpop.f32.mrb[0].mxu0
      %1218 = vmatprep.mubr.f32.mxu0 0.0
      %1219 = vmatmul.mubr.f32.gmra.mrb[0].mxu0 %v855
      %v1220 = vpop.f32.mrb[0].mxu0
      %v1221 = vadd.f32 0.0, %v1220
      %v1222 = vpop.f32.mrb[0].mxu0
      %1223 = vmatprep.mubr.f32.mxu0 0.0
      %1224 = vmatmul.mubr.f32.gmra.mrb[0].mxu0 %v858
      %v1225 = vpop.f32.mrb[0].mxu0
      %v1226 = vadd.f32 0.0, %v1225
      %v1227 = vpop.f32.mrb[0].mxu0
      %1228 = vmatprep.mubr.f32.mxu0 0.0
      %1229 = vmatmul.mubr.f32.gmra.mrb[0].mxu0 %v861
      %v1230 = vpop.f32.mrb[0].mxu0
      %v1231 = vadd.f32 0.0, %v1230
      %v1232 = vpop.f32.mrb[0].mxu0
      %1233 = vmatprep.mubr.f32.mxu0 0.0
      %1234 = vmatmul.mubr.f32.gmra.mrb[0].mxu0 %v864
      %v1235 = vpop.f32.mrb[0].mxu0
      %v1236 = vadd.f32 0.0, %v1235
      %v1237 = vpop.f32.mrb[0].mxu0
      %1238 = vmatprep.mubr.f32.mxu0 0.0
      %1239 = vmatmul.mubr.f32.gmra.mrb[0].mxu0 %v867
      %v1240 = vpop.f32.mrb[0].mxu0
      %v1241 = vadd.f32 0.0, %v1240
      %v1242 = vpop.f32.mrb[0].mxu0
      %1243 = vmatprep.mubr.f32.mxu0 0.0
      %1244 = vmatmul.mubr.f32.gmra.mrb[0].mxu0 %v870
      %v1245 = vpop.f32.mrb[0].mxu0
      %v1246 = vadd.f32 0.0, %v1245
      %v1247 = vpop.f32.mrb[0].mxu0
      %1248 = vmatprep.mubr.f32.mxu0 0.0
      %1249 = vmatmul.mubr.f32.gmra.mrb[0].mxu0 %v873
      %v1250 = vpop.f32.mrb[0].mxu0
      %v1251 = vadd.f32 0.0, %v1250
      %v1252 = vpop.f32.mrb[0].mxu0
      %1253 = vmatprep.mubr.f32.mxu0 0.0
      %1254 = vmatmul.mubr.f32.gmra.mrb[0].mxu0 %v876
      %v1255 = vpop.f32.mrb[0].mxu0
      %v1256 = vadd.f32 0.0, %v1255
      %v1257 = vpop.f32.mrb[0].mxu0
      %1258 = vmatprep.mubr.f32.mxu0 0.0
      %1259 = vmatmul.mubr.f32.gmra.mrb[0].mxu0 %v879
      %v1260 = vpop.f32.mrb[0].mxu0
      %v1261 = vadd.f32 0.0, %v1260
      %v1262 = vpop.f32.mrb[0].mxu0
      %1263 = vmatprep.mubr.f32.mxu0 0.0
      %1264 = vmatmul.mubr.f32.gmra.mrb[0].mxu0 %v882
      %v1265 = vpop.f32.mrb[0].mxu0
      %v1266 = vadd.f32 0.0, %v1265
      %v1267 = vpop.f32.mrb[0].mxu0
      %1268 = vdwg.mxu0
      %v1269 = vpack.c.bf16 %v956, %v951
      %v1270 = vpack.c.bf16 %v966, %v961
      %v1271 = vpack.c.bf16 %v976, %v971
      %v1272 = vpack.c.bf16 %v986, %v981
      %v1273 = vpack.c.bf16 %v996, %v991
      %v1274 = vpack.c.bf16 %v1006, %v1001
      %v1275 = vpack.c.bf16 %v1016, %v1011
      %v1276 = vpack.c.bf16 %v1026, %v1021
      %v1277 = vpack.c.bf16 %v1036, %v1031
      %v1278 = vpack.c.bf16 %v1046, %v1041
      %v1279 = vpack.c.bf16 %v1056, %v1051
      %v1280 = vpack.c.bf16 %v1066, %v1061
      %v1281 = vpack.c.bf16 %v1076, %v1071
      %v1282 = vpack.c.bf16 %v1086, %v1081
      %v1283 = vpack.c.bf16 %v1096, %v1091
      %v1284 = vpack.c.bf16 %v1106, %v1101
      %v1285 = vpack.c.bf16 %v1116, %v1111
      %v1286 = vpack.c.bf16 %v1126, %v1121
      %v1287 = vpack.c.bf16 %v1136, %v1131
      %v1288 = vpack.c.bf16 %v1146, %v1141
      %v1289 = vpack.c.bf16 %v1156, %v1151
      %v1290 = vpack.c.bf16 %v1166, %v1161
      %v1291 = vpack.c.bf16 %v1176, %v1171
      %v1292 = vpack.c.bf16 %v1186, %v1181
      %v1293 = vpack.c.bf16 %v1196, %v1191
      %v1294 = vpack.c.bf16 %v1206, %v1201
      %v1295 = vpack.c.bf16 %v1216, %v1211
      %v1296 = vpack.c.bf16 %v1226, %v1221
      %v1297 = vpack.c.bf16 %v1236, %v1231
      %v1298 = vpack.c.bf16 %v1246, %v1241
      %v1299 = vpack.c.bf16 %v1256, %v1251
      %v1300 = vpack.c.bf16 %v1266, %v1261
      %v1301 = vld [vmem:[#allocation2] sm:$0xff]
      %v1302 = vld [vmem:[#allocation2 + $0x8] sm:$0xff]
      %v1303 = vld [vmem:[#allocation2 + $0x10] sm:$0xff]
      %v1304 = vld [vmem:[#allocation2 + $0x18] sm:$0xff]
      %v1305 = vld [vmem:[#allocation2 + $0x20] sm:$0xff]
      %v1306 = vld [vmem:[#allocation2 + $0x28] sm:$0xff]
      %v1307 = vld [vmem:[#allocation2 + $0x30] sm:$0xff]
      %v1308 = vld [vmem:[#allocation2 + $0x38] sm:$0xff]
      %v1309 = vld [vmem:[#allocation2 + $0x40] sm:$0xff]
      %v1310 = vld [vmem:[#allocation2 + $0x48] sm:$0xff]
      %v1311 = vld [vmem:[#allocation2 + $0x50] sm:$0xff]
      %v1312 = vld [vmem:[#allocation2 + $0x58] sm:$0xff]
      %v1313 = vld [vmem:[#allocation2 + $0x60] sm:$0xff]
      %v1314 = vld [vmem:[#allocation2 + $0x68] sm:$0xff]
      %v1315 = vld [vmem:[#allocation2 + $0x70] sm:$0xff]
      %v1316 = vld [vmem:[#allocation2 + $0x78] sm:$0xff]
      %v1317 = vld [vmem:[%s561] sm:$0xff]
      %v1318 = vld [vmem:[%s561 + $0x8] sm:$0xff]
      %v1319 = vld [vmem:[%s561 + $0x10] sm:$0xff]
      %v1320 = vld [vmem:[%s561 + $0x18] sm:$0xff]
      %v1321 = vld [vmem:[%s561 + $0x20] sm:$0xff]
      %v1322 = vld [vmem:[%s561 + $0x28] sm:$0xff]
      %v1323 = vld [vmem:[%s561 + $0x30] sm:$0xff]
      %v1324 = vld [vmem:[%s561 + $0x38] sm:$0xff]
      %v1325 = vld [vmem:[%s561 + $0x40] sm:$0xff]
      %v1326 = vld [vmem:[%s561 + $0x48] sm:$0xff]
      %v1327 = vld [vmem:[%s561 + $0x50] sm:$0xff]
      %v1328 = vld [vmem:[%s561 + $0x58] sm:$0xff]
      %v1329 = vld [vmem:[%s561 + $0x60] sm:$0xff]
      %v1330 = vld [vmem:[%s561 + $0x68] sm:$0xff]
      %v1331 = vld [vmem:[%s561 + $0x70] sm:$0xff]
      %v1332 = vld [vmem:[%s561 + $0x78] sm:$0xff]
      %v1333 = vld [vmem:[%s561 + $0x80] sm:$0xff]
      %v1334 = vld [vmem:[%s561 + $0x88] sm:$0xff]
      %v1335 = vld [vmem:[%s561 + $0x90] sm:$0xff]
      %v1336 = vld [vmem:[%s561 + $0x98] sm:$0xff]
      %v1337 = vld [vmem:[%s561 + $0xa0] sm:$0xff]
      %v1338 = vld [vmem:[%s561 + $0xa8] sm:$0xff]
      %v1339 = vld [vmem:[%s561 + $0xb0] sm:$0xff]
      %v1340 = vld [vmem:[%s561 + $0xb8] sm:$0xff]
      %v1341 = vld [vmem:[%s561 + $0xc0] sm:$0xff]
      %v1342 = vld [vmem:[%s561 + $0xc8] sm:$0xff]
      %v1343 = vld [vmem:[%s561 + $0xd0] sm:$0xff]
      %v1344 = vld [vmem:[%s561 + $0xd8] sm:$0xff]
      %v1345 = vld [vmem:[%s561 + $0xe0] sm:$0xff]
      %v1346 = vld [vmem:[%s561 + $0xe8] sm:$0xff]
      %v1347 = vld [vmem:[%s561 + $0xf0] sm:$0xff]
      %v1348 = vld [vmem:[%s561 + $0xf8] sm:$0xff]
      %v1381 = vunpack.c.l.b16 %v1317
      %v1382 = vunpack.c.h.b16 %v1317
      %v1383 = vunpack.c.l.b16 %v1318
      %v1384 = vunpack.c.h.b16 %v1318
      %v1385 = vunpack.c.l.b16 %v1319
      %v1386 = vunpack.c.h.b16 %v1319
      %v1387 = vunpack.c.l.b16 %v1320
      %v1388 = vunpack.c.h.b16 %v1320
      %v1389 = vunpack.c.l.b16 %v1321
      %v1390 = vunpack.c.h.b16 %v1321
      %v1391 = vunpack.c.l.b16 %v1322
      %v1392 = vunpack.c.h.b16 %v1322
      %v1393 = vunpack.c.l.b16 %v1323
      %v1394 = vunpack.c.h.b16 %v1323
      %v1395 = vunpack.c.l.b16 %v1324
      %v1396 = vunpack.c.h.b16 %v1324
      %v1397 = vunpack.c.l.b16 %v1325
      %v1398 = vunpack.c.h.b16 %v1325
      %v1399 = vunpack.c.l.b16 %v1326
      %v1400 = vunpack.c.h.b16 %v1326
      %v1401 = vunpack.c.l.b16 %v1327
      %v1402 = vunpack.c.h.b16 %v1327
      %v1403 = vunpack.c.l.b16 %v1328
      %v1404 = vunpack.c.h.b16 %v1328
      %v1405 = vunpack.c.l.b16 %v1329
      %v1406 = vunpack.c.h.b16 %v1329
      %v1407 = vunpack.c.l.b16 %v1330
      %v1408 = vunpack.c.h.b16 %v1330
      %v1409 = vunpack.c.l.b16 %v1331
      %v1410 = vunpack.c.h.b16 %v1331
      %v1411 = vunpack.c.l.b16 %v1332
      %v1412 = vunpack.c.h.b16 %v1332
      %v1413 = vunpack.c.l.b16 %v1333
      %v1414 = vunpack.c.h.b16 %v1333
      %v1415 = vunpack.c.l.b16 %v1334
      %v1416 = vunpack.c.h.b16 %v1334
      %v1417 = vunpack.c.l.b16 %v1335
      %v1418 = vunpack.c.h.b16 %v1335
      %v1419 = vunpack.c.l.b16 %v1336
      %v1420 = vunpack.c.h.b16 %v1336
      %v1421 = vunpack.c.l.b16 %v1337
      %v1422 = vunpack.c.h.b16 %v1337
      %v1423 = vunpack.c.l.b16 %v1338
      %v1424 = vunpack.c.h.b16 %v1338
      %v1425 = vunpack.c.l.b16 %v1339
      %v1426 = vunpack.c.h.b16 %v1339
      %v1427 = vunpack.c.l.b16 %v1340
      %v1428 = vunpack.c.h.b16 %v1340
      %v1429 = vunpack.c.l.b16 %v1341
      %v1430 = vunpack.c.h.b16 %v1341
      %v1431 = vunpack.c.l.b16 %v1342
      %v1432 = vunpack.c.h.b16 %v1342
      %v1433 = vunpack.c.l.b16 %v1343
      %v1434 = vunpack.c.h.b16 %v1343
      %v1435 = vunpack.c.l.b16 %v1344
      %v1436 = vunpack.c.h.b16 %v1344
      %v1437 = vunpack.c.l.b16 %v1345
      %v1438 = vunpack.c.h.b16 %v1345
      %v1439 = vunpack.c.l.b16 %v1346
      %v1440 = vunpack.c.h.b16 %v1346
      %v1441 = vunpack.c.l.b16 %v1347
      %v1442 = vunpack.c.h.b16 %v1347
      %v1443 = vunpack.c.l.b16 %v1348
      %v1444 = vunpack.c.h.b16 %v1348
      %v1445 = vpack.c.b16 %v1385, %v1381
      %v1446 = vpack.c.b16 %v1386, %v1382
      %v1447 = vpack.c.b16 %v1387, %v1383
      %v1448 = vpack.c.b16 %v1388, %v1384
      %v1449 = vpack.c.b16 %v1393, %v1389
      %v1450 = vpack.c.b16 %v1394, %v1390
      %v1451 = vpack.c.b16 %v1395, %v1391
      %v1452 = vpack.c.b16 %v1396, %v1392
      %v1453 = vpack.c.b16 %v1401, %v1397
      %v1454 = vpack.c.b16 %v1402, %v1398
      %v1455 = vpack.c.b16 %v1403, %v1399
      %v1456 = vpack.c.b16 %v1404, %v1400
      %v1457 = vpack.c.b16 %v1409, %v1405
      %v1458 = vpack.c.b16 %v1410, %v1406
      %v1459 = vpack.c.b16 %v1411, %v1407
      %v1460 = vpack.c.b16 %v1412, %v1408
      %v1461 = vpack.c.b16 %v1417, %v1413
      %v1462 = vpack.c.b16 %v1418, %v1414
      %v1463 = vpack.c.b16 %v1419, %v1415
      %v1464 = vpack.c.b16 %v1420, %v1416
      %v1465 = vpack.c.b16 %v1425, %v1421
      %v1466 = vpack.c.b16 %v1426, %v1422
      %v1467 = vpack.c.b16 %v1427, %v1423
      %v1468 = vpack.c.b16 %v1428, %v1424
      %v1469 = vpack.c.b16 %v1433, %v1429
      %v1470 = vpack.c.b16 %v1434, %v1430
      %v1471 = vpack.c.b16 %v1435, %v1431
      %v1472 = vpack.c.b16 %v1436, %v1432
      %v1473 = vpack.c.b16 %v1441, %v1437
      %v1474 = vpack.c.b16 %v1442, %v1438
      %v1475 = vpack.c.b16 %v1443, %v1439
      %v1476 = vpack.c.b16 %v1444, %v1440
      %1509 = vmatprep.subr.bf16.mxu0 0
      %1510 = vmatpush1.bf16.msra.mxu0 %v1269
      %1511 = vmatprep.subr.bf16.mxu0 0
      %1512 = vmatpush1.bf16.msra.mxu0 %v1270
      %1513 = vmatprep.subr.bf16.mxu0 0
      %1514 = vmatpush1.bf16.msra.mxu0 %v1271
      %1515 = vmatprep.subr.bf16.mxu0 0
      %1516 = vmatpush1.bf16.msra.mxu0 %v1272
      %1517 = vmatprep.subr.bf16.mxu0 0
      %1518 = vmatpush1.bf16.msra.mxu0 %v1273
      %1519 = vmatprep.subr.bf16.mxu0 0
      %1520 = vmatpush1.bf16.msra.mxu0 %v1274
      %1521 = vmatprep.subr.bf16.mxu0 0
      %1522 = vmatpush1.bf16.msra.mxu0 %v1275
      %1523 = vmatprep.subr.bf16.mxu0 0
      %1524 = vmatpush1.bf16.msra.mxu0 %v1276
      %1525 = vmatprep.subr.bf16.mxu0 0
      %1526 = vmatpush1.bf16.msra.mxu0 %v1277
      %1527 = vmatprep.subr.bf16.mxu0 0
      %1528 = vmatpush1.bf16.msra.mxu0 %v1278
      %1529 = vmatprep.subr.bf16.mxu0 0
      %1530 = vmatpush1.bf16.msra.mxu0 %v1279
      %1531 = vmatprep.subr.bf16.mxu0 0
      %1532 = vmatpush1.bf16.msra.mxu0 %v1280
      %1533 = vmatprep.subr.bf16.mxu0 0
      %1534 = vmatpush1.bf16.msra.mxu0 %v1281
      %1535 = vmatprep.subr.bf16.mxu0 0
      %1536 = vmatpush1.bf16.msra.mxu0 %v1282
      %1537 = vmatprep.subr.bf16.mxu0 0
      %1538 = vmatpush1.bf16.msra.mxu0 %v1283
      %1539 = vmatprep.subr.bf16.mxu0 0
      %1540 = vmatpush1.bf16.msra.mxu0 %v1284
      %1541 = vmatprep.mubr.bf16.mxu0 %v1446
      %1542 = vmatmul.mubr.bf16.gmra.mrb[0].mxu0 %v1445
      %v1543 = vpop.f32.mrb[0].mxu0
      %v1544 = vadd.f32 0.0, %v1543
      %v1545 = vpop.f32.mrb[0].mxu0
      %v1546 = vpop.f32.mrb[0].mxu0
      %v1547 = vadd.f32 0.0, %v1546
      %v1548 = vpop.f32.mrb[0].mxu0
      %1549 = vmatprep.mubr.bf16.mxu0 %v1450
      %1550 = vmatmul.mubr.bf16.gmra.mrb[0].mxu0 %v1449
      %v1551 = vpop.f32.mrb[0].mxu0
      %v1552 = vadd.f32 0.0, %v1551
      %v1553 = vpop.f32.mrb[0].mxu0
      %v1554 = vpop.f32.mrb[0].mxu0
      %v1555 = vadd.f32 0.0, %v1554
      %v1556 = vpop.f32.mrb[0].mxu0
      %1557 = vmatprep.mubr.bf16.mxu0 %v1454
      %1558 = vmatmul.mubr.bf16.gmra.mrb[0].mxu0 %v1453
      %v1559 = vpop.f32.mrb[0].mxu0
      %v1560 = vadd.f32 0.0, %v1559
      %v1561 = vpop.f32.mrb[0].mxu0
      %v1562 = vpop.f32.mrb[0].mxu0
      %v1563 = vadd.f32 0.0, %v1562
      %v1564 = vpop.f32.mrb[0].mxu0
      %1565 = vmatprep.mubr.bf16.mxu0 %v1458
      %1566 = vmatmul.mubr.bf16.gmra.mrb[0].mxu0 %v1457
      %v1567 = vpop.f32.mrb[0].mxu0
      %v1568 = vadd.f32 0.0, %v1567
      %v1569 = vpop.f32.mrb[0].mxu0
      %v1570 = vpop.f32.mrb[0].mxu0
      %v1571 = vadd.f32 0.0, %v1570
      %v1572 = vpop.f32.mrb[0].mxu0
      %1573 = vmatprep.mubr.bf16.mxu0 %v1462
      %1574 = vmatmul.mubr.bf16.gmra.mrb[0].mxu0 %v1461
      %v1575 = vpop.f32.mrb[0].mxu0
      %v1576 = vadd.f32 0.0, %v1575
      %v1577 = vpop.f32.mrb[0].mxu0
      %v1578 = vpop.f32.mrb[0].mxu0
      %v1579 = vadd.f32 0.0, %v1578
      %v1580 = vpop.f32.mrb[0].mxu0
      %1581 = vmatprep.mubr.bf16.mxu0 %v1466
      %1582 = vmatmul.mubr.bf16.gmra.mrb[0].mxu0 %v1465
      %v1583 = vpop.f32.mrb[0].mxu0
      %v1584 = vadd.f32 0.0, %v1583
      %v1585 = vpop.f32.mrb[0].mxu0
      %v1586 = vpop.f32.mrb[0].mxu0
      %v1587 = vadd.f32 0.0, %v1586
      %v1588 = vpop.f32.mrb[0].mxu0
      %1589 = vmatprep.mubr.bf16.mxu0 %v1470
      %1590 = vmatmul.mubr.bf16.gmra.mrb[0].mxu0 %v1469
      %v1591 = vpop.f32.mrb[0].mxu0
      %v1592 = vadd.f32 0.0, %v1591
      %v1593 = vpop.f32.mrb[0].mxu0
      %v1594 = vpop.f32.mrb[0].mxu0
      %v1595 = vadd.f32 0.0, %v1594
      %v1596 = vpop.f32.mrb[0].mxu0
      %1597 = vmatprep.mubr.bf16.mxu0 %v1474
      %1598 = vmatmul.mubr.bf16.gmra.mrb[0].mxu0 %v1473
      %v1599 = vpop.f32.mrb[0].mxu0
      %v1600 = vadd.f32 0.0, %v1599
      %v1601 = vpop.f32.mrb[0].mxu0
      %v1602 = vpop.f32.mrb[0].mxu0
      %v1603 = vadd.f32 0.0, %v1602
      %v1604 = vpop.f32.mrb[0].mxu0
      %1605 = vdwg.mxu0
      %1606 = vmatprep.subr.bf16.mxu0 0
      %1607 = vmatpush1.bf16.msra.mxu0 %v1285
      %1608 = vmatprep.subr.bf16.mxu0 0
      %1609 = vmatpush1.bf16.msra.mxu0 %v1286
      %1610 = vmatprep.subr.bf16.mxu0 0
      %1611 = vmatpush1.bf16.msra.mxu0 %v1287
      %1612 = vmatprep.subr.bf16.mxu0 0
      %1613 = vmatpush1.bf16.msra.mxu0 %v1288
      %1614 = vmatprep.subr.bf16.mxu0 0
      %1615 = vmatpush1.bf16.msra.mxu0 %v1289
      %1616 = vmatprep.subr.bf16.mxu0 0
      %1617 = vmatpush1.bf16.msra.mxu0 %v1290
      %1618 = vmatprep.subr.bf16.mxu0 0
      %1619 = vmatpush1.bf16.msra.mxu0 %v1291
      %1620 = vmatprep.subr.bf16.mxu0 0
      %1621 = vmatpush1.bf16.msra.mxu0 %v1292
      %1622 = vmatprep.subr.bf16.mxu0 0
      %1623 = vmatpush1.bf16.msra.mxu0 %v1293
      %1624 = vmatprep.subr.bf16.mxu0 0
      %1625 = vmatpush1.bf16.msra.mxu0 %v1294
      %1626 = vmatprep.subr.bf16.mxu0 0
      %1627 = vmatpush1.bf16.msra.mxu0 %v1295
      %1628 = vmatprep.subr.bf16.mxu0 0
      %1629 = vmatpush1.bf16.msra.mxu0 %v1296
      %1630 = vmatprep.subr.bf16.mxu0 0
      %1631 = vmatpush1.bf16.msra.mxu0 %v1297
      %1632 = vmatprep.subr.bf16.mxu0 0
      %1633 = vmatpush1.bf16.msra.mxu0 %v1298
      %1634 = vmatprep.subr.bf16.mxu0 0
      %1635 = vmatpush1.bf16.msra.mxu0 %v1299
      %1636 = vmatprep.subr.bf16.mxu0 0
      %1637 = vmatpush1.bf16.msra.mxu0 %v1300
      %1638 = vmatprep.mubr.bf16.mxu0 %v1448
      %1639 = vmatmul.mubr.bf16.gmra.mrb[0].mxu0 %v1447
      %v1640 = vpop.f32.mrb[0].mxu0
      %v1641 = vadd.f32 %v1544, %v1640
      %v1642 = vpop.f32.mrb[0].mxu0
      %v1643 = vpop.f32.mrb[0].mxu0
      %v1644 = vadd.f32 %v1547, %v1643
      %v1645 = vpop.f32.mrb[0].mxu0
      %1646 = vmatprep.mubr.bf16.mxu0 %v1452
      %1647 = vmatmul.mubr.bf16.gmra.mrb[0].mxu0 %v1451
      %v1648 = vpop.f32.mrb[0].mxu0
      %v1649 = vadd.f32 %v1552, %v1648
      %v1650 = vpop.f32.mrb[0].mxu0
      %v1651 = vpop.f32.mrb[0].mxu0
      %v1652 = vadd.f32 %v1555, %v1651
      %v1653 = vpop.f32.mrb[0].mxu0
      %1654 = vmatprep.mubr.bf16.mxu0 %v1456
      %1655 = vmatmul.mubr.bf16.gmra.mrb[0].mxu0 %v1455
      %v1656 = vpop.f32.mrb[0].mxu0
      %v1657 = vadd.f32 %v1560, %v1656
      %v1658 = vpop.f32.mrb[0].mxu0
      %v1659 = vpop.f32.mrb[0].mxu0
      %v1660 = vadd.f32 %v1563, %v1659
      %v1661 = vpop.f32.mrb[0].mxu0
      %1662 = vmatprep.mubr.bf16.mxu0 %v1460
      %1663 = vmatmul.mubr.bf16.gmra.mrb[0].mxu0 %v1459
      %v1664 = vpop.f32.mrb[0].mxu0
      %v1665 = vadd.f32 %v1568, %v1664
      %v1666 = vpop.f32.mrb[0].mxu0
      %v1667 = vpop.f32.mrb[0].mxu0
      %v1668 = vadd.f32 %v1571, %v1667
      %v1669 = vpop.f32.mrb[0].mxu0
      %1670 = vmatprep.mubr.bf16.mxu0 %v1464
      %1671 = vmatmul.mubr.bf16.gmra.mrb[0].mxu0 %v1463
      %v1672 = vpop.f32.mrb[0].mxu0
      %v1673 = vadd.f32 %v1576, %v1672
      %v1674 = vpop.f32.mrb[0].mxu0
      %v1675 = vpop.f32.mrb[0].mxu0
      %v1676 = vadd.f32 %v1579, %v1675
      %v1677 = vpop.f32.mrb[0].mxu0
      %1678 = vmatprep.mubr.bf16.mxu0 %v1468
      %1679 = vmatmul.mubr.bf16.gmra.mrb[0].mxu0 %v1467
      %v1680 = vpop.f32.mrb[0].mxu0
      %v1681 = vadd.f32 %v1584, %v1680
      %v1682 = vpop.f32.mrb[0].mxu0
      %v1683 = vpop.f32.mrb[0].mxu0
      %v1684 = vadd.f32 %v1587, %v1683
      %v1685 = vpop.f32.mrb[0].mxu0
      %1686 = vmatprep.mubr.bf16.mxu0 %v1472
      %1687 = vmatmul.mubr.bf16.gmra.mrb[0].mxu0 %v1471
      %v1688 = vpop.f32.mrb[0].mxu0
      %v1689 = vadd.f32 %v1592, %v1688
      %v1690 = vpop.f32.mrb[0].mxu0
      %v1691 = vpop.f32.mrb[0].mxu0
      %v1692 = vadd.f32 %v1595, %v1691
      %v1693 = vpop.f32.mrb[0].mxu0
      %1694 = vmatprep.mubr.bf16.mxu0 %v1476
      %1695 = vmatmul.mubr.bf16.gmra.mrb[0].mxu0 %v1475
      %v1696 = vpop.f32.mrb[0].mxu0
      %v1697 = vadd.f32 %v1600, %v1696
      %v1698 = vpop.f32.mrb[0].mxu0
      %v1699 = vpop.f32.mrb[0].mxu0
      %v1700 = vadd.f32 %v1603, %v1699
      %v1701 = vpop.f32.mrb[0].mxu0
      %1702 = vdwg.mxu0
      %v1703 = vadd.f32 %v1301, %v1641
      %v1704 = vadd.f32 %v1302, %v1644
      %v1705 = vadd.f32 %v1303, %v1649
      %v1706 = vadd.f32 %v1304, %v1652
      %v1707 = vadd.f32 %v1305, %v1657
      %v1708 = vadd.f32 %v1306, %v1660
      %v1709 = vadd.f32 %v1307, %v1665
      %v1710 = vadd.f32 %v1308, %v1668
      %v1711 = vadd.f32 %v1309, %v1673
      %v1712 = vadd.f32 %v1310, %v1676
      %v1713 = vadd.f32 %v1311, %v1681
      %v1714 = vadd.f32 %v1312, %v1684
      %v1715 = vadd.f32 %v1313, %v1689
      %v1716 = vadd.f32 %v1314, %v1692
      %v1717 = vadd.f32 %v1315, %v1697
      %v1718 = vadd.f32 %v1316, %v1700
      %1719 = vst [vmem:[#allocation2] sm:$0xff] %v1703
      %1720 = vst [vmem:[#allocation2 + $0x8] sm:$0xff] %v1704
      %1721 = vst [vmem:[#allocation2 + $0x10] sm:$0xff] %v1705
      %1722 = vst [vmem:[#allocation2 + $0x18] sm:$0xff] %v1706
      %1723 = vst [vmem:[#allocation2 + $0x20] sm:$0xff] %v1707
      %1724 = vst [vmem:[#allocation2 + $0x28] sm:$0xff] %v1708
      %1725 = vst [vmem:[#allocation2 + $0x30] sm:$0xff] %v1709
      %1726 = vst [vmem:[#allocation2 + $0x38] sm:$0xff] %v1710
      %1727 = vst [vmem:[#allocation2 + $0x40] sm:$0xff] %v1711
      %1728 = vst [vmem:[#allocation2 + $0x48] sm:$0xff] %v1712
      %1729 = vst [vmem:[#allocation2 + $0x50] sm:$0xff] %v1713
      %1730 = vst [vmem:[#allocation2 + $0x58] sm:$0xff] %v1714
      %1731 = vst [vmem:[#allocation2 + $0x60] sm:$0xff] %v1715
      %1732 = vst [vmem:[#allocation2 + $0x68] sm:$0xff] %v1716
      %1733 = vst [vmem:[#allocation2 + $0x70] sm:$0xff] %v1717
      %1734 = vst [vmem:[#allocation2 + $0x78] sm:$0xff] %v1718
      %v1735 = vld [vmem:[#allocation3] sm:$0xff]
      %v1736 = vld [vmem:[#allocation3 + $0x8] sm:$0xff]
      %v1737 = vld [vmem:[#allocation3 + $0x10] sm:$0xff]
      %v1738 = vld [vmem:[#allocation3 + $0x18] sm:$0xff]
      %v1739 = vld [vmem:[#allocation3 + $0x20] sm:$0xff]
      %v1740 = vld [vmem:[#allocation3 + $0x28] sm:$0xff]
      %v1741 = vld [vmem:[#allocation3 + $0x30] sm:$0xff]
      %v1742 = vld [vmem:[#allocation3 + $0x38] sm:$0xff]
      %v1743 = vld [vmem:[#allocation3 + $0x40] sm:$0xff]
      %v1744 = vld [vmem:[#allocation3 + $0x48] sm:$0xff]
      %v1745 = vld [vmem:[#allocation3 + $0x50] sm:$0xff]
      %v1746 = vld [vmem:[#allocation3 + $0x58] sm:$0xff]
      %v1747 = vld [vmem:[#allocation3 + $0x60] sm:$0xff]
      %v1748 = vld [vmem:[#allocation3 + $0x68] sm:$0xff]
      %v1749 = vld [vmem:[#allocation3 + $0x70] sm:$0xff]
      %v1750 = vld [vmem:[#allocation3 + $0x78] sm:$0xff]
      %v1751 = vld [vmem:[%s573] sm:$0xff]
      %v1752 = vld [vmem:[%s573 + $0x8] sm:$0xff]
      %v1753 = vld [vmem:[%s573 + $0x10] sm:$0xff]
      %v1754 = vld [vmem:[%s573 + $0x18] sm:$0xff]
      %v1755 = vld [vmem:[%s573 + $0x20] sm:$0xff]
      %v1756 = vld [vmem:[%s573 + $0x28] sm:$0xff]
      %v1757 = vld [vmem:[%s573 + $0x30] sm:$0xff]
      %v1758 = vld [vmem:[%s573 + $0x38] sm:$0xff]
      %v1759 = vld [vmem:[%s573 + $0x40] sm:$0xff]
      %v1760 = vld [vmem:[%s573 + $0x48] sm:$0xff]
      %v1761 = vld [vmem:[%s573 + $0x50] sm:$0xff]
      %v1762 = vld [vmem:[%s573 + $0x58] sm:$0xff]
      %v1763 = vld [vmem:[%s573 + $0x60] sm:$0xff]
      %v1764 = vld [vmem:[%s573 + $0x68] sm:$0xff]
      %v1765 = vld [vmem:[%s573 + $0x70] sm:$0xff]
      %v1766 = vld [vmem:[%s573 + $0x78] sm:$0xff]
      %v1767 = vld [vmem:[%s573 + $0x80] sm:$0xff]
      %v1768 = vld [vmem:[%s573 + $0x88] sm:$0xff]
      %v1769 = vld [vmem:[%s573 + $0x90] sm:$0xff]
      %v1770 = vld [vmem:[%s573 + $0x98] sm:$0xff]
      %v1771 = vld [vmem:[%s573 + $0xa0] sm:$0xff]
      %v1772 = vld [vmem:[%s573 + $0xa8] sm:$0xff]
      %v1773 = vld [vmem:[%s573 + $0xb0] sm:$0xff]
      %v1774 = vld [vmem:[%s573 + $0xb8] sm:$0xff]
      %v1775 = vld [vmem:[%s573 + $0xc0] sm:$0xff]
      %v1776 = vld [vmem:[%s573 + $0xc8] sm:$0xff]
      %v1777 = vld [vmem:[%s573 + $0xd0] sm:$0xff]
      %v1778 = vld [vmem:[%s573 + $0xd8] sm:$0xff]
      %v1779 = vld [vmem:[%s573 + $0xe0] sm:$0xff]
      %v1780 = vld [vmem:[%s573 + $0xe8] sm:$0xff]
      %v1781 = vld [vmem:[%s573 + $0xf0] sm:$0xff]
      %v1782 = vld [vmem:[%s573 + $0xf8] sm:$0xff]
      %v1815 = vunpack.c.l.b16 %v1751
      %v1816 = vunpack.c.h.b16 %v1751
      %v1817 = vunpack.c.l.b16 %v1752
      %v1818 = vunpack.c.h.b16 %v1752
      %v1819 = vunpack.c.l.b16 %v1753
      %v1820 = vunpack.c.h.b16 %v1753
      %v1821 = vunpack.c.l.b16 %v1754
      %v1822 = vunpack.c.h.b16 %v1754
      %v1823 = vunpack.c.l.b16 %v1755
      %v1824 = vunpack.c.h.b16 %v1755
      %v1825 = vunpack.c.l.b16 %v1756
      %v1826 = vunpack.c.h.b16 %v1756
      %v1827 = vunpack.c.l.b16 %v1757
      %v1828 = vunpack.c.h.b16 %v1757
      %v1829 = vunpack.c.l.b16 %v1758
      %v1830 = vunpack.c.h.b16 %v1758
      %v1831 = vunpack.c.l.b16 %v1759
      %v1832 = vunpack.c.h.b16 %v1759
      %v1833 = vunpack.c.l.b16 %v1760
      %v1834 = vunpack.c.h.b16 %v1760
      %v1835 = vunpack.c.l.b16 %v1761
      %v1836 = vunpack.c.h.b16 %v1761
      %v1837 = vunpack.c.l.b16 %v1762
      %v1838 = vunpack.c.h.b16 %v1762
      %v1839 = vunpack.c.l.b16 %v1763
      %v1840 = vunpack.c.h.b16 %v1763
      %v1841 = vunpack.c.l.b16 %v1764
      %v1842 = vunpack.c.h.b16 %v1764
      %v1843 = vunpack.c.l.b16 %v1765
      %v1844 = vunpack.c.h.b16 %v1765
      %v1845 = vunpack.c.l.b16 %v1766
      %v1846 = vunpack.c.h.b16 %v1766
      %v1847 = vunpack.c.l.b16 %v1767
      %v1848 = vunpack.c.h.b16 %v1767
      %v1849 = vunpack.c.l.b16 %v1768
      %v1850 = vunpack.c.h.b16 %v1768
      %v1851 = vunpack.c.l.b16 %v1769
      %v1852 = vunpack.c.h.b16 %v1769
      %v1853 = vunpack.c.l.b16 %v1770
      %v1854 = vunpack.c.h.b16 %v1770
      %v1855 = vunpack.c.l.b16 %v1771
      %v1856 = vunpack.c.h.b16 %v1771
      %v1857 = vunpack.c.l.b16 %v1772
      %v1858 = vunpack.c.h.b16 %v1772
      %v1859 = vunpack.c.l.b16 %v1773
      %v1860 = vunpack.c.h.b16 %v1773
      %v1861 = vunpack.c.l.b16 %v1774
      %v1862 = vunpack.c.h.b16 %v1774
      %v1863 = vunpack.c.l.b16 %v1775
      %v1864 = vunpack.c.h.b16 %v1775
      %v1865 = vunpack.c.l.b16 %v1776
      %v1866 = vunpack.c.h.b16 %v1776
      %v1867 = vunpack.c.l.b16 %v1777
      %v1868 = vunpack.c.h.b16 %v1777
      %v1869 = vunpack.c.l.b16 %v1778
      %v1870 = vunpack.c.h.b16 %v1778
      %v1871 = vunpack.c.l.b16 %v1779
      %v1872 = vunpack.c.h.b16 %v1779
      %v1873 = vunpack.c.l.b16 %v1780
      %v1874 = vunpack.c.h.b16 %v1780
      %v1875 = vunpack.c.l.b16 %v1781
      %v1876 = vunpack.c.h.b16 %v1781
      %v1877 = vunpack.c.l.b16 %v1782
      %v1878 = vunpack.c.h.b16 %v1782
      %v1879 = vpack.c.b16 %v1819, %v1815
      %v1880 = vpack.c.b16 %v1820, %v1816
      %v1881 = vpack.c.b16 %v1821, %v1817
      %v1882 = vpack.c.b16 %v1822, %v1818
      %v1883 = vpack.c.b16 %v1827, %v1823
      %v1884 = vpack.c.b16 %v1828, %v1824
      %v1885 = vpack.c.b16 %v1829, %v1825
      %v1886 = vpack.c.b16 %v1830, %v1826
      %v1887 = vpack.c.b16 %v1835, %v1831
      %v1888 = vpack.c.b16 %v1836, %v1832
      %v1889 = vpack.c.b16 %v1837, %v1833
      %v1890 = vpack.c.b16 %v1838, %v1834
      %v1891 = vpack.c.b16 %v1843, %v1839
      %v1892 = vpack.c.b16 %v1844, %v1840
      %v1893 = vpack.c.b16 %v1845, %v1841
      %v1894 = vpack.c.b16 %v1846, %v1842
      %v1895 = vpack.c.b16 %v1851, %v1847
      %v1896 = vpack.c.b16 %v1852, %v1848
      %v1897 = vpack.c.b16 %v1853, %v1849
      %v1898 = vpack.c.b16 %v1854, %v1850
      %v1899 = vpack.c.b16 %v1859, %v1855
      %v1900 = vpack.c.b16 %v1860, %v1856
      %v1901 = vpack.c.b16 %v1861, %v1857
      %v1902 = vpack.c.b16 %v1862, %v1858
      %v1903 = vpack.c.b16 %v1867, %v1863
      %v1904 = vpack.c.b16 %v1868, %v1864
      %v1905 = vpack.c.b16 %v1869, %v1865
      %v1906 = vpack.c.b16 %v1870, %v1866
      %v1907 = vpack.c.b16 %v1875, %v1871
      %v1908 = vpack.c.b16 %v1876, %v1872
      %v1909 = vpack.c.b16 %v1877, %v1873
      %v1910 = vpack.c.b16 %v1878, %v1874
      %1943 = vmatprep.subr.bf16.mxu0 0
      %1944 = vmatpush1.bf16.msra.mxu0 %v1269
      %1945 = vmatprep.subr.bf16.mxu0 0
      %1946 = vmatpush1.bf16.msra.mxu0 %v1270
      %1947 = vmatprep.subr.bf16.mxu0 0
      %1948 = vmatpush1.bf16.msra.mxu0 %v1271
      %1949 = vmatprep.subr.bf16.mxu0 0
      %1950 = vmatpush1.bf16.msra.mxu0 %v1272
      %1951 = vmatprep.subr.bf16.mxu0 0
      %1952 = vmatpush1.bf16.msra.mxu0 %v1273
      %1953 = vmatprep.subr.bf16.mxu0 0
      %1954 = vmatpush1.bf16.msra.mxu0 %v1274
      %1955 = vmatprep.subr.bf16.mxu0 0
      %1956 = vmatpush1.bf16.msra.mxu0 %v1275
      %1957 = vmatprep.subr.bf16.mxu0 0
      %1958 = vmatpush1.bf16.msra.mxu0 %v1276
      %1959 = vmatprep.subr.bf16.mxu0 0
      %1960 = vmatpush1.bf16.msra.mxu0 %v1277
      %1961 = vmatprep.subr.bf16.mxu0 0
      %1962 = vmatpush1.bf16.msra.mxu0 %v1278
      %1963 = vmatprep.subr.bf16.mxu0 0
      %1964 = vmatpush1.bf16.msra.mxu0 %v1279
      %1965 = vmatprep.subr.bf16.mxu0 0
      %1966 = vmatpush1.bf16.msra.mxu0 %v1280
      %1967 = vmatprep.subr.bf16.mxu0 0
      %1968 = vmatpush1.bf16.msra.mxu0 %v1281
      %1969 = vmatprep.subr.bf16.mxu0 0
      %1970 = vmatpush1.bf16.msra.mxu0 %v1282
      %1971 = vmatprep.subr.bf16.mxu0 0
      %1972 = vmatpush1.bf16.msra.mxu0 %v1283
      %1973 = vmatprep.subr.bf16.mxu0 0
      %1974 = vmatpush1.bf16.msra.mxu0 %v1284
      %1975 = vmatprep.mubr.bf16.mxu0 %v1880
      %1976 = vmatmul.mubr.bf16.gmra.mrb[0].mxu0 %v1879
      %v1977 = vpop.f32.mrb[0].mxu0
      %v1978 = vadd.f32 0.0, %v1977
      %v1979 = vpop.f32.mrb[0].mxu0
      %v1980 = vpop.f32.mrb[0].mxu0
      %v1981 = vadd.f32 0.0, %v1980
      %v1982 = vpop.f32.mrb[0].mxu0
      %1983 = vmatprep.mubr.bf16.mxu0 %v1884
      %1984 = vmatmul.mubr.bf16.gmra.mrb[0].mxu0 %v1883
      %v1985 = vpop.f32.mrb[0].mxu0
      %v1986 = vadd.f32 0.0, %v1985
      %v1987 = vpop.f32.mrb[0].mxu0
      %v1988 = vpop.f32.mrb[0].mxu0
      %v1989 = vadd.f32 0.0, %v1988
      %v1990 = vpop.f32.mrb[0].mxu0
      %1991 = vmatprep.mubr.bf16.mxu0 %v1888
      %1992 = vmatmul.mubr.bf16.gmra.mrb[0].mxu0 %v1887
      %v1993 = vpop.f32.mrb[0].mxu0
      %v1994 = vadd.f32 0.0, %v1993
      %v1995 = vpop.f32.mrb[0].mxu0
      %v1996 = vpop.f32.mrb[0].mxu0
      %v1997 = vadd.f32 0.0, %v1996
      %v1998 = vpop.f32.mrb[0].mxu0
      %1999 = vmatprep.mubr.bf16.mxu0 %v1892
      %2000 = vmatmul.mubr.bf16.gmra.mrb[0].mxu0 %v1891
      %v2001 = vpop.f32.mrb[0].mxu0
      %v2002 = vadd.f32 0.0, %v2001
      %v2003 = vpop.f32.mrb[0].mxu0
      %v2004 = vpop.f32.mrb[0].mxu0
      %v2005 = vadd.f32 0.0, %v2004
      %v2006 = vpop.f32.mrb[0].mxu0
      %2007 = vmatprep.mubr.bf16.mxu0 %v1896
      %2008 = vmatmul.mubr.bf16.gmra.mrb[0].mxu0 %v1895
      %v2009 = vpop.f32.mrb[0].mxu0
      %v2010 = vadd.f32 0.0, %v2009
      %v2011 = vpop.f32.mrb[0].mxu0
      %v2012 = vpop.f32.mrb[0].mxu0
      %v2013 = vadd.f32 0.0, %v2012
      %v2014 = vpop.f32.mrb[0].mxu0
      %2015 = vmatprep.mubr.bf16.mxu0 %v1900
      %2016 = vmatmul.mubr.bf16.gmra.mrb[0].mxu0 %v1899
      %v2017 = vpop.f32.mrb[0].mxu0
      %v2018 = vadd.f32 0.0, %v2017
      %v2019 = vpop.f32.mrb[0].mxu0
      %v2020 = vpop.f32.mrb[0].mxu0
      %v2021 = vadd.f32 0.0, %v2020
      %v2022 = vpop.f32.mrb[0].mxu0
      %2023 = vmatprep.mubr.bf16.mxu0 %v1904
      %2024 = vmatmul.mubr.bf16.gmra.mrb[0].mxu0 %v1903
      %v2025 = vpop.f32.mrb[0].mxu0
      %v2026 = vadd.f32 0.0, %v2025
      %v2027 = vpop.f32.mrb[0].mxu0
      %v2028 = vpop.f32.mrb[0].mxu0
      %v2029 = vadd.f32 0.0, %v2028
      %v2030 = vpop.f32.mrb[0].mxu0
      %2031 = vmatprep.mubr.bf16.mxu0 %v1908
      %2032 = vmatmul.mubr.bf16.gmra.mrb[0].mxu0 %v1907
      %v2033 = vpop.f32.mrb[0].mxu0
      %v2034 = vadd.f32 0.0, %v2033
      %v2035 = vpop.f32.mrb[0].mxu0
      %v2036 = vpop.f32.mrb[0].mxu0
      %v2037 = vadd.f32 0.0, %v2036
      %v2038 = vpop.f32.mrb[0].mxu0
      %2039 = vdwg.mxu0
      %2040 = vmatprep.subr.bf16.mxu0 0
      %2041 = vmatpush1.bf16.msra.mxu0 %v1285
      %2042 = vmatprep.subr.bf16.mxu0 0
      %2043 = vmatpush1.bf16.msra.mxu0 %v1286
      %2044 = vmatprep.subr.bf16.mxu0 0
      %2045 = vmatpush1.bf16.msra.mxu0 %v1287
      %2046 = vmatprep.subr.bf16.mxu0 0
      %2047 = vmatpush1.bf16.msra.mxu0 %v1288
      %2048 = vmatprep.subr.bf16.mxu0 0
      %2049 = vmatpush1.bf16.msra.mxu0 %v1289
      %2050 = vmatprep.subr.bf16.mxu0 0
      %2051 = vmatpush1.bf16.msra.mxu0 %v1290
      %2052 = vmatprep.subr.bf16.mxu0 0
      %2053 = vmatpush1.bf16.msra.mxu0 %v1291
      %2054 = vmatprep.subr.bf16.mxu0 0
      %2055 = vmatpush1.bf16.msra.mxu0 %v1292
      %2056 = vmatprep.subr.bf16.mxu0 0
      %2057 = vmatpush1.bf16.msra.mxu0 %v1293
      %2058 = vmatprep.subr.bf16.mxu0 0
      %2059 = vmatpush1.bf16.msra.mxu0 %v1294
      %2060 = vmatprep.subr.bf16.mxu0 0
      %2061 = vmatpush1.bf16.msra.mxu0 %v1295
      %2062 = vmatprep.subr.bf16.mxu0 0
      %2063 = vmatpush1.bf16.msra.mxu0 %v1296
      %2064 = vmatprep.subr.bf16.mxu0 0
      %2065 = vmatpush1.bf16.msra.mxu0 %v1297
      %2066 = vmatprep.subr.bf16.mxu0 0
      %2067 = vmatpush1.bf16.msra.mxu0 %v1298
      %2068 = vmatprep.subr.bf16.mxu0 0
      %2069 = vmatpush1.bf16.msra.mxu0 %v1299
      %2070 = vmatprep.subr.bf16.mxu0 0
      %2071 = vmatpush1.bf16.msra.mxu0 %v1300
      %2072 = vmatprep.mubr.bf16.mxu0 %v1882
      %2073 = vmatmul.mubr.bf16.gmra.mrb[0].mxu0 %v1881
      %v2074 = vpop.f32.mrb[0].mxu0
      %v2075 = vadd.f32 %v1978, %v2074
      %v2076 = vpop.f32.mrb[0].mxu0
      %v2077 = vpop.f32.mrb[0].mxu0
      %v2078 = vadd.f32 %v1981, %v2077
      %v2079 = vpop.f32.mrb[0].mxu0
      %2080 = vmatprep.mubr.bf16.mxu0 %v1886
      %2081 = vmatmul.mubr.bf16.gmra.mrb[0].mxu0 %v1885
      %v2082 = vpop.f32.mrb[0].mxu0
      %v2083 = vadd.f32 %v1986, %v2082
      %v2084 = vpop.f32.mrb[0].mxu0
      %v2085 = vpop.f32.mrb[0].mxu0
      %v2086 = vadd.f32 %v1989, %v2085
      %v2087 = vpop.f32.mrb[0].mxu0
      %2088 = vmatprep.mubr.bf16.mxu0 %v1890
      %2089 = vmatmul.mubr.bf16.gmra.mrb[0].mxu0 %v1889
      %v2090 = vpop.f32.mrb[0].mxu0
      %v2091 = vadd.f32 %v1994, %v2090
      %v2092 = vpop.f32.mrb[0].mxu0
      %v2093 = vpop.f32.mrb[0].mxu0
      %v2094 = vadd.f32 %v1997, %v2093
      %v2095 = vpop.f32.mrb[0].mxu0
      %2096 = vmatprep.mubr.bf16.mxu0 %v1894
      %2097 = vmatmul.mubr.bf16.gmra.mrb[0].mxu0 %v1893
      %v2098 = vpop.f32.mrb[0].mxu0
      %v2099 = vadd.f32 %v2002, %v2098
      %v2100 = vpop.f32.mrb[0].mxu0
      %v2101 = vpop.f32.mrb[0].mxu0
      %v2102 = vadd.f32 %v2005, %v2101
      %v2103 = vpop.f32.mrb[0].mxu0
      %2104 = vmatprep.mubr.bf16.mxu0 %v1898
      %2105 = vmatmul.mubr.bf16.gmra.mrb[0].mxu0 %v1897
      %v2106 = vpop.f32.mrb[0].mxu0
      %v2107 = vadd.f32 %v2010, %v2106
      %v2108 = vpop.f32.mrb[0].mxu0
      %v2109 = vpop.f32.mrb[0].mxu0
      %v2110 = vadd.f32 %v2013, %v2109
      %v2111 = vpop.f32.mrb[0].mxu0
      %2112 = vmatprep.mubr.bf16.mxu0 %v1902
      %2113 = vmatmul.mubr.bf16.gmra.mrb[0].mxu0 %v1901
      %v2114 = vpop.f32.mrb[0].mxu0
      %v2115 = vadd.f32 %v2018, %v2114
      %v2116 = vpop.f32.mrb[0].mxu0
      %v2117 = vpop.f32.mrb[0].mxu0
      %v2118 = vadd.f32 %v2021, %v2117
      %v2119 = vpop.f32.mrb[0].mxu0
      %2120 = vmatprep.mubr.bf16.mxu0 %v1906
      %2121 = vmatmul.mubr.bf16.gmra.mrb[0].mxu0 %v1905
      %v2122 = vpop.f32.mrb[0].mxu0
      %v2123 = vadd.f32 %v2026, %v2122
      %v2124 = vpop.f32.mrb[0].mxu0
      %v2125 = vpop.f32.mrb[0].mxu0
      %v2126 = vadd.f32 %v2029, %v2125
      %v2127 = vpop.f32.mrb[0].mxu0
      %2128 = vmatprep.mubr.bf16.mxu0 %v1910
      %2129 = vmatmul.mubr.bf16.gmra.mrb[0].mxu0 %v1909
      %v2130 = vpop.f32.mrb[0].mxu0
      %v2131 = vadd.f32 %v2034, %v2130
      %v2132 = vpop.f32.mrb[0].mxu0
      %v2133 = vpop.f32.mrb[0].mxu0
      %v2134 = vadd.f32 %v2037, %v2133
      %v2135 = vpop.f32.mrb[0].mxu0
      %2136 = vdwg.mxu0
      %v2137 = vadd.f32 %v1735, %v2075
      %v2138 = vadd.f32 %v1736, %v2078
      %v2139 = vadd.f32 %v1737, %v2083
      %v2140 = vadd.f32 %v1738, %v2086
      %v2141 = vadd.f32 %v1739, %v2091
      %v2142 = vadd.f32 %v1740, %v2094
      %v2143 = vadd.f32 %v1741, %v2099
      %v2144 = vadd.f32 %v1742, %v2102
      %v2145 = vadd.f32 %v1743, %v2107
      %v2146 = vadd.f32 %v1744, %v2110
      %v2147 = vadd.f32 %v1745, %v2115
      %v2148 = vadd.f32 %v1746, %v2118
      %v2149 = vadd.f32 %v1747, %v2123
      %v2150 = vadd.f32 %v1748, %v2126
      %v2151 = vadd.f32 %v1749, %v2131
      %v2152 = vadd.f32 %v1750, %v2134
      %2153 = vst [vmem:[#allocation3] sm:$0xff] %v2137
      %2154 = vst [vmem:[#allocation3 + $0x8] sm:$0xff] %v2138
      %2155 = vst [vmem:[#allocation3 + $0x10] sm:$0xff] %v2139
      %2156 = vst [vmem:[#allocation3 + $0x18] sm:$0xff] %v2140
      %2157 = vst [vmem:[#allocation3 + $0x20] sm:$0xff] %v2141
      %2158 = vst [vmem:[#allocation3 + $0x28] sm:$0xff] %v2142
      %2159 = vst [vmem:[#allocation3 + $0x30] sm:$0xff] %v2143
      %2160 = vst [vmem:[#allocation3 + $0x38] sm:$0xff] %v2144
      %2161 = vst [vmem:[#allocation3 + $0x40] sm:$0xff] %v2145
      %2162 = vst [vmem:[#allocation3 + $0x48] sm:$0xff] %v2146
      %2163 = vst [vmem:[#allocation3 + $0x50] sm:$0xff] %v2147
      %2164 = vst [vmem:[#allocation3 + $0x58] sm:$0xff] %v2148
      %2165 = vst [vmem:[#allocation3 + $0x60] sm:$0xff] %v2149
      %2166 = vst [vmem:[#allocation3 + $0x68] sm:$0xff] %v2150
      %2167 = vst [vmem:[#allocation3 + $0x70] sm:$0xff] %v2151
      %2168 = vst [vmem:[#allocation3 + $0x78] sm:$0xff] %v2152
      // Predicated region
      $region77: #{diffusion_net_forward.5} parent=71 // pred_check
        %p2169 = pneg %p583
      $region78: #{diffusion_net_forward.5} parent=71 // pred_check_branch
        %2171 = sbr.rel (%p2169) target = $region80
      $region79: #{diffusion_net_forward.5} parent=71 // pred_region
        %v2172 = vld [vmem:[%s550] sm:$0xff]
        %v2173 = vld [vmem:[%s550 + $0x8] sm:$0xff]
        %v2174 = vld [vmem:[%s550 + $0x10] sm:$0xff]
        %v2175 = vld [vmem:[%s550 + $0x18] sm:$0xff]
        %v2176 = vld [vmem:[%s550 + $0x20] sm:$0xff]
        %v2177 = vld [vmem:[%s550 + $0x28] sm:$0xff]
        %v2178 = vld [vmem:[%s550 + $0x30] sm:$0xff]
        %v2179 = vld [vmem:[%s550 + $0x38] sm:$0xff]
        %v2180 = vld [vmem:[%s550 + $0x40] sm:$0xff]
        %v2181 = vld [vmem:[%s550 + $0x48] sm:$0xff]
        %v2182 = vld [vmem:[%s550 + $0x50] sm:$0xff]
        %v2183 = vld [vmem:[%s550 + $0x58] sm:$0xff]
        %v2184 = vld [vmem:[%s550 + $0x60] sm:$0xff]
        %v2185 = vld [vmem:[%s550 + $0x68] sm:$0xff]
        %v2186 = vld [vmem:[%s550 + $0x70] sm:$0xff]
        %v2187 = vld [vmem:[%s550 + $0x78] sm:$0xff]
        %v2188 = vld [vmem:[%s3] sm:$0xff]
        %v2189 = vld [vmem:[%s3 + $0x8] sm:$0xff]
        %v2190 = vld [vmem:[%s3 + $0x10] sm:$0xff]
        %v2191 = vld [vmem:[%s3 + $0x18] sm:$0xff]
        %v2192 = vld [vmem:[%s3 + $0x20] sm:$0xff]
        %v2193 = vld [vmem:[%s3 + $0x28] sm:$0xff]
        %v2194 = vld [vmem:[%s3 + $0x30] sm:$0xff]
        %v2195 = vld [vmem:[%s3 + $0x38] sm:$0xff]
        %v2197 = vsel %vm691, %v2172, 0
        %v2200 = vsel %vm691, %v2173, 0
        %v2203 = vsel %vm691, %v2174, 0
        %v2206 = vsel %vm691, %v2175, 0
        %v2209 = vsel %vm691, %v2176, 0
        %v2212 = vsel %vm691, %v2177, 0
        %v2215 = vsel %vm691, %v2178, 0
        %v2218 = vsel %vm691, %v2179, 0
        %v2221 = vsel %vm691, %v2180, 0
        %v2224 = vsel %vm691, %v2181, 0
        %v2227 = vsel %vm691, %v2182, 0
        %v2230 = vsel %vm691, %v2183, 0
        %v2233 = vsel %vm691, %v2184, 0
        %v2236 = vsel %vm691, %v2185, 0
        %v2239 = vsel %vm691, %v2186, 0
        %v2242 = vsel %vm691, %v2187, 0
        %2244 = vmatprep.subr.mxu0 0.0
        %2245 = vmatpush1.msra.mxu0 %v2188
        %2246 = vmatprep.subr.mxu0 0.0
        %2247 = vmatpush1.msra.mxu0 %v2189
        %2248 = vmatprep.subr.mxu0 0.0
        %2249 = vmatpush1.msra.mxu0 %v2190
        %2250 = vmatprep.subr.mxu0 0.0
        %2251 = vmatpush1.msra.mxu0 %v2191
        %2252 = vmatprep.subr.mxu0 0.0
        %2253 = vmatpush1.msra.mxu0 %v2192
        %2254 = vmatprep.subr.mxu0 0.0
        %2255 = vmatpush1.msra.mxu0 %v2193
        %2256 = vmatprep.subr.mxu0 0.0
        %2257 = vmatpush1.msra.mxu0 %v2194
        %2258 = vmatprep.subr.mxu0 0.0
        %2259 = vmatpush1.msra.mxu0 %v2195
        %2260 = vmatprep.subr.mxu0 0.0
        %2261 = vmatpush1.msra.mxu0 0.0
        %2262 = vmatprep.subr.mxu0 0.0
        %2263 = vmatpush1.msra.mxu0 0.0
        %2264 = vmatprep.subr.mxu0 0.0
        %2265 = vmatpush1.msra.mxu0 0.0
        %2266 = vmatprep.subr.mxu0 0.0
        %2267 = vmatpush1.msra.mxu0 0.0
        %2268 = vmatprep.subr.mxu0 0.0
        %2269 = vmatpush1.msra.mxu0 0.0
        %2270 = vmatprep.subr.mxu0 0.0
        %2271 = vmatpush1.msra.mxu0 0.0
        %2272 = vmatprep.subr.mxu0 0.0
        %2273 = vmatpush1.msra.mxu0 0.0
        %2274 = vmatprep.subr.mxu0 0.0
        %2275 = vmatpush1.msra.mxu0 0.0
        %2276 = vmatprep.subr.mxu0 0.0
        %2277 = vmatpush1.msra.mxu0 0.0
        %2278 = vmatprep.subr.mxu0 0.0
        %2279 = vmatpush1.msra.mxu0 0.0
        %2280 = vmatprep.subr.mxu0 0.0
        %2281 = vmatpush1.msra.mxu0 0.0
        %2282 = vmatprep.subr.mxu0 0.0
        %2283 = vmatpush1.msra.mxu0 0.0
        %2284 = vmatprep.subr.mxu0 0.0
        %2285 = vmatpush1.msra.mxu0 0.0
        %2286 = vmatprep.subr.mxu0 0.0
        %2287 = vmatpush1.msra.mxu0 0.0
        %2288 = vmatprep.subr.mxu0 0.0
        %2289 = vmatpush1.msra.mxu0 0.0
        %2290 = vmatprep.subr.mxu0 0.0
        %2291 = vmatpush1.msra.mxu0 0.0
        %2292 = vmatprep.subr.mxu0 0.0
        %2293 = vmatpush1.msra.mxu0 0.0
        %2294 = vmatprep.subr.mxu0 0.0
        %2295 = vmatpush1.msra.mxu0 0.0
        %2296 = vmatprep.subr.mxu0 0.0
        %2297 = vmatpush1.msra.mxu0 0.0
        %2298 = vmatprep.subr.mxu0 0.0
        %2299 = vmatpush1.msra.mxu0 0.0
        %2300 = vmatprep.subr.mxu0 0.0
        %2301 = vmatpush1.msra.mxu0 0.0
        %2302 = vmatprep.subr.mxu0 0.0
        %2303 = vmatpush1.msra.mxu0 0.0
        %2304 = vmatprep.subr.mxu0 0.0
        %2305 = vmatpush1.msra.mxu0 0.0
        %2306 = vmatprep.subr.mxu0 0.0
        %2307 = vmatpush1.msra.mxu0 0.0
        %2308 = vmatprep.mubr.f32.mxu0 0.0
        %2309 = vmatmul.mubr.f32.gmra.mrb[0].mxu0 %v2197
        %v2310 = vpop.f32.mrb[0].mxu0
        %v2311 = vadd.f32 0.0, %v2310
        %v2312 = vpop.f32.mrb[0].mxu0
        %2313 = vmatprep.mubr.f32.mxu0 0.0
        %2314 = vmatmul.mubr.f32.gmra.mrb[0].mxu0 %v2200
        %v2315 = vpop.f32.mrb[0].mxu0
        %v2316 = vadd.f32 0.0, %v2315
        %v2317 = vpop.f32.mrb[0].mxu0
        %2318 = vmatprep.mubr.f32.mxu0 0.0
        %2319 = vmatmul.mubr.f32.gmra.mrb[0].mxu0 %v2203
        %v2320 = vpop.f32.mrb[0].mxu0
        %v2321 = vadd.f32 0.0, %v2320
        %v2322 = vpop.f32.mrb[0].mxu0
        %2323 = vmatprep.mubr.f32.mxu0 0.0
        %2324 = vmatmul.mubr.f32.gmra.mrb[0].mxu0 %v2206
        %v2325 = vpop.f32.mrb[0].mxu0
        %v2326 = vadd.f32 0.0, %v2325
        %v2327 = vpop.f32.mrb[0].mxu0
        %2328 = vmatprep.mubr.f32.mxu0 0.0
        %2329 = vmatmul.mubr.f32.gmra.mrb[0].mxu0 %v2209
        %v2330 = vpop.f32.mrb[0].mxu0
        %v2331 = vadd.f32 0.0, %v2330
        %v2332 = vpop.f32.mrb[0].mxu0
        %2333 = vmatprep.mubr.f32.mxu0 0.0
        %2334 = vmatmul.mubr.f32.gmra.mrb[0].mxu0 %v2212
        %v2335 = vpop.f32.mrb[0].mxu0
        %v2336 = vadd.f32 0.0, %v2335
        %v2337 = vpop.f32.mrb[0].mxu0
        %2338 = vmatprep.mubr.f32.mxu0 0.0
        %2339 = vmatmul.mubr.f32.gmra.mrb[0].mxu0 %v2215
        %v2340 = vpop.f32.mrb[0].mxu0
        %v2341 = vadd.f32 0.0, %v2340
        %v2342 = vpop.f32.mrb[0].mxu0
        %2343 = vmatprep.mubr.f32.mxu0 0.0
        %2344 = vmatmul.mubr.f32.gmra.mrb[0].mxu0 %v2218
        %v2345 = vpop.f32.mrb[0].mxu0
        %v2346 = vadd.f32 0.0, %v2345
        %v2347 = vpop.f32.mrb[0].mxu0
        %2348 = vmatprep.mubr.f32.mxu0 0.0
        %2349 = vmatmul.mubr.f32.gmra.mrb[0].mxu0 %v2221
        %v2350 = vpop.f32.mrb[0].mxu0
        %v2351 = vadd.f32 0.0, %v2350
        %v2352 = vpop.f32.mrb[0].mxu0
        %2353 = vmatprep.mubr.f32.mxu0 0.0
        %2354 = vmatmul.mubr.f32.gmra.mrb[0].mxu0 %v2224
        %v2355 = vpop.f32.mrb[0].mxu0
        %v2356 = vadd.f32 0.0, %v2355
        %v2357 = vpop.f32.mrb[0].mxu0
        %2358 = vmatprep.mubr.f32.mxu0 0.0
        %2359 = vmatmul.mubr.f32.gmra.mrb[0].mxu0 %v2227
        %v2360 = vpop.f32.mrb[0].mxu0
        %v2361 = vadd.f32 0.0, %v2360
        %v2362 = vpop.f32.mrb[0].mxu0
        %2363 = vmatprep.mubr.f32.mxu0 0.0
        %2364 = vmatmul.mubr.f32.gmra.mrb[0].mxu0 %v2230
        %v2365 = vpop.f32.mrb[0].mxu0
        %v2366 = vadd.f32 0.0, %v2365
        %v2367 = vpop.f32.mrb[0].mxu0
        %2368 = vmatprep.mubr.f32.mxu0 0.0
        %2369 = vmatmul.mubr.f32.gmra.mrb[0].mxu0 %v2233
        %v2370 = vpop.f32.mrb[0].mxu0
        %v2371 = vadd.f32 0.0, %v2370
        %v2372 = vpop.f32.mrb[0].mxu0
        %2373 = vmatprep.mubr.f32.mxu0 0.0
        %2374 = vmatmul.mubr.f32.gmra.mrb[0].mxu0 %v2236
        %v2375 = vpop.f32.mrb[0].mxu0
        %v2376 = vadd.f32 0.0, %v2375
        %v2377 = vpop.f32.mrb[0].mxu0
        %2378 = vmatprep.mubr.f32.mxu0 0.0
        %2379 = vmatmul.mubr.f32.gmra.mrb[0].mxu0 %v2239
        %v2380 = vpop.f32.mrb[0].mxu0
        %v2381 = vadd.f32 0.0, %v2380
        %v2382 = vpop.f32.mrb[0].mxu0
        %2383 = vmatprep.mubr.f32.mxu0 0.0
        %2384 = vmatmul.mubr.f32.gmra.mrb[0].mxu0 %v2242
        %v2385 = vpop.f32.mrb[0].mxu0
        %v2386 = vadd.f32 0.0, %v2385
        %v2387 = vpop.f32.mrb[0].mxu0
        %2388 = vdwg.mxu0
        %v2389 = vld [vmem:[#allocation2] sm:$0xff]
        %v2390 = vld [vmem:[#allocation2 + $0x8] sm:$0xff]
        %v2391 = vld [vmem:[#allocation2 + $0x10] sm:$0xff]
        %v2392 = vld [vmem:[#allocation2 + $0x18] sm:$0xff]
        %v2393 = vld [vmem:[#allocation2 + $0x20] sm:$0xff]
        %v2394 = vld [vmem:[#allocation2 + $0x28] sm:$0xff]
        %v2395 = vld [vmem:[#allocation2 + $0x30] sm:$0xff]
        %v2396 = vld [vmem:[#allocation2 + $0x38] sm:$0xff]
        %v2397 = vld [vmem:[#allocation2 + $0x40] sm:$0xff]
        %v2398 = vld [vmem:[#allocation2 + $0x48] sm:$0xff]
        %v2399 = vld [vmem:[#allocation2 + $0x50] sm:$0xff]
        %v2400 = vld [vmem:[#allocation2 + $0x58] sm:$0xff]
        %v2401 = vld [vmem:[#allocation2 + $0x60] sm:$0xff]
        %v2402 = vld [vmem:[#allocation2 + $0x68] sm:$0xff]
        %v2403 = vld [vmem:[#allocation2 + $0x70] sm:$0xff]
        %v2404 = vld [vmem:[#allocation2 + $0x78] sm:$0xff]
        %2405 = vst [vmem:[#allocation4] sm:$0xff] %v2389
        %2406 = vst [vmem:[#allocation4 + $0x10] sm:$0xff] %v2390
        %2407 = vst [vmem:[#allocation4 + $0x20] sm:$0xff] %v2391
        %2408 = vst [vmem:[#allocation4 + $0x30] sm:$0xff] %v2392
        %2409 = vst [vmem:[#allocation4 + $0x40] sm:$0xff] %v2393
        %2410 = vst [vmem:[#allocation4 + $0x50] sm:$0xff] %v2394
        %2411 = vst [vmem:[#allocation4 + $0x60] sm:$0xff] %v2395
        %2412 = vst [vmem:[#allocation4 + $0x70] sm:$0xff] %v2396
        %2413 = vst [vmem:[#allocation4 + $0x80] sm:$0xff] %v2397
        %2414 = vst [vmem:[#allocation4 + $0x90] sm:$0xff] %v2398
        %2415 = vst [vmem:[#allocation4 + $0xa0] sm:$0xff] %v2399
        %2416 = vst [vmem:[#allocation4 + $0xb0] sm:$0xff] %v2400
        %2417 = vst [vmem:[#allocation4 + $0xc0] sm:$0xff] %v2401
        %2418 = vst [vmem:[#allocation4 + $0xd0] sm:$0xff] %v2402
        %2419 = vst [vmem:[#allocation4 + $0xe0] sm:$0xff] %v2403
        %2420 = vst [vmem:[#allocation4 + $0xf0] sm:$0xff] %v2404
        %v2421 = vld [vmem:[#allocation3] sm:$0xff]
        %v2422 = vld [vmem:[#allocation3 + $0x8] sm:$0xff]
        %v2423 = vld [vmem:[#allocation3 + $0x10] sm:$0xff]
        %v2424 = vld [vmem:[#allocation3 + $0x18] sm:$0xff]
        %v2425 = vld [vmem:[#allocation3 + $0x20] sm:$0xff]
        %v2426 = vld [vmem:[#allocation3 + $0x28] sm:$0xff]
        %v2427 = vld [vmem:[#allocation3 + $0x30] sm:$0xff]
        %v2428 = vld [vmem:[#allocation3 + $0x38] sm:$0xff]
        %v2429 = vld [vmem:[#allocation3 + $0x40] sm:$0xff]
        %v2430 = vld [vmem:[#allocation3 + $0x48] sm:$0xff]
        %v2431 = vld [vmem:[#allocation3 + $0x50] sm:$0xff]
        %v2432 = vld [vmem:[#allocation3 + $0x58] sm:$0xff]
        %v2433 = vld [vmem:[#allocation3 + $0x60] sm:$0xff]
        %v2434 = vld [vmem:[#allocation3 + $0x68] sm:$0xff]
        %v2435 = vld [vmem:[#allocation3 + $0x70] sm:$0xff]
        %v2436 = vld [vmem:[#allocation3 + $0x78] sm:$0xff]
        %2437 = vst [vmem:[#allocation4 + $0x8] sm:$0xff] %v2421
        %2438 = vst [vmem:[#allocation4 + $0x18] sm:$0xff] %v2422
        %2439 = vst [vmem:[#allocation4 + $0x28] sm:$0xff] %v2423
        %2440 = vst [vmem:[#allocation4 + $0x38] sm:$0xff] %v2424
        %2441 = vst [vmem:[#allocation4 + $0x48] sm:$0xff] %v2425
        %2442 = vst [vmem:[#allocation4 + $0x58] sm:$0xff] %v2426
        %2443 = vst [vmem:[#allocation4 + $0x68] sm:$0xff] %v2427
        %2444 = vst [vmem:[#allocation4 + $0x78] sm:$0xff] %v2428
        %2445 = vst [vmem:[#allocation4 + $0x88] sm:$0xff] %v2429
        %2446 = vst [vmem:[#allocation4 + $0x98] sm:$0xff] %v2430
        %2447 = vst [vmem:[#allocation4 + $0xa8] sm:$0xff] %v2431
        %2448 = vst [vmem:[#allocation4 + $0xb8] sm:$0xff] %v2432
        %2449 = vst [vmem:[#allocation4 + $0xc8] sm:$0xff] %v2433
        %2450 = vst [vmem:[#allocation4 + $0xd8] sm:$0xff] %v2434
        %2451 = vst [vmem:[#allocation4 + $0xe8] sm:$0xff] %v2435
        %2452 = vst [vmem:[#allocation4 + $0xf8] sm:$0xff] %v2436
        %v2453 = vld [vmem:[#allocation4] sm:$0xff]
        %v2454 = vld [vmem:[#allocation4 + $0x8] sm:$0xff]
        %v2455 = vld [vmem:[#allocation4 + $0x10] sm:$0xff]
        %v2456 = vld [vmem:[#allocation4 + $0x18] sm:$0xff]
        %v2457 = vld [vmem:[#allocation4 + $0x20] sm:$0xff]
        %v2458 = vld [vmem:[#allocation4 + $0x28] sm:$0xff]
        %v2459 = vld [vmem:[#allocation4 + $0x30] sm:$0xff]
        %v2460 = vld [vmem:[#allocation4 + $0x38] sm:$0xff]
        %v2461 = vld [vmem:[#allocation4 + $0x40] sm:$0xff]
        %v2462 = vld [vmem:[#allocation4 + $0x48] sm:$0xff]
        %v2463 = vld [vmem:[#allocation4 + $0x50] sm:$0xff]
        %v2464 = vld [vmem:[#allocation4 + $0x58] sm:$0xff]
        %v2465 = vld [vmem:[#allocation4 + $0x60] sm:$0xff]
        %v2466 = vld [vmem:[#allocation4 + $0x68] sm:$0xff]
        %v2467 = vld [vmem:[#allocation4 + $0x70] sm:$0xff]
        %v2468 = vld [vmem:[#allocation4 + $0x78] sm:$0xff]
        %v2469 = vld [vmem:[#allocation4 + $0x80] sm:$0xff]
        %v2470 = vld [vmem:[#allocation4 + $0x88] sm:$0xff]
        %v2471 = vld [vmem:[#allocation4 + $0x90] sm:$0xff]
        %v2472 = vld [vmem:[#allocation4 + $0x98] sm:$0xff]
        %v2473 = vld [vmem:[#allocation4 + $0xa0] sm:$0xff]
        %v2474 = vld [vmem:[#allocation4 + $0xa8] sm:$0xff]
        %v2475 = vld [vmem:[#allocation4 + $0xb0] sm:$0xff]
        %v2476 = vld [vmem:[#allocation4 + $0xb8] sm:$0xff]
        %v2477 = vld [vmem:[#allocation4 + $0xc0] sm:$0xff]
        %v2478 = vld [vmem:[#allocation4 + $0xc8] sm:$0xff]
        %v2479 = vld [vmem:[#allocation4 + $0xd0] sm:$0xff]
        %v2480 = vld [vmem:[#allocation4 + $0xd8] sm:$0xff]
        %v2481 = vld [vmem:[#allocation4 + $0xe0] sm:$0xff]
        %v2482 = vld [vmem:[#allocation4 + $0xe8] sm:$0xff]
        %v2483 = vld [vmem:[#allocation4 + $0xf0] sm:$0xff]
        %v2484 = vld [vmem:[#allocation4 + $0xf8] sm:$0xff]
        %v2485 = vld [vmem:[%s6] sm:$0xff]
        %v2486 = vld [vmem:[%s6 + $0x8] sm:$0xff]
        %v2487 = vld [vmem:[%s6 + $0x10] sm:$0xff]
        %v2488 = vld [vmem:[%s6 + $0x18] sm:$0xff]
        %v2489 = vld [vmem:[%s6 + $0x20] sm:$0xff]
        %v2490 = vld [vmem:[%s6 + $0x28] sm:$0xff]
        %v2491 = vld [vmem:[%s6 + $0x30] sm:$0xff]
        %v2492 = vld [vmem:[%s6 + $0x38] sm:$0xff]
        %v2493 = vld [vmem:[%s6 + $0x40] sm:$0xff]
        %v2494 = vld [vmem:[%s6 + $0x48] sm:$0xff]
        %v2495 = vld [vmem:[%s6 + $0x50] sm:$0xff]
        %v2496 = vld [vmem:[%s6 + $0x58] sm:$0xff]
        %v2497 = vld [vmem:[%s6 + $0x60] sm:$0xff]
        %v2498 = vld [vmem:[%s6 + $0x68] sm:$0xff]
        %v2499 = vld [vmem:[%s6 + $0x70] sm:$0xff]
        %v2500 = vld [vmem:[%s6 + $0x78] sm:$0xff]
        %v2501 = vld [vmem:[%s6 + $0x80] sm:$0xff]
        %v2502 = vld [vmem:[%s6 + $0x88] sm:$0xff]
        %v2503 = vld [vmem:[%s6 + $0x90] sm:$0xff]
        %v2504 = vld [vmem:[%s6 + $0x98] sm:$0xff]
        %v2505 = vld [vmem:[%s6 + $0xa0] sm:$0xff]
        %v2506 = vld [vmem:[%s6 + $0xa8] sm:$0xff]
        %v2507 = vld [vmem:[%s6 + $0xb0] sm:$0xff]
        %v2508 = vld [vmem:[%s6 + $0xb8] sm:$0xff]
        %v2509 = vld [vmem:[%s6 + $0xc0] sm:$0xff]
        %v2510 = vld [vmem:[%s6 + $0xc8] sm:$0xff]
        %v2511 = vld [vmem:[%s6 + $0xd0] sm:$0xff]
        %v2512 = vld [vmem:[%s6 + $0xd8] sm:$0xff]
        %v2513 = vld [vmem:[%s6 + $0xe0] sm:$0xff]
        %v2514 = vld [vmem:[%s6 + $0xe8] sm:$0xff]
        %v2515 = vld [vmem:[%s6 + $0xf0] sm:$0xff]
        %v2516 = vld [vmem:[%s6 + $0xf8] sm:$0xff]
        %v2517 = vld [vmem:[%s6 + $0x100] sm:$0xff]
        %v2518 = vld [vmem:[%s6 + $0x108] sm:$0xff]
        %v2519 = vld [vmem:[%s6 + $0x110] sm:$0xff]
        %v2520 = vld [vmem:[%s6 + $0x118] sm:$0xff]
        %v2521 = vld [vmem:[%s6 + $0x120] sm:$0xff]
        %v2522 = vld [vmem:[%s6 + $0x128] sm:$0xff]
        %v2523 = vld [vmem:[%s6 + $0x130] sm:$0xff]
        %v2524 = vld [vmem:[%s6 + $0x138] sm:$0xff]
        %v2525 = vld [vmem:[%s6 + $0x140] sm:$0xff]
        %v2526 = vld [vmem:[%s6 + $0x148] sm:$0xff]
        %v2527 = vld [vmem:[%s6 + $0x150] sm:$0xff]
        %v2528 = vld [vmem:[%s6 + $0x158] sm:$0xff]
        %v2529 = vld [vmem:[%s6 + $0x160] sm:$0xff]
        %v2530 = vld [vmem:[%s6 + $0x168] sm:$0xff]
        %v2531 = vld [vmem:[%s6 + $0x170] sm:$0xff]
        %v2532 = vld [vmem:[%s6 + $0x178] sm:$0xff]
        %v2533 = vld [vmem:[%s6 + $0x180] sm:$0xff]
        %v2534 = vld [vmem:[%s6 + $0x188] sm:$0xff]
        %v2535 = vld [vmem:[%s6 + $0x190] sm:$0xff]
        %v2536 = vld [vmem:[%s6 + $0x198] sm:$0xff]
        %v2537 = vld [vmem:[%s6 + $0x1a0] sm:$0xff]
        %v2538 = vld [vmem:[%s6 + $0x1a8] sm:$0xff]
        %v2539 = vld [vmem:[%s6 + $0x1b0] sm:$0xff]
        %v2540 = vld [vmem:[%s6 + $0x1b8] sm:$0xff]
        %v2541 = vld [vmem:[%s6 + $0x1c0] sm:$0xff]
        %v2542 = vld [vmem:[%s6 + $0x1c8] sm:$0xff]
        %v2543 = vld [vmem:[%s6 + $0x1d0] sm:$0xff]
        %v2544 = vld [vmem:[%s6 + $0x1d8] sm:$0xff]
        %v2545 = vld [vmem:[%s6 + $0x1e0] sm:$0xff]
        %v2546 = vld [vmem:[%s6 + $0x1e8] sm:$0xff]
        %v2547 = vld [vmem:[%s6 + $0x1f0] sm:$0xff]
        %v2548 = vld [vmem:[%s6 + $0x1f8] sm:$0xff]
        %2549 = vmatprep.subr.mxu0 %v2486
        %2550 = vmatpush1.msra.mxu0 %v2485
        %2551 = vmatprep.subr.mxu0 %v2488
        %2552 = vmatpush1.msra.mxu0 %v2487
        %2553 = vmatprep.subr.mxu0 %v2490
        %2554 = vmatpush1.msra.mxu0 %v2489
        %2555 = vmatprep.subr.mxu0 %v2492
        %2556 = vmatpush1.msra.mxu0 %v2491
        %2557 = vmatprep.subr.mxu0 %v2494
        %2558 = vmatpush1.msra.mxu0 %v2493
        %2559 = vmatprep.subr.mxu0 %v2496
        %2560 = vmatpush1.msra.mxu0 %v2495
        %2561 = vmatprep.subr.mxu0 %v2498
        %2562 = vmatpush1.msra.mxu0 %v2497
        %2563 = vmatprep.subr.mxu0 %v2500
        %2564 = vmatpush1.msra.mxu0 %v2499
        %2565 = vmatprep.subr.mxu0 %v2502
        %2566 = vmatpush1.msra.mxu0 %v2501
        %2567 = vmatprep.subr.mxu0 %v2504
        %2568 = vmatpush1.msra.mxu0 %v2503
        %2569 = vmatprep.subr.mxu0 %v2506
        %2570 = vmatpush1.msra.mxu0 %v2505
        %2571 = vmatprep.subr.mxu0 %v2508
        %2572 = vmatpush1.msra.mxu0 %v2507
        %2573 = vmatprep.subr.mxu0 %v2510
        %2574 = vmatpush1.msra.mxu0 %v2509
        %2575 = vmatprep.subr.mxu0 %v2512
        %2576 = vmatpush1.msra.mxu0 %v2511
        %2577 = vmatprep.subr.mxu0 %v2514
        %2578 = vmatpush1.msra.mxu0 %v2513
        %2579 = vmatprep.subr.mxu0 %v2516
        %2580 = vmatpush1.msra.mxu0 %v2515
        %2581 = vmatprep.subr.mxu0 %v2518
        %2582 = vmatpush1.msra.mxu0 %v2517
        %2583 = vmatprep.subr.mxu0 %v2520
        %2584 = vmatpush1.msra.mxu0 %v2519
        %2585 = vmatprep.subr.mxu0 %v2522
        %2586 = vmatpush1.msra.mxu0 %v2521
        %2587 = vmatprep.subr.mxu0 %v2524
        %2588 = vmatpush1.msra.mxu0 %v2523
        %2589 = vmatprep.subr.mxu0 %v2526
        %2590 = vmatpush1.msra.mxu0 %v2525
        %2591 = vmatprep.subr.mxu0 %v2528
        %2592 = vmatpush1.msra.mxu0 %v2527
        %2593 = vmatprep.subr.mxu0 %v2530
        %2594 = vmatpush1.msra.mxu0 %v2529
        %2595 = vmatprep.subr.mxu0 %v2532
        %2596 = vmatpush1.msra.mxu0 %v2531
        %2597 = vmatprep.subr.mxu0 %v2534
        %2598 = vmatpush1.msra.mxu0 %v2533
        %2599 = vmatprep.subr.mxu0 %v2536
        %2600 = vmatpush1.msra.mxu0 %v2535
        %2601 = vmatprep.subr.mxu0 %v2538
        %2602 = vmatpush1.msra.mxu0 %v2537
        %2603 = vmatprep.subr.mxu0 %v2540
        %2604 = vmatpush1.msra.mxu0 %v2539
        %2605 = vmatprep.subr.mxu0 %v2542
        %2606 = vmatpush1.msra.mxu0 %v2541
        %2607 = vmatprep.subr.mxu0 %v2544
        %2608 = vmatpush1.msra.mxu0 %v2543
        %2609 = vmatprep.subr.mxu0 %v2546
        %2610 = vmatpush1.msra.mxu0 %v2545
        %2611 = vmatprep.subr.mxu0 %v2548
        %2612 = vmatpush1.msra.mxu0 %v2547
        %2613 = vmatprep.mubr.f32.mxu0 %v2454
        %2614 = vmatmul.mubr.f32.gmra.mrb[0].mxu0 %v2453
        %v2615 = vpop.f32.mrb[0].mxu0
        %v2616 = vadd.f32 0.0, %v2615
        %v2617 = vpop.f32.mrb[0].mxu0
        %v2618 = vadd.f32 0.0, %v2617
        %2619 = vmatprep.mubr.f32.mxu0 %v2456
        %2620 = vmatmul.mubr.f32.gmra.mrb[0].mxu0 %v2455
        %v2621 = vpop.f32.mrb[0].mxu0
        %v2622 = vadd.f32 0.0, %v2621
        %v2623 = vpop.f32.mrb[0].mxu0
        %v2624 = vadd.f32 0.0, %v2623
        %2625 = vmatprep.mubr.f32.mxu0 %v2458
        %2626 = vmatmul.mubr.f32.gmra.mrb[0].mxu0 %v2457
        %v2627 = vpop.f32.mrb[0].mxu0
        %v2628 = vadd.f32 0.0, %v2627
        %v2629 = vpop.f32.mrb[0].mxu0
        %v2630 = vadd.f32 0.0, %v2629
        %2631 = vmatprep.mubr.f32.mxu0 %v2460
        %2632 = vmatmul.mubr.f32.gmra.mrb[0].mxu0 %v2459
        %v2633 = vpop.f32.mrb[0].mxu0
        %v2634 = vadd.f32 0.0, %v2633
        %v2635 = vpop.f32.mrb[0].mxu0
        %v2636 = vadd.f32 0.0, %v2635
        %2637 = vmatprep.mubr.f32.mxu0 %v2462
        %2638 = vmatmul.mubr.f32.gmra.mrb[0].mxu0 %v2461
        %v2639 = vpop.f32.mrb[0].mxu0
        %v2640 = vadd.f32 0.0, %v2639
        %v2641 = vpop.f32.mrb[0].mxu0
        %v2642 = vadd.f32 0.0, %v2641
        %2643 = vmatprep.mubr.f32.mxu0 %v2464
        %2644 = vmatmul.mubr.f32.gmra.mrb[0].mxu0 %v2463
        %v2645 = vpop.f32.mrb[0].mxu0
        %v2646 = vadd.f32 0.0, %v2645
        %v2647 = vpop.f32.mrb[0].mxu0
        %v2648 = vadd.f32 0.0, %v2647
        %2649 = vmatprep.mubr.f32.mxu0 %v2466
        %2650 = vmatmul.mubr.f32.gmra.mrb[0].mxu0 %v2465
        %v2651 = vpop.f32.mrb[0].mxu0
        %v2652 = vadd.f32 0.0, %v2651
        %v2653 = vpop.f32.mrb[0].mxu0
        %v2654 = vadd.f32 0.0, %v2653
        %2655 = vmatprep.mubr.f32.mxu0 %v2468
        %2656 = vmatmul.mubr.f32.gmra.mrb[0].mxu0 %v2467
        %v2657 = vpop.f32.mrb[0].mxu0
        %v2658 = vadd.f32 0.0, %v2657
        %v2659 = vpop.f32.mrb[0].mxu0
        %v2660 = vadd.f32 0.0, %v2659
        %2661 = vmatprep.mubr.f32.mxu0 %v2470
        %2662 = vmatmul.mubr.f32.gmra.mrb[0].mxu0 %v2469
        %v2663 = vpop.f32.mrb[0].mxu0
        %v2664 = vadd.f32 0.0, %v2663
        %v2665 = vpop.f32.mrb[0].mxu0
        %v2666 = vadd.f32 0.0, %v2665
        %2667 = vmatprep.mubr.f32.mxu0 %v2472
        %2668 = vmatmul.mubr.f32.gmra.mrb[0].mxu0 %v2471
        %v2669 = vpop.f32.mrb[0].mxu0
        %v2670 = vadd.f32 0.0, %v2669
        %v2671 = vpop.f32.mrb[0].mxu0
        %v2672 = vadd.f32 0.0, %v2671
        %2673 = vmatprep.mubr.f32.mxu0 %v2474
        %2674 = vmatmul.mubr.f32.gmra.mrb[0].mxu0 %v2473
        %v2675 = vpop.f32.mrb[0].mxu0
        %v2676 = vadd.f32 0.0, %v2675
        %v2677 = vpop.f32.mrb[0].mxu0
        %v2678 = vadd.f32 0.0, %v2677
        %2679 = vmatprep.mubr.f32.mxu0 %v2476
        %2680 = vmatmul.mubr.f32.gmra.mrb[0].mxu0 %v2475
        %v2681 = vpop.f32.mrb[0].mxu0
        %v2682 = vadd.f32 0.0, %v2681
        %v2683 = vpop.f32.mrb[0].mxu0
        %v2684 = vadd.f32 0.0, %v2683
        %2685 = vmatprep.mubr.f32.mxu0 %v2478
        %2686 = vmatmul.mubr.f32.gmra.mrb[0].mxu0 %v2477
        %v2687 = vpop.f32.mrb[0].mxu0
        %v2688 = vadd.f32 0.0, %v2687
        %v2689 = vpop.f32.mrb[0].mxu0
        %v2690 = vadd.f32 0.0, %v2689
        %2691 = vmatprep.mubr.f32.mxu0 %v2480
        %2692 = vmatmul.mubr.f32.gmra.mrb[0].mxu0 %v2479
        %v2693 = vpop.f32.mrb[0].mxu0
        %v2694 = vadd.f32 0.0, %v2693
        %v2695 = vpop.f32.mrb[0].mxu0
        %v2696 = vadd.f32 0.0, %v2695
        %2697 = vmatprep.mubr.f32.mxu0 %v2482
        %2698 = vmatmul.mubr.f32.gmra.mrb[0].mxu0 %v2481
        %v2699 = vpop.f32.mrb[0].mxu0
        %v2700 = vadd.f32 0.0, %v2699
        %v2701 = vpop.f32.mrb[0].mxu0
        %v2702 = vadd.f32 0.0, %v2701
        %2703 = vmatprep.mubr.f32.mxu0 %v2484
        %2704 = vmatmul.mubr.f32.gmra.mrb[0].mxu0 %v2483
        %v2705 = vpop.f32.mrb[0].mxu0
        %v2706 = vadd.f32 0.0, %v2705
        %v2707 = vpop.f32.mrb[0].mxu0
        %v2708 = vadd.f32 0.0, %v2707
        %2709 = vdwg.mxu0
        %v2710 = vmul.f32 %v2453, %v2616
        %v2711 = vmul.f32 %v2454, %v2618
        %v2712 = vmul.f32 %v2455, %v2622
        %v2713 = vmul.f32 %v2456, %v2624
        %v2714 = vmul.f32 %v2457, %v2628
        %v2715 = vmul.f32 %v2458, %v2630
        %v2716 = vmul.f32 %v2459, %v2634
        %v2717 = vmul.f32 %v2460, %v2636
        %v2718 = vmul.f32 %v2461, %v2640
        %v2719 = vmul.f32 %v2462, %v2642
        %v2720 = vmul.f32 %v2463, %v2646
        %v2721 = vmul.f32 %v2464, %v2648
        %v2722 = vmul.f32 %v2465, %v2652
        %v2723 = vmul.f32 %v2466, %v2654
        %v2724 = vmul.f32 %v2467, %v2658
        %v2725 = vmul.f32 %v2468, %v2660
        %v2726 = vmul.f32 %v2469, %v2664
        %v2727 = vmul.f32 %v2470, %v2666
        %v2728 = vmul.f32 %v2471, %v2670
        %v2729 = vmul.f32 %v2472, %v2672
        %v2730 = vmul.f32 %v2473, %v2676
        %v2731 = vmul.f32 %v2474, %v2678
        %v2732 = vmul.f32 %v2475, %v2682
        %v2733 = vmul.f32 %v2476, %v2684
        %v2734 = vmul.f32 %v2477, %v2688
        %v2735 = vmul.f32 %v2478, %v2690
        %v2736 = vmul.f32 %v2479, %v2694
        %v2737 = vmul.f32 %v2480, %v2696
        %v2738 = vmul.f32 %v2481, %v2700
        %v2739 = vmul.f32 %v2482, %v2702
        %v2740 = vmul.f32 %v2483, %v2706
        %v2741 = vmul.f32 %v2484, %v2708
        %v2742 = vadd.f32 %v2710, %v2711
        %v2743 = vadd.f32 %v2712, %v2713
        %v2744 = vadd.f32 %v2714, %v2715
        %v2745 = vadd.f32 %v2716, %v2717
        %v2746 = vadd.f32 %v2718, %v2719
        %v2747 = vadd.f32 %v2720, %v2721
        %v2748 = vadd.f32 %v2722, %v2723
        %v2749 = vadd.f32 %v2724, %v2725
        %v2750 = vadd.f32 %v2726, %v2727
        %v2751 = vadd.f32 %v2728, %v2729
        %v2752 = vadd.f32 %v2730, %v2731
        %v2753 = vadd.f32 %v2732, %v2733
        %v2754 = vadd.f32 %v2734, %v2735
        %v2755 = vadd.f32 %v2736, %v2737
        %v2756 = vadd.f32 %v2738, %v2739
        %v2757 = vadd.f32 %v2740, %v2741
        %v2758 = vtanh.pop %v2742
        %v2759 = vtanh.pop %v2743
        %v2760 = vtanh.pop %v2744
        %v2761 = vtanh.pop %v2745
        %v2762 = vtanh.pop %v2746
        %v2763 = vtanh.pop %v2747
        %v2764 = vtanh.pop %v2748
        %v2765 = vtanh.pop %v2749
        %v2766 = vtanh.pop %v2750
        %v2767 = vtanh.pop %v2751
        %v2768 = vtanh.pop %v2752
        %v2769 = vtanh.pop %v2753
        %v2770 = vtanh.pop %v2754
        %v2771 = vtanh.pop %v2755
        %v2772 = vtanh.pop %v2756
        %v2773 = vtanh.pop %v2757
        %v2774 = vld [vmem:[%s538] sm:$0xff]
        %v2775 = vld [vmem:[%s538 + $0x8] sm:$0xff]
        %v2776 = vld [vmem:[%s538 + $0x10] sm:$0xff]
        %v2777 = vld [vmem:[%s538 + $0x18] sm:$0xff]
        %v2778 = vld [vmem:[%s538 + $0x20] sm:$0xff]
        %v2779 = vld [vmem:[%s538 + $0x28] sm:$0xff]
        %v2780 = vld [vmem:[%s538 + $0x30] sm:$0xff]
        %v2781 = vld [vmem:[%s538 + $0x38] sm:$0xff]
        %v2782 = vld [vmem:[%s538 + $0x40] sm:$0xff]
        %v2783 = vld [vmem:[%s538 + $0x48] sm:$0xff]
        %v2784 = vld [vmem:[%s538 + $0x50] sm:$0xff]
        %v2785 = vld [vmem:[%s538 + $0x58] sm:$0xff]
        %v2786 = vld [vmem:[%s538 + $0x60] sm:$0xff]
        %v2787 = vld [vmem:[%s538 + $0x68] sm:$0xff]
        %v2788 = vld [vmem:[%s538 + $0x70] sm:$0xff]
        %v2789 = vld [vmem:[%s538 + $0x78] sm:$0xff]
        %2790 = vst [vmem:[#allocation5] sm:$0xff] %v2774
        %2791 = vst [vmem:[#allocation5 + $0x18] sm:$0xff] %v2775
        %2792 = vst [vmem:[#allocation5 + $0x30] sm:$0xff] %v2776
        %2793 = vst [vmem:[#allocation5 + $0x48] sm:$0xff] %v2777
        %2794 = vst [vmem:[#allocation5 + $0x60] sm:$0xff] %v2778
        %2795 = vst [vmem:[#allocation5 + $0x78] sm:$0xff] %v2779
        %2796 = vst [vmem:[#allocation5 + $0x90] sm:$0xff] %v2780
        %2797 = vst [vmem:[#allocation5 + $0xa8] sm:$0xff] %v2781
        %2798 = vst [vmem:[#allocation5 + $0xc0] sm:$0xff] %v2782
        %2799 = vst [vmem:[#allocation5 + $0xd8] sm:$0xff] %v2783
        %2800 = vst [vmem:[#allocation5 + $0xf0] sm:$0xff] %v2784
        %2801 = vst [vmem:[#allocation5 + $0x108] sm:$0xff] %v2785
        %2802 = vst [vmem:[#allocation5 + $0x120] sm:$0xff] %v2786
        %2803 = vst [vmem:[#allocation5 + $0x138] sm:$0xff] %v2787
        %2804 = vst [vmem:[#allocation5 + $0x150] sm:$0xff] %v2788
        %2805 = vst [vmem:[#allocation5 + $0x168] sm:$0xff] %v2789
        %2806 = vst [vmem:[#allocation5 + $0x8] sm:$0xff] %v2311
        %2807 = vst [vmem:[#allocation5 + $0x20] sm:$0xff] %v2316
        %2808 = vst [vmem:[#allocation5 + $0x38] sm:$0xff] %v2321
        %2809 = vst [vmem:[#allocation5 + $0x50] sm:$0xff] %v2326
        %2810 = vst [vmem:[#allocation5 + $0x68] sm:$0xff] %v2331
        %2811 = vst [vmem:[#allocation5 + $0x80] sm:$0xff] %v2336
        %2812 = vst [vmem:[#allocation5 + $0x98] sm:$0xff] %v2341
        %2813 = vst [vmem:[#allocation5 + $0xb0] sm:$0xff] %v2346
        %2814 = vst [vmem:[#allocation5 + $0xc8] sm:$0xff] %v2351
        %2815 = vst [vmem:[#allocation5 + $0xe0] sm:$0xff] %v2356
        %2816 = vst [vmem:[#allocation5 + $0xf8] sm:$0xff] %v2361
        %2817 = vst [vmem:[#allocation5 + $0x110] sm:$0xff] %v2366
        %2818 = vst [vmem:[#allocation5 + $0x128] sm:$0xff] %v2371
        %2819 = vst [vmem:[#allocation5 + $0x140] sm:$0xff] %v2376
        %2820 = vst [vmem:[#allocation5 + $0x158] sm:$0xff] %v2381
        %2821 = vst [vmem:[#allocation5 + $0x170] sm:$0xff] %v2386
        %2822 = vst [vmem:[#allocation5 + $0x10] sm:$0xff] %v2758
        %2823 = vst [vmem:[#allocation5 + $0x28] sm:$0xff] %v2759
        %2824 = vst [vmem:[#allocation5 + $0x40] sm:$0xff] %v2760
        %2825 = vst [vmem:[#allocation5 + $0x58] sm:$0xff] %v2761
        %2826 = vst [vmem:[#allocation5 + $0x70] sm:$0xff] %v2762
        %2827 = vst [vmem:[#allocation5 + $0x88] sm:$0xff] %v2763
        %2828 = vst [vmem:[#allocation5 + $0xa0] sm:$0xff] %v2764
        %2829 = vst [vmem:[#allocation5 + $0xb8] sm:$0xff] %v2765
        %2830 = vst [vmem:[#allocation5 + $0xd0] sm:$0xff] %v2766
        %2831 = vst [vmem:[#allocation5 + $0xe8] sm:$0xff] %v2767
        %2832 = vst [vmem:[#allocation5 + $0x100] sm:$0xff] %v2768
        %2833 = vst [vmem:[#allocation5 + $0x118] sm:$0xff] %v2769
        %2834 = vst [vmem:[#allocation5 + $0x130] sm:$0xff] %v2770
        %2835 = vst [vmem:[#allocation5 + $0x148] sm:$0xff] %v2771
        %2836 = vst [vmem:[#allocation5 + $0x160] sm:$0xff] %v2772
        %2837 = vst [vmem:[#allocation5 + $0x178] sm:$0xff] %v2773
        %v2838 = vld [vmem:[#allocation5] sm:$0xff]
        %v2839 = vld [vmem:[#allocation5 + $0x8] sm:$0xff]
        %v2840 = vld [vmem:[#allocation5 + $0x10] sm:$0xff]
        %v2841 = vld [vmem:[#allocation5 + $0x18] sm:$0xff]
        %v2842 = vld [vmem:[#allocation5 + $0x20] sm:$0xff]
        %v2843 = vld [vmem:[#allocation5 + $0x28] sm:$0xff]
        %v2844 = vld [vmem:[#allocation5 + $0x30] sm:$0xff]
        %v2845 = vld [vmem:[#allocation5 + $0x38] sm:$0xff]
        %v2846 = vld [vmem:[#allocation5 + $0x40] sm:$0xff]
        %v2847 = vld [vmem:[#allocation5 + $0x48] sm:$0xff]
        %v2848 = vld [vmem:[#allocation5 + $0x50] sm:$0xff]
        %v2849 = vld [vmem:[#allocation5 + $0x58] sm:$0xff]
        %v2850 = vld [vmem:[#allocation5 + $0x60] sm:$0xff]
        %v2851 = vld [vmem:[#allocation5 + $0x68] sm:$0xff]
        %v2852 = vld [vmem:[#allocation5 + $0x70] sm:$0xff]
        %v2853 = vld [vmem:[#allocation5 + $0x78] sm:$0xff]
        %v2854 = vld [vmem:[#allocation5 + $0x80] sm:$0xff]
        %v2855 = vld [vmem:[#allocation5 + $0x88] sm:$0xff]
        %v2856 = vld [vmem:[#allocation5 + $0x90] sm:$0xff]
        %v2857 = vld [vmem:[#allocation5 + $0x98] sm:$0xff]
        %v2858 = vld [vmem:[#allocation5 + $0xa0] sm:$0xff]
        %v2859 = vld [vmem:[#allocation5 + $0xa8] sm:$0xff]
        %v2860 = vld [vmem:[#allocation5 + $0xb0] sm:$0xff]
        %v2861 = vld [vmem:[#allocation5 + $0xb8] sm:$0xff]
        %v2862 = vld [vmem:[#allocation5 + $0xc0] sm:$0xff]
        %v2863 = vld [vmem:[#allocation5 + $0xc8] sm:$0xff]
        %v2864 = vld [vmem:[#allocation5 + $0xd0] sm:$0xff]
        %v2865 = vld [vmem:[#allocation5 + $0xd8] sm:$0xff]
        %v2866 = vld [vmem:[#allocation5 + $0xe0] sm:$0xff]
        %v2867 = vld [vmem:[#allocation5 + $0xe8] sm:$0xff]
        %v2868 = vld [vmem:[#allocation5 + $0xf0] sm:$0xff]
        %v2869 = vld [vmem:[#allocation5 + $0xf8] sm:$0xff]
        %v2870 = vld [vmem:[#allocation5 + $0x100] sm:$0xff]
        %v2871 = vld [vmem:[#allocation5 + $0x108] sm:$0xff]
        %v2872 = vld [vmem:[#allocation5 + $0x110] sm:$0xff]
        %v2873 = vld [vmem:[#allocation5 + $0x118] sm:$0xff]
        %v2874 = vld [vmem:[#allocation5 + $0x120] sm:$0xff]
        %v2875 = vld [vmem:[#allocation5 + $0x128] sm:$0xff]
        %v2876 = vld [vmem:[#allocation5 + $0x130] sm:$0xff]
        %v2877 = vld [vmem:[#allocation5 + $0x138] sm:$0xff]
        %v2878 = vld [vmem:[#allocation5 + $0x140] sm:$0xff]
        %v2879 = vld [vmem:[#allocation5 + $0x148] sm:$0xff]
        %v2880 = vld [vmem:[#allocation5 + $0x150] sm:$0xff]
        %v2881 = vld [vmem:[#allocation5 + $0x158] sm:$0xff]
        %v2882 = vld [vmem:[#allocation5 + $0x160] sm:$0xff]
        %v2883 = vld [vmem:[#allocation5 + $0x168] sm:$0xff]
        %v2884 = vld [vmem:[#allocation5 + $0x170] sm:$0xff]
        %v2885 = vld [vmem:[#allocation5 + $0x178] sm:$0xff]
        %v2886 = vld [vmem:[%s7] sm:$0xff]
        %v2887 = vld [vmem:[%s7 + $0x8] sm:$0xff]
        %v2888 = vld [vmem:[%s7 + $0x10] sm:$0xff]
        %v2889 = vld [vmem:[%s7 + $0x18] sm:$0xff]
        %v2890 = vld [vmem:[%s7 + $0x20] sm:$0xff]
        %v2891 = vld [vmem:[%s7 + $0x28] sm:$0xff]
        %v2892 = vld [vmem:[%s7 + $0x30] sm:$0xff]
        %v2893 = vld [vmem:[%s7 + $0x38] sm:$0xff]
        %v2894 = vld [vmem:[%s7 + $0x40] sm:$0xff]
        %v2895 = vld [vmem:[%s7 + $0x48] sm:$0xff]
        %v2896 = vld [vmem:[%s7 + $0x50] sm:$0xff]
        %v2897 = vld [vmem:[%s7 + $0x58] sm:$0xff]
        %v2898 = vld [vmem:[%s7 + $0x60] sm:$0xff]
        %v2899 = vld [vmem:[%s7 + $0x68] sm:$0xff]
        %v2900 = vld [vmem:[%s7 + $0x70] sm:$0xff]
        %v2901 = vld [vmem:[%s7 + $0x78] sm:$0xff]
        %v2902 = vld [vmem:[%s7 + $0x80] sm:$0xff]
        %v2903 = vld [vmem:[%s7 + $0x88] sm:$0xff]
        %v2904 = vld [vmem:[%s7 + $0x90] sm:$0xff]
        %v2905 = vld [vmem:[%s7 + $0x98] sm:$0xff]
        %v2906 = vld [vmem:[%s7 + $0xa0] sm:$0xff]
        %v2907 = vld [vmem:[%s7 + $0xa8] sm:$0xff]
        %v2908 = vld [vmem:[%s7 + $0xb0] sm:$0xff]
        %v2909 = vld [vmem:[%s7 + $0xb8] sm:$0xff]
        %v2910 = vld [vmem:[%s7 + $0xc0] sm:$0xff]
        %v2911 = vld [vmem:[%s7 + $0xc8] sm:$0xff]
        %v2912 = vld [vmem:[%s7 + $0xd0] sm:$0xff]
        %v2913 = vld [vmem:[%s7 + $0xd8] sm:$0xff]
        %v2914 = vld [vmem:[%s7 + $0xe0] sm:$0xff]
        %v2915 = vld [vmem:[%s7 + $0xe8] sm:$0xff]
        %v2916 = vld [vmem:[%s7 + $0xf0] sm:$0xff]
        %v2917 = vld [vmem:[%s7 + $0xf8] sm:$0xff]
        %v2918 = vld [vmem:[%s7 + $0x100] sm:$0xff]
        %v2919 = vld [vmem:[%s7 + $0x108] sm:$0xff]
        %v2920 = vld [vmem:[%s7 + $0x110] sm:$0xff]
        %v2921 = vld [vmem:[%s7 + $0x118] sm:$0xff]
        %v2922 = vld [vmem:[%s7 + $0x120] sm:$0xff]
        %v2923 = vld [vmem:[%s7 + $0x128] sm:$0xff]
        %v2924 = vld [vmem:[%s7 + $0x130] sm:$0xff]
        %v2925 = vld [vmem:[%s7 + $0x138] sm:$0xff]
        %v2926 = vld [vmem:[%s7 + $0x140] sm:$0xff]
        %v2927 = vld [vmem:[%s7 + $0x148] sm:$0xff]
        %v2928 = vld [vmem:[%s7 + $0x150] sm:$0xff]
        %v2929 = vld [vmem:[%s7 + $0x158] sm:$0xff]
        %v2930 = vld [vmem:[%s7 + $0x160] sm:$0xff]
        %v2931 = vld [vmem:[%s7 + $0x168] sm:$0xff]
        %v2932 = vld [vmem:[%s7 + $0x170] sm:$0xff]
        %v2933 = vld [vmem:[%s7 + $0x178] sm:$0xff]
        %v2934 = vld [vmem:[%s8] sm:$0x1]
        %v2936 = vlaneseq
        %v2937 = vshrl.u32 %v2936, 7
        %v2938 = vsub.s32 0, %v2937
        %v2939 = vrot.slane %v2934, %v2938
        %2941 = vmatprep.subr.mxu0 0.0
        %2942 = vmatpush1.msra.mxu0 %v2886
        %2943 = vmatprep.subr.mxu0 0.0
        %2944 = vmatpush1.msra.mxu0 %v2887
        %2945 = vmatprep.subr.mxu0 0.0
        %2946 = vmatpush1.msra.mxu0 %v2888
        %2947 = vmatprep.subr.mxu0 0.0
        %2948 = vmatpush1.msra.mxu0 %v2889
        %2949 = vmatprep.subr.mxu0 0.0
        %2950 = vmatpush1.msra.mxu0 %v2890
        %2951 = vmatprep.subr.mxu0 0.0
        %2952 = vmatpush1.msra.mxu0 %v2891
        %2953 = vmatprep.subr.mxu0 0.0
        %2954 = vmatpush1.msra.mxu0 %v2892
        %2955 = vmatprep.subr.mxu0 0.0
        %2956 = vmatpush1.msra.mxu0 %v2893
        %2957 = vmatprep.subr.mxu0 0.0
        %2958 = vmatpush1.msra.mxu0 %v2894
        %2959 = vmatprep.subr.mxu0 0.0
        %2960 = vmatpush1.msra.mxu0 %v2895
        %2961 = vmatprep.subr.mxu0 0.0
        %2962 = vmatpush1.msra.mxu0 %v2896
        %2963 = vmatprep.subr.mxu0 0.0
        %2964 = vmatpush1.msra.mxu0 %v2897
        %2965 = vmatprep.subr.mxu0 0.0
        %2966 = vmatpush1.msra.mxu0 %v2898
        %2967 = vmatprep.subr.mxu0 0.0
        %2968 = vmatpush1.msra.mxu0 %v2899
        %2969 = vmatprep.subr.mxu0 0.0
        %2970 = vmatpush1.msra.mxu0 %v2900
        %2971 = vmatprep.subr.mxu0 0.0
        %2972 = vmatpush1.msra.mxu0 %v2901
        %2973 = vmatprep.subr.mxu0 0.0
        %2974 = vmatpush1.msra.mxu0 %v2902
        %2975 = vmatprep.subr.mxu0 0.0
        %2976 = vmatpush1.msra.mxu0 %v2903
        %2977 = vmatprep.subr.mxu0 0.0
        %2978 = vmatpush1.msra.mxu0 %v2904
        %2979 = vmatprep.subr.mxu0 0.0
        %2980 = vmatpush1.msra.mxu0 %v2905
        %2981 = vmatprep.subr.mxu0 0.0
        %2982 = vmatpush1.msra.mxu0 %v2906
        %2983 = vmatprep.subr.mxu0 0.0
        %2984 = vmatpush1.msra.mxu0 %v2907
        %2985 = vmatprep.subr.mxu0 0.0
        %2986 = vmatpush1.msra.mxu0 %v2908
        %2987 = vmatprep.subr.mxu0 0.0
        %2988 = vmatpush1.msra.mxu0 %v2909
        %2989 = vmatprep.subr.mxu0 0.0
        %2990 = vmatpush1.msra.mxu0 %v2910
        %2991 = vmatprep.subr.mxu0 0.0
        %2992 = vmatpush1.msra.mxu0 %v2911
        %2993 = vmatprep.subr.mxu0 0.0
        %2994 = vmatpush1.msra.mxu0 %v2912
        %2995 = vmatprep.subr.mxu0 0.0
        %2996 = vmatpush1.msra.mxu0 %v2913
        %2997 = vmatprep.subr.mxu0 0.0
        %2998 = vmatpush1.msra.mxu0 %v2914
        %2999 = vmatprep.subr.mxu0 0.0
        %3000 = vmatpush1.msra.mxu0 %v2915
        %3001 = vmatprep.subr.mxu0 0.0
        %3002 = vmatpush1.msra.mxu0 %v2916
        %3003 = vmatprep.subr.mxu0 0.0
        %3004 = vmatpush1.msra.mxu0 %v2917
        %3005 = vmatprep.mubr.f32.mxu0 %v2839
        %3006 = vmatmul.mubr.f32.gmra.mrb[0].mxu0 %v2838
        %v3007 = vpop.f32.mrb[0].mxu0
        %v3008 = vadd.f32 %v2939, %v3007
        %v3009 = vpop.f32.mrb[0].mxu0
        %3010 = vmatprep.mubr.f32.mxu0 %v2842
        %3011 = vmatmul.mubr.f32.gmra.mrb[0].mxu0 %v2841
        %v3012 = vpop.f32.mrb[0].mxu0
        %v3013 = vadd.f32 %v2939, %v3012
        %v3014 = vpop.f32.mrb[0].mxu0
        %3015 = vmatprep.mubr.f32.mxu0 %v2845
        %3016 = vmatmul.mubr.f32.gmra.mrb[0].mxu0 %v2844
        %v3017 = vpop.f32.mrb[0].mxu0
        %v3018 = vadd.f32 %v2939, %v3017
        %v3019 = vpop.f32.mrb[0].mxu0
        %3020 = vmatprep.mubr.f32.mxu0 %v2848
        %3021 = vmatmul.mubr.f32.gmra.mrb[0].mxu0 %v2847
        %v3022 = vpop.f32.mrb[0].mxu0
        %v3023 = vadd.f32 %v2939, %v3022
        %v3024 = vpop.f32.mrb[0].mxu0
        %3025 = vmatprep.mubr.f32.mxu0 %v2851
        %3026 = vmatmul.mubr.f32.gmra.mrb[0].mxu0 %v2850
        %v3027 = vpop.f32.mrb[0].mxu0
        %v3028 = vadd.f32 %v2939, %v3027
        %v3029 = vpop.f32.mrb[0].mxu0
        %3030 = vmatprep.mubr.f32.mxu0 %v2854
        %3031 = vmatmul.mubr.f32.gmra.mrb[0].mxu0 %v2853
        %v3032 = vpop.f32.mrb[0].mxu0
        %v3033 = vadd.f32 %v2939, %v3032
        %v3034 = vpop.f32.mrb[0].mxu0
        %3035 = vmatprep.mubr.f32.mxu0 %v2857
        %3036 = vmatmul.mubr.f32.gmra.mrb[0].mxu0 %v2856
        %v3037 = vpop.f32.mrb[0].mxu0
        %v3038 = vadd.f32 %v2939, %v3037
        %v3039 = vpop.f32.mrb[0].mxu0
        %3040 = vmatprep.mubr.f32.mxu0 %v2860
        %3041 = vmatmul.mubr.f32.gmra.mrb[0].mxu0 %v2859
        %v3042 = vpop.f32.mrb[0].mxu0
        %v3043 = vadd.f32 %v2939, %v3042
        %v3044 = vpop.f32.mrb[0].mxu0
        %3045 = vmatprep.mubr.f32.mxu0 %v2863
        %3046 = vmatmul.mubr.f32.gmra.mrb[0].mxu0 %v2862
        %v3047 = vpop.f32.mrb[0].mxu0
        %v3048 = vadd.f32 %v2939, %v3047
        %v3049 = vpop.f32.mrb[0].mxu0
        %3050 = vmatprep.mubr.f32.mxu0 %v2866
        %3051 = vmatmul.mubr.f32.gmra.mrb[0].mxu0 %v2865
        %v3052 = vpop.f32.mrb[0].mxu0
        %v3053 = vadd.f32 %v2939, %v3052
        %v3054 = vpop.f32.mrb[0].mxu0
        %3055 = vmatprep.mubr.f32.mxu0 %v2869
        %3056 = vmatmul.mubr.f32.gmra.mrb[0].mxu0 %v2868
        %v3057 = vpop.f32.mrb[0].mxu0
        %v3058 = vadd.f32 %v2939, %v3057
        %v3059 = vpop.f32.mrb[0].mxu0
        %3060 = vmatprep.mubr.f32.mxu0 %v2872
        %3061 = vmatmul.mubr.f32.gmra.mrb[0].mxu0 %v2871
        %v3062 = vpop.f32.mrb[0].mxu0
        %v3063 = vadd.f32 %v2939, %v3062
        %v3064 = vpop.f32.mrb[0].mxu0
        %3065 = vmatprep.mubr.f32.mxu0 %v2875
        %3066 = vmatmul.mubr.f32.gmra.mrb[0].mxu0 %v2874
        %v3067 = vpop.f32.mrb[0].mxu0
        %v3068 = vadd.f32 %v2939, %v3067
        %v3069 = vpop.f32.mrb[0].mxu0
        %3070 = vmatprep.mubr.f32.mxu0 %v2878
        %3071 = vmatmul.mubr.f32.gmra.mrb[0].mxu0 %v2877
        %v3072 = vpop.f32.mrb[0].mxu0
        %v3073 = vadd.f32 %v2939, %v3072
        %v3074 = vpop.f32.mrb[0].mxu0
        %3075 = vmatprep.mubr.f32.mxu0 %v2881
        %3076 = vmatmul.mubr.f32.gmra.mrb[0].mxu0 %v2880
        %v3077 = vpop.f32.mrb[0].mxu0
        %v3078 = vadd.f32 %v2939, %v3077
        %v3079 = vpop.f32.mrb[0].mxu0
        %3080 = vmatprep.mubr.f32.mxu0 %v2884
        %3081 = vmatmul.mubr.f32.gmra.mrb[0].mxu0 %v2883
        %v3082 = vpop.f32.mrb[0].mxu0
        %v3083 = vadd.f32 %v2939, %v3082
        %v3084 = vpop.f32.mrb[0].mxu0
        %3085 = vdwg.mxu0
        %3086 = vmatprep.subr.mxu0 0.0
        %3087 = vmatpush1.msra.mxu0 %v2918
        %3088 = vmatprep.subr.mxu0 0.0
        %3089 = vmatpush1.msra.mxu0 %v2919
        %3090 = vmatprep.subr.mxu0 0.0
        %3091 = vmatpush1.msra.mxu0 %v2920
        %3092 = vmatprep.subr.mxu0 0.0
        %3093 = vmatpush1.msra.mxu0 %v2921
        %3094 = vmatprep.subr.mxu0 0.0
        %3095 = vmatpush1.msra.mxu0 %v2922
        %3096 = vmatprep.subr.mxu0 0.0
        %3097 = vmatpush1.msra.mxu0 %v2923
        %3098 = vmatprep.subr.mxu0 0.0
        %3099 = vmatpush1.msra.mxu0 %v2924
        %3100 = vmatprep.subr.mxu0 0.0
        %3101 = vmatpush1.msra.mxu0 %v2925
        %3102 = vmatprep.subr.mxu0 0.0
        %3103 = vmatpush1.msra.mxu0 %v2926
        %3104 = vmatprep.subr.mxu0 0.0
        %3105 = vmatpush1.msra.mxu0 %v2927
        %3106 = vmatprep.subr.mxu0 0.0
        %3107 = vmatpush1.msra.mxu0 %v2928
        %3108 = vmatprep.subr.mxu0 0.0
        %3109 = vmatpush1.msra.mxu0 %v2929
        %3110 = vmatprep.subr.mxu0 0.0
        %3111 = vmatpush1.msra.mxu0 %v2930
        %3112 = vmatprep.subr.mxu0 0.0
        %3113 = vmatpush1.msra.mxu0 %v2931
        %3114 = vmatprep.subr.mxu0 0.0
        %3115 = vmatpush1.msra.mxu0 %v2932
        %3116 = vmatprep.subr.mxu0 0.0
        %3117 = vmatpush1.msra.mxu0 %v2933
        %3118 = vmatprep.subr.mxu0 0.0
        %3119 = vmatpush1.msra.mxu0 0.0
        %3120 = vmatprep.subr.mxu0 0.0
        %3121 = vmatpush1.msra.mxu0 0.0
        %3122 = vmatprep.subr.mxu0 0.0
        %3123 = vmatpush1.msra.mxu0 0.0
        %3124 = vmatprep.subr.mxu0 0.0
        %3125 = vmatpush1.msra.mxu0 0.0
        %3126 = vmatprep.subr.mxu0 0.0
        %3127 = vmatpush1.msra.mxu0 0.0
        %3128 = vmatprep.subr.mxu0 0.0
        %3129 = vmatpush1.msra.mxu0 0.0
        %3130 = vmatprep.subr.mxu0 0.0
        %3131 = vmatpush1.msra.mxu0 0.0
        %3132 = vmatprep.subr.mxu0 0.0
        %3133 = vmatpush1.msra.mxu0 0.0
        %3134 = vmatprep.subr.mxu0 0.0
        %3135 = vmatpush1.msra.mxu0 0.0
        %3136 = vmatprep.subr.mxu0 0.0
        %3137 = vmatpush1.msra.mxu0 0.0
        %3138 = vmatprep.subr.mxu0 0.0
        %3139 = vmatpush1.msra.mxu0 0.0
        %3140 = vmatprep.subr.mxu0 0.0
        %3141 = vmatpush1.msra.mxu0 0.0
        %3142 = vmatprep.subr.mxu0 0.0
        %3143 = vmatpush1.msra.mxu0 0.0
        %3144 = vmatprep.subr.mxu0 0.0
        %3145 = vmatpush1.msra.mxu0 0.0
        %3146 = vmatprep.subr.mxu0 0.0
        %3147 = vmatpush1.msra.mxu0 0.0
        %3148 = vmatprep.subr.mxu0 0.0
        %3149 = vmatpush1.msra.mxu0 0.0
        %3150 = vmatprep.mubr.f32.mxu0 0.0
        %3151 = vmatmul.mubr.f32.gmra.mrb[0].mxu0 %v2840
        %v3152 = vpop.f32.mrb[0].mxu0
        %v3153 = vadd.f32 %v3008, %v3152
        %v3154 = vpop.f32.mrb[0].mxu0
        %3155 = vmatprep.mubr.f32.mxu0 0.0
        %3156 = vmatmul.mubr.f32.gmra.mrb[0].mxu0 %v2843
        %v3157 = vpop.f32.mrb[0].mxu0
        %v3158 = vadd.f32 %v3013, %v3157
        %v3159 = vpop.f32.mrb[0].mxu0
        %3160 = vmatprep.mubr.f32.mxu0 0.0
        %3161 = vmatmul.mubr.f32.gmra.mrb[0].mxu0 %v2846
        %v3162 = vpop.f32.mrb[0].mxu0
        %v3163 = vadd.f32 %v3018, %v3162
        %v3164 = vpop.f32.mrb[0].mxu0
        %3165 = vmatprep.mubr.f32.mxu0 0.0
        %3166 = vmatmul.mubr.f32.gmra.mrb[0].mxu0 %v2849
        %v3167 = vpop.f32.mrb[0].mxu0
        %v3168 = vadd.f32 %v3023, %v3167
        %v3169 = vpop.f32.mrb[0].mxu0
        %3170 = vmatprep.mubr.f32.mxu0 0.0
        %3171 = vmatmul.mubr.f32.gmra.mrb[0].mxu0 %v2852
        %v3172 = vpop.f32.mrb[0].mxu0
        %v3173 = vadd.f32 %v3028, %v3172
        %v3174 = vpop.f32.mrb[0].mxu0
        %3175 = vmatprep.mubr.f32.mxu0 0.0
        %3176 = vmatmul.mubr.f32.gmra.mrb[0].mxu0 %v2855
        %v3177 = vpop.f32.mrb[0].mxu0
        %v3178 = vadd.f32 %v3033, %v3177
        %v3179 = vpop.f32.mrb[0].mxu0
        %3180 = vmatprep.mubr.f32.mxu0 0.0
        %3181 = vmatmul.mubr.f32.gmra.mrb[0].mxu0 %v2858
        %v3182 = vpop.f32.mrb[0].mxu0
        %v3183 = vadd.f32 %v3038, %v3182
        %v3184 = vpop.f32.mrb[0].mxu0
        %3185 = vmatprep.mubr.f32.mxu0 0.0
        %3186 = vmatmul.mubr.f32.gmra.mrb[0].mxu0 %v2861
        %v3187 = vpop.f32.mrb[0].mxu0
        %v3188 = vadd.f32 %v3043, %v3187
        %v3189 = vpop.f32.mrb[0].mxu0
        %3190 = vmatprep.mubr.f32.mxu0 0.0
        %3191 = vmatmul.mubr.f32.gmra.mrb[0].mxu0 %v2864
        %v3192 = vpop.f32.mrb[0].mxu0
        %v3193 = vadd.f32 %v3048, %v3192
        %v3194 = vpop.f32.mrb[0].mxu0
        %3195 = vmatprep.mubr.f32.mxu0 0.0
        %3196 = vmatmul.mubr.f32.gmra.mrb[0].mxu0 %v2867
        %v3197 = vpop.f32.mrb[0].mxu0
        %v3198 = vadd.f32 %v3053, %v3197
        %v3199 = vpop.f32.mrb[0].mxu0
        %3200 = vmatprep.mubr.f32.mxu0 0.0
        %3201 = vmatmul.mubr.f32.gmra.mrb[0].mxu0 %v2870
        %v3202 = vpop.f32.mrb[0].mxu0
        %v3203 = vadd.f32 %v3058, %v3202
        %v3204 = vpop.f32.mrb[0].mxu0
        %3205 = vmatprep.mubr.f32.mxu0 0.0
        %3206 = vmatmul.mubr.f32.gmra.mrb[0].mxu0 %v2873
        %v3207 = vpop.f32.mrb[0].mxu0
        %v3208 = vadd.f32 %v3063, %v3207
        %v3209 = vpop.f32.mrb[0].mxu0
        %3210 = vmatprep.mubr.f32.mxu0 0.0
        %3211 = vmatmul.mubr.f32.gmra.mrb[0].mxu0 %v2876
        %v3212 = vpop.f32.mrb[0].mxu0
        %v3213 = vadd.f32 %v3068, %v3212
        %v3214 = vpop.f32.mrb[0].mxu0
        %3215 = vmatprep.mubr.f32.mxu0 0.0
        %3216 = vmatmul.mubr.f32.gmra.mrb[0].mxu0 %v2879
        %v3217 = vpop.f32.mrb[0].mxu0
        %v3218 = vadd.f32 %v3073, %v3217
        %v3219 = vpop.f32.mrb[0].mxu0
        %3220 = vmatprep.mubr.f32.mxu0 0.0
        %3221 = vmatmul.mubr.f32.gmra.mrb[0].mxu0 %v2882
        %v3222 = vpop.f32.mrb[0].mxu0
        %v3223 = vadd.f32 %v3078, %v3222
        %v3224 = vpop.f32.mrb[0].mxu0
        %3225 = vmatprep.mubr.f32.mxu0 0.0
        %3226 = vmatmul.mubr.f32.gmra.mrb[0].mxu0 %v2885
        %v3227 = vpop.f32.mrb[0].mxu0
        %v3228 = vadd.f32 %v3083, %v3227
        %v3229 = vpop.f32.mrb[0].mxu0
        %3230 = vdwg.mxu0
        %v3231 = vmax.f32 %v3153, 0.0
        %v3232 = vmax.f32 %v3158, 0.0
        %v3233 = vmax.f32 %v3163, 0.0
        %v3234 = vmax.f32 %v3168, 0.0
        %v3235 = vmax.f32 %v3173, 0.0
        %v3236 = vmax.f32 %v3178, 0.0
        %v3237 = vmax.f32 %v3183, 0.0
        %v3238 = vmax.f32 %v3188, 0.0
        %v3239 = vmax.f32 %v3193, 0.0
        %v3240 = vmax.f32 %v3198, 0.0
        %v3241 = vmax.f32 %v3203, 0.0
        %v3242 = vmax.f32 %v3208, 0.0
        %v3243 = vmax.f32 %v3213, 0.0
        %v3244 = vmax.f32 %v3218, 0.0
        %v3245 = vmax.f32 %v3223, 0.0
        %v3246 = vmax.f32 %v3228, 0.0
        %v3247 = vld [vmem:[%s9] sm:$0xff]
        %v3248 = vld [vmem:[%s9 + $0x8] sm:$0xff]
        %v3249 = vld [vmem:[%s9 + $0x10] sm:$0xff]
        %v3250 = vld [vmem:[%s9 + $0x18] sm:$0xff]
        %v3251 = vld [vmem:[%s9 + $0x20] sm:$0xff]
        %v3252 = vld [vmem:[%s9 + $0x28] sm:$0xff]
        %v3253 = vld [vmem:[%s9 + $0x30] sm:$0xff]
        %v3254 = vld [vmem:[%s9 + $0x38] sm:$0xff]
        %v3255 = vld [vmem:[%s9 + $0x40] sm:$0xff]
        %v3256 = vld [vmem:[%s9 + $0x48] sm:$0xff]
        %v3257 = vld [vmem:[%s9 + $0x50] sm:$0xff]
        %v3258 = vld [vmem:[%s9 + $0x58] sm:$0xff]
        %v3259 = vld [vmem:[%s9 + $0x60] sm:$0xff]
        %v3260 = vld [vmem:[%s9 + $0x68] sm:$0xff]
        %v3261 = vld [vmem:[%s9 + $0x70] sm:$0xff]
        %v3262 = vld [vmem:[%s9 + $0x78] sm:$0xff]
        %v3263 = vld [vmem:[%s10] sm:$0x1]
        %v3265 = vlaneseq
        %v3266 = vshrl.u32 %v3265, 7
        %v3267 = vsub.s32 0, %v3266
        %v3268 = vrot.slane %v3263, %v3267
        %3270 = vmatprep.subr.mxu0 0.0
        %3271 = vmatpush1.msra.mxu0 %v3247
        %3272 = vmatprep.subr.mxu0 0.0
        %3273 = vmatpush1.msra.mxu0 %v3248
        %3274 = vmatprep.subr.mxu0 0.0
        %3275 = vmatpush1.msra.mxu0 %v3249
        %3276 = vmatprep.subr.mxu0 0.0
        %3277 = vmatpush1.msra.mxu0 %v3250
        %3278 = vmatprep.subr.mxu0 0.0
        %3279 = vmatpush1.msra.mxu0 %v3251
        %3280 = vmatprep.subr.mxu0 0.0
        %3281 = vmatpush1.msra.mxu0 %v3252
        %3282 = vmatprep.subr.mxu0 0.0
        %3283 = vmatpush1.msra.mxu0 %v3253
        %3284 = vmatprep.subr.mxu0 0.0
        %3285 = vmatpush1.msra.mxu0 %v3254
        %3286 = vmatprep.subr.mxu0 0.0
        %3287 = vmatpush1.msra.mxu0 %v3255
        %3288 = vmatprep.subr.mxu0 0.0
        %3289 = vmatpush1.msra.mxu0 %v3256
        %3290 = vmatprep.subr.mxu0 0.0
        %3291 = vmatpush1.msra.mxu0 %v3257
        %3292 = vmatprep.subr.mxu0 0.0
        %3293 = vmatpush1.msra.mxu0 %v3258
        %3294 = vmatprep.subr.mxu0 0.0
        %3295 = vmatpush1.msra.mxu0 %v3259
        %3296 = vmatprep.subr.mxu0 0.0
        %3297 = vmatpush1.msra.mxu0 %v3260
        %3298 = vmatprep.subr.mxu0 0.0
        %3299 = vmatpush1.msra.mxu0 %v3261
        %3300 = vmatprep.subr.mxu0 0.0
        %3301 = vmatpush1.msra.mxu0 %v3262
        %3302 = vmatprep.subr.mxu0 0.0
        %3303 = vmatpush1.msra.mxu0 0.0
        %3304 = vmatprep.subr.mxu0 0.0
        %3305 = vmatpush1.msra.mxu0 0.0
        %3306 = vmatprep.subr.mxu0 0.0
        %3307 = vmatpush1.msra.mxu0 0.0
        %3308 = vmatprep.subr.mxu0 0.0
        %3309 = vmatpush1.msra.mxu0 0.0
        %3310 = vmatprep.subr.mxu0 0.0
        %3311 = vmatpush1.msra.mxu0 0.0
        %3312 = vmatprep.subr.mxu0 0.0
        %3313 = vmatpush1.msra.mxu0 0.0
        %3314 = vmatprep.subr.mxu0 0.0
        %3315 = vmatpush1.msra.mxu0 0.0
        %3316 = vmatprep.subr.mxu0 0.0
        %3317 = vmatpush1.msra.mxu0 0.0
        %3318 = vmatprep.subr.mxu0 0.0
        %3319 = vmatpush1.msra.mxu0 0.0
        %3320 = vmatprep.subr.mxu0 0.0
        %3321 = vmatpush1.msra.mxu0 0.0
        %3322 = vmatprep.subr.mxu0 0.0
        %3323 = vmatpush1.msra.mxu0 0.0
        %3324 = vmatprep.subr.mxu0 0.0
        %3325 = vmatpush1.msra.mxu0 0.0
        %3326 = vmatprep.subr.mxu0 0.0
        %3327 = vmatpush1.msra.mxu0 0.0
        %3328 = vmatprep.subr.mxu0 0.0
        %3329 = vmatpush1.msra.mxu0 0.0
        %3330 = vmatprep.subr.mxu0 0.0
        %3331 = vmatpush1.msra.mxu0 0.0
        %3332 = vmatprep.subr.mxu0 0.0
        %3333 = vmatpush1.msra.mxu0 0.0
        %3334 = vmatprep.mubr.f32.mxu0 0.0
        %3335 = vmatmul.mubr.f32.gmra.mrb[0].mxu0 %v3231
        %v3336 = vpop.f32.mrb[0].mxu0
        %v3337 = vadd.f32 %v3268, %v3336
        %v3338 = vpop.f32.mrb[0].mxu0
        %3339 = vmatprep.mubr.f32.mxu0 0.0
        %3340 = vmatmul.mubr.f32.gmra.mrb[0].mxu0 %v3232
        %v3341 = vpop.f32.mrb[0].mxu0
        %v3342 = vadd.f32 %v3268, %v3341
        %v3343 = vpop.f32.mrb[0].mxu0
        %3344 = vmatprep.mubr.f32.mxu0 0.0
        %3345 = vmatmul.mubr.f32.gmra.mrb[0].mxu0 %v3233
        %v3346 = vpop.f32.mrb[0].mxu0
        %v3347 = vadd.f32 %v3268, %v3346
        %v3348 = vpop.f32.mrb[0].mxu0
        %3349 = vmatprep.mubr.f32.mxu0 0.0
        %3350 = vmatmul.mubr.f32.gmra.mrb[0].mxu0 %v3234
        %v3351 = vpop.f32.mrb[0].mxu0
        %v3352 = vadd.f32 %v3268, %v3351
        %v3353 = vpop.f32.mrb[0].mxu0
        %3354 = vmatprep.mubr.f32.mxu0 0.0
        %3355 = vmatmul.mubr.f32.gmra.mrb[0].mxu0 %v3235
        %v3356 = vpop.f32.mrb[0].mxu0
        %v3357 = vadd.f32 %v3268, %v3356
        %v3358 = vpop.f32.mrb[0].mxu0
        %3359 = vmatprep.mubr.f32.mxu0 0.0
        %3360 = vmatmul.mubr.f32.gmra.mrb[0].mxu0 %v3236
        %v3361 = vpop.f32.mrb[0].mxu0
        %v3362 = vadd.f32 %v3268, %v3361
        %v3363 = vpop.f32.mrb[0].mxu0
        %3364 = vmatprep.mubr.f32.mxu0 0.0
        %3365 = vmatmul.mubr.f32.gmra.mrb[0].mxu0 %v3237
        %v3366 = vpop.f32.mrb[0].mxu0
        %v3367 = vadd.f32 %v3268, %v3366
        %v3368 = vpop.f32.mrb[0].mxu0
        %3369 = vmatprep.mubr.f32.mxu0 0.0
        %3370 = vmatmul.mubr.f32.gmra.mrb[0].mxu0 %v3238
        %v3371 = vpop.f32.mrb[0].mxu0
        %v3372 = vadd.f32 %v3268, %v3371
        %v3373 = vpop.f32.mrb[0].mxu0
        %3374 = vmatprep.mubr.f32.mxu0 0.0
        %3375 = vmatmul.mubr.f32.gmra.mrb[0].mxu0 %v3239
        %v3376 = vpop.f32.mrb[0].mxu0
        %v3377 = vadd.f32 %v3268, %v3376
        %v3378 = vpop.f32.mrb[0].mxu0
        %3379 = vmatprep.mubr.f32.mxu0 0.0
        %3380 = vmatmul.mubr.f32.gmra.mrb[0].mxu0 %v3240
        %v3381 = vpop.f32.mrb[0].mxu0
        %v3382 = vadd.f32 %v3268, %v3381
        %v3383 = vpop.f32.mrb[0].mxu0
        %3384 = vmatprep.mubr.f32.mxu0 0.0
        %3385 = vmatmul.mubr.f32.gmra.mrb[0].mxu0 %v3241
        %v3386 = vpop.f32.mrb[0].mxu0
        %v3387 = vadd.f32 %v3268, %v3386
        %v3388 = vpop.f32.mrb[0].mxu0
        %3389 = vmatprep.mubr.f32.mxu0 0.0
        %3390 = vmatmul.mubr.f32.gmra.mrb[0].mxu0 %v3242
        %v3391 = vpop.f32.mrb[0].mxu0
        %v3392 = vadd.f32 %v3268, %v3391
        %v3393 = vpop.f32.mrb[0].mxu0
        %3394 = vmatprep.mubr.f32.mxu0 0.0
        %3395 = vmatmul.mubr.f32.gmra.mrb[0].mxu0 %v3243
        %v3396 = vpop.f32.mrb[0].mxu0
        %v3397 = vadd.f32 %v3268, %v3396
        %v3398 = vpop.f32.mrb[0].mxu0
        %3399 = vmatprep.mubr.f32.mxu0 0.0
        %3400 = vmatmul.mubr.f32.gmra.mrb[0].mxu0 %v3244
        %v3401 = vpop.f32.mrb[0].mxu0
        %v3402 = vadd.f32 %v3268, %v3401
        %v3403 = vpop.f32.mrb[0].mxu0
        %3404 = vmatprep.mubr.f32.mxu0 0.0
        %3405 = vmatmul.mubr.f32.gmra.mrb[0].mxu0 %v3245
        %v3406 = vpop.f32.mrb[0].mxu0
        %v3407 = vadd.f32 %v3268, %v3406
        %v3408 = vpop.f32.mrb[0].mxu0
        %3409 = vmatprep.mubr.f32.mxu0 0.0
        %3410 = vmatmul.mubr.f32.gmra.mrb[0].mxu0 %v3246
        %v3411 = vpop.f32.mrb[0].mxu0
        %v3412 = vadd.f32 %v3268, %v3411
        %v3413 = vpop.f32.mrb[0].mxu0
        %3414 = vdwg.mxu0
        %v3415 = vmax.f32 %v3337, 0.0
        %v3416 = vmax.f32 %v3342, 0.0
        %v3417 = vmax.f32 %v3347, 0.0
        %v3418 = vmax.f32 %v3352, 0.0
        %v3419 = vmax.f32 %v3357, 0.0
        %v3420 = vmax.f32 %v3362, 0.0
        %v3421 = vmax.f32 %v3367, 0.0
        %v3422 = vmax.f32 %v3372, 0.0
        %v3423 = vmax.f32 %v3377, 0.0
        %v3424 = vmax.f32 %v3382, 0.0
        %v3425 = vmax.f32 %v3387, 0.0
        %v3426 = vmax.f32 %v3392, 0.0
        %v3427 = vmax.f32 %v3397, 0.0
        %v3428 = vmax.f32 %v3402, 0.0
        %v3429 = vmax.f32 %v3407, 0.0
        %v3430 = vmax.f32 %v3412, 0.0
        %v3431 = vld [vmem:[%s11] sm:$0xff]
        %v3432 = vld [vmem:[%s11 + $0x8] sm:$0xff]
        %v3433 = vld [vmem:[%s11 + $0x10] sm:$0xff]
        %v3434 = vld [vmem:[%s11 + $0x18] sm:$0xff]
        %v3435 = vld [vmem:[%s11 + $0x20] sm:$0xff]
        %v3436 = vld [vmem:[%s11 + $0x28] sm:$0xff]
        %v3437 = vld [vmem:[%s11 + $0x30] sm:$0xff]
        %v3438 = vld [vmem:[%s11 + $0x38] sm:$0xff]
        %v3439 = vld [vmem:[%s11 + $0x40] sm:$0xff]
        %v3440 = vld [vmem:[%s11 + $0x48] sm:$0xff]
        %v3441 = vld [vmem:[%s11 + $0x50] sm:$0xff]
        %v3442 = vld [vmem:[%s11 + $0x58] sm:$0xff]
        %v3443 = vld [vmem:[%s11 + $0x60] sm:$0xff]
        %v3444 = vld [vmem:[%s11 + $0x68] sm:$0xff]
        %v3445 = vld [vmem:[%s11 + $0x70] sm:$0xff]
        %v3446 = vld [vmem:[%s11 + $0x78] sm:$0xff]
        %v3447 = vld [vmem:[%s12] sm:$0x1]
        %v3449 = vlaneseq
        %v3450 = vshrl.u32 %v3449, 7
        %v3451 = vsub.s32 0, %v3450
        %v3452 = vrot.slane %v3447, %v3451
        %3454 = vmatprep.subr.mxu0 0.0
        %3455 = vmatpush1.msra.mxu0 %v3431
        %3456 = vmatprep.subr.mxu0 0.0
        %3457 = vmatpush1.msra.mxu0 %v3432
        %3458 = vmatprep.subr.mxu0 0.0
        %3459 = vmatpush1.msra.mxu0 %v3433
        %3460 = vmatprep.subr.mxu0 0.0
        %3461 = vmatpush1.msra.mxu0 %v3434
        %3462 = vmatprep.subr.mxu0 0.0
        %3463 = vmatpush1.msra.mxu0 %v3435
        %3464 = vmatprep.subr.mxu0 0.0
        %3465 = vmatpush1.msra.mxu0 %v3436
        %3466 = vmatprep.subr.mxu0 0.0
        %3467 = vmatpush1.msra.mxu0 %v3437
        %3468 = vmatprep.subr.mxu0 0.0
        %3469 = vmatpush1.msra.mxu0 %v3438
        %3470 = vmatprep.subr.mxu0 0.0
        %3471 = vmatpush1.msra.mxu0 %v3439
        %3472 = vmatprep.subr.mxu0 0.0
        %3473 = vmatpush1.msra.mxu0 %v3440
        %3474 = vmatprep.subr.mxu0 0.0
        %3475 = vmatpush1.msra.mxu0 %v3441
        %3476 = vmatprep.subr.mxu0 0.0
        %3477 = vmatpush1.msra.mxu0 %v3442
        %3478 = vmatprep.subr.mxu0 0.0
        %3479 = vmatpush1.msra.mxu0 %v3443
        %3480 = vmatprep.subr.mxu0 0.0
        %3481 = vmatpush1.msra.mxu0 %v3444
        %3482 = vmatprep.subr.mxu0 0.0
        %3483 = vmatpush1.msra.mxu0 %v3445
        %3484 = vmatprep.subr.mxu0 0.0
        %3485 = vmatpush1.msra.mxu0 %v3446
        %3486 = vmatprep.subr.mxu0 0.0
        %3487 = vmatpush1.msra.mxu0 0.0
        %3488 = vmatprep.subr.mxu0 0.0
        %3489 = vmatpush1.msra.mxu0 0.0
        %3490 = vmatprep.subr.mxu0 0.0
        %3491 = vmatpush1.msra.mxu0 0.0
        %3492 = vmatprep.subr.mxu0 0.0
        %3493 = vmatpush1.msra.mxu0 0.0
        %3494 = vmatprep.subr.mxu0 0.0
        %3495 = vmatpush1.msra.mxu0 0.0
        %3496 = vmatprep.subr.mxu0 0.0
        %3497 = vmatpush1.msra.mxu0 0.0
        %3498 = vmatprep.subr.mxu0 0.0
        %3499 = vmatpush1.msra.mxu0 0.0
        %3500 = vmatprep.subr.mxu0 0.0
        %3501 = vmatpush1.msra.mxu0 0.0
        %3502 = vmatprep.subr.mxu0 0.0
        %3503 = vmatpush1.msra.mxu0 0.0
        %3504 = vmatprep.subr.mxu0 0.0
        %3505 = vmatpush1.msra.mxu0 0.0
        %3506 = vmatprep.subr.mxu0 0.0
        %3507 = vmatpush1.msra.mxu0 0.0
        %3508 = vmatprep.subr.mxu0 0.0
        %3509 = vmatpush1.msra.mxu0 0.0
        %3510 = vmatprep.subr.mxu0 0.0
        %3511 = vmatpush1.msra.mxu0 0.0
        %3512 = vmatprep.subr.mxu0 0.0
        %3513 = vmatpush1.msra.mxu0 0.0
        %3514 = vmatprep.subr.mxu0 0.0
        %3515 = vmatpush1.msra.mxu0 0.0
        %3516 = vmatprep.subr.mxu0 0.0
        %3517 = vmatpush1.msra.mxu0 0.0
        %3518 = vmatprep.mubr.f32.mxu0 0.0
        %3519 = vmatmul.mubr.f32.gmra.mrb[0].mxu0 %v3415
        %v3520 = vpop.f32.mrb[0].mxu0
        %v3521 = vadd.f32 %v3452, %v3520
        %v3522 = vpop.f32.mrb[0].mxu0
        %3523 = vmatprep.mubr.f32.mxu0 0.0
        %3524 = vmatmul.mubr.f32.gmra.mrb[0].mxu0 %v3416
        %v3525 = vpop.f32.mrb[0].mxu0
        %v3526 = vadd.f32 %v3452, %v3525
        %v3527 = vpop.f32.mrb[0].mxu0
        %3528 = vmatprep.mubr.f32.mxu0 0.0
        %3529 = vmatmul.mubr.f32.gmra.mrb[0].mxu0 %v3417
        %v3530 = vpop.f32.mrb[0].mxu0
        %v3531 = vadd.f32 %v3452, %v3530
        %v3532 = vpop.f32.mrb[0].mxu0
        %3533 = vmatprep.mubr.f32.mxu0 0.0
        %3534 = vmatmul.mubr.f32.gmra.mrb[0].mxu0 %v3418
        %v3535 = vpop.f32.mrb[0].mxu0
        %v3536 = vadd.f32 %v3452, %v3535
        %v3537 = vpop.f32.mrb[0].mxu0
        %3538 = vmatprep.mubr.f32.mxu0 0.0
        %3539 = vmatmul.mubr.f32.gmra.mrb[0].mxu0 %v3419
        %v3540 = vpop.f32.mrb[0].mxu0
        %v3541 = vadd.f32 %v3452, %v3540
        %v3542 = vpop.f32.mrb[0].mxu0
        %3543 = vmatprep.mubr.f32.mxu0 0.0
        %3544 = vmatmul.mubr.f32.gmra.mrb[0].mxu0 %v3420
        %v3545 = vpop.f32.mrb[0].mxu0
        %v3546 = vadd.f32 %v3452, %v3545
        %v3547 = vpop.f32.mrb[0].mxu0
        %3548 = vmatprep.mubr.f32.mxu0 0.0
        %3549 = vmatmul.mubr.f32.gmra.mrb[0].mxu0 %v3421
        %v3550 = vpop.f32.mrb[0].mxu0
        %v3551 = vadd.f32 %v3452, %v3550
        %v3552 = vpop.f32.mrb[0].mxu0
        %3553 = vmatprep.mubr.f32.mxu0 0.0
        %3554 = vmatmul.mubr.f32.gmra.mrb[0].mxu0 %v3422
        %v3555 = vpop.f32.mrb[0].mxu0
        %v3556 = vadd.f32 %v3452, %v3555
        %v3557 = vpop.f32.mrb[0].mxu0
        %3558 = vmatprep.mubr.f32.mxu0 0.0
        %3559 = vmatmul.mubr.f32.gmra.mrb[0].mxu0 %v3423
        %v3560 = vpop.f32.mrb[0].mxu0
        %v3561 = vadd.f32 %v3452, %v3560
        %v3562 = vpop.f32.mrb[0].mxu0
        %3563 = vmatprep.mubr.f32.mxu0 0.0
        %3564 = vmatmul.mubr.f32.gmra.mrb[0].mxu0 %v3424
        %v3565 = vpop.f32.mrb[0].mxu0
        %v3566 = vadd.f32 %v3452, %v3565
        %v3567 = vpop.f32.mrb[0].mxu0
        %3568 = vmatprep.mubr.f32.mxu0 0.0
        %3569 = vmatmul.mubr.f32.gmra.mrb[0].mxu0 %v3425
        %v3570 = vpop.f32.mrb[0].mxu0
        %v3571 = vadd.f32 %v3452, %v3570
        %v3572 = vpop.f32.mrb[0].mxu0
        %3573 = vmatprep.mubr.f32.mxu0 0.0
        %3574 = vmatmul.mubr.f32.gmra.mrb[0].mxu0 %v3426
        %v3575 = vpop.f32.mrb[0].mxu0
        %v3576 = vadd.f32 %v3452, %v3575
        %v3577 = vpop.f32.mrb[0].mxu0
        %3578 = vmatprep.mubr.f32.mxu0 0.0
        %3579 = vmatmul.mubr.f32.gmra.mrb[0].mxu0 %v3427
        %v3580 = vpop.f32.mrb[0].mxu0
        %v3581 = vadd.f32 %v3452, %v3580
        %v3582 = vpop.f32.mrb[0].mxu0
        %3583 = vmatprep.mubr.f32.mxu0 0.0
        %3584 = vmatmul.mubr.f32.gmra.mrb[0].mxu0 %v3428
        %v3585 = vpop.f32.mrb[0].mxu0
        %v3586 = vadd.f32 %v3452, %v3585
        %v3587 = vpop.f32.mrb[0].mxu0
        %3588 = vmatprep.mubr.f32.mxu0 0.0
        %3589 = vmatmul.mubr.f32.gmra.mrb[0].mxu0 %v3429
        %v3590 = vpop.f32.mrb[0].mxu0
        %v3591 = vadd.f32 %v3452, %v3590
        %v3592 = vpop.f32.mrb[0].mxu0
        %3593 = vmatprep.mubr.f32.mxu0 0.0
        %3594 = vmatmul.mubr.f32.gmra.mrb[0].mxu0 %v3430
        %v3595 = vpop.f32.mrb[0].mxu0
        %v3596 = vadd.f32 %v3452, %v3595
        %v3597 = vpop.f32.mrb[0].mxu0
        %3598 = vdwg.mxu0
        %v3599 = vadd.f32 %v3521, %v2774
        %v3600 = vadd.f32 %v3526, %v2775
        %v3601 = vadd.f32 %v3531, %v2776
        %v3602 = vadd.f32 %v3536, %v2777
        %v3603 = vadd.f32 %v3541, %v2778
        %v3604 = vadd.f32 %v3546, %v2779
        %v3605 = vadd.f32 %v3551, %v2780
        %v3606 = vadd.f32 %v3556, %v2781
        %v3607 = vadd.f32 %v3561, %v2782
        %v3608 = vadd.f32 %v3566, %v2783
        %v3609 = vadd.f32 %v3571, %v2784
        %v3610 = vadd.f32 %v3576, %v2785
        %v3611 = vadd.f32 %v3581, %v2786
        %v3612 = vadd.f32 %v3586, %v2787
        %v3613 = vadd.f32 %v3591, %v2788
        %v3614 = vadd.f32 %v3596, %v2789
        %3615 = vst [vmem:[%s580] sm:$0xff] %v3599
        %3616 = vst [vmem:[%s580 + $0x8] sm:$0xff] %v3600
        %3617 = vst [vmem:[%s580 + $0x10] sm:$0xff] %v3601
        %3618 = vst [vmem:[%s580 + $0x18] sm:$0xff] %v3602
        %3619 = vst [vmem:[%s580 + $0x20] sm:$0xff] %v3603
        %3620 = vst [vmem:[%s580 + $0x28] sm:$0xff] %v3604
        %3621 = vst [vmem:[%s580 + $0x30] sm:$0xff] %v3605
        %3622 = vst [vmem:[%s580 + $0x38] sm:$0xff] %v3606
        %3623 = vst [vmem:[%s580 + $0x40] sm:$0xff] %v3607
        %3624 = vst [vmem:[%s580 + $0x48] sm:$0xff] %v3608
        %3625 = vst [vmem:[%s580 + $0x50] sm:$0xff] %v3609
        %3626 = vst [vmem:[%s580 + $0x58] sm:$0xff] %v3610
        %3627 = vst [vmem:[%s580 + $0x60] sm:$0xff] %v3611
        %3628 = vst [vmem:[%s580 + $0x68] sm:$0xff] %v3612
        %3629 = vst [vmem:[%s580 + $0x70] sm:$0xff] %v3613
        %3630 = vst [vmem:[%s580 + $0x78] sm:$0xff] %v3614
      $region80: #{diffusion_net_forward.5} parent=71 // pred_fallthru
        _
      %s3631 = smul.u32 16, %s28
      %p3632 = scmp.lt.s32.totalorder %s3631, 63
      %s3633 = scalar_select %p3632, %s3631, 63
      %s3634 = smul.addr %s3633, 8
      %s3635 = scalar_lea.vmem %s13, %s3634
      // Predicated region
      $region81: #{diffusion_net_forward.5} parent=71 // pred_check
        %p3636 = pneg %p356
      $region82: #{diffusion_net_forward.5} parent=71 // pred_check_branch
        %3638 = sbr.rel (%p3636) target = $region84
      $region83: #{diffusion_net_forward.5} parent=71 // pred_region
        %s3639 = smul.u32 16, %s28
      $region84: #{diffusion_net_forward.5} parent=71 // pred_fallthru
        _
    $region72: #{diffusion_net_forward.5} parent=5 // pred_fallthru
      _
    %p3640 = scmp.le.s32.totalorder 2, %s19
    // Predicated region
    $region85: #{diffusion_net_forward.5} parent=5 // pred_check
      %p3641 = pneg %p3640
    $region86: #{diffusion_net_forward.5} parent=5 // pred_check_branch
      %3643 = sbr.rel (%p3641) target = $region88
    $region87: #{diffusion_net_forward.5} parent=5 // pred_region
      %s3644 = ssub.s32 %s19, 2
      // Predicated region
      $region89: #{diffusion_net_forward.5} parent=87 // pred_check
        %p3645 = pneg %p362
      $region90: #{diffusion_net_forward.5} parent=87 // pred_check_branch
        %3647 = sbr.rel (%p3645) target = $region92
      $region91: #{diffusion_net_forward.5} parent=87 // pred_region
        %s3648 = smul.u32 16, %s30
        %p3649 = scmp.lt.s32.totalorder %s3648, 63
        %s3650 = scalar_select %p3649, %s3648, 63
        %s3651 = smul.addr %s3650, 8
        %s3652 = scalar_lea.vmem %s13, %s3651
      $region92: #{diffusion_net_forward.5} parent=87 // pred_fallthru
        _
    $region88: #{diffusion_net_forward.5} parent=5 // pred_fallthru
      _
  $region6: #{diffusion_net_forward.5} parent=0 // loop_footer
    %s23 = sadd.s32 1, %s19
  $region7: #{diffusion_net_forward.5} parent=0 // loop_footer_branch
    %18 = sbr.rel target = $region3
  $region8: #{diffusion_net_forward.5} parent=0 // loop_exit
    _

</llo_original>
